<compile_context>
chip_gen: v5e
topology: v5e:2x2
jax: 0.10.0
libtpu: 0.0.40
codegen_flags: <defaults>
</compile_context>

<pallas_src>
import functools

import jax
import jax.numpy as jnp
from jax.experimental import pallas as pl
from jax.experimental.pallas import tpu as pltpu

BN_EPS = 1e-5
TM_CAP = 512    # GEMM row-tile cap; also bounds the halo ((kh-1)*wp <= TM)
TN_CAP = 256    # feeds the 256x256 MXU on v6e/v7x; harmless on v5e
TMA_CAP = 2048  # row tile for the memory-bound BN/ReLU apply pass (VMEM-safe on v7x's 64 MiB)


def _round_up(x, m):
    return (x + m - 1) // m * m


# ----------------------------------------------------------------------------
# Pallas kernels
# ----------------------------------------------------------------------------
def _conv_stats_kernel(x_ref, xh_ref, w_ref, out_ref, st_ref, *, row_shifts, tm, tn, kwc):
    """One (i, j) tile of the implicit-im2col conv GEMM + masked BN partial statistics.

    x_ref  : [1, TM, kwc+1]   bf16  kw-folded rows [i*TM, (i+1)*TM); lane kwc = validity flag
    xh_ref : [1, HALO, kwc+1] bf16  first HALO rows of tile i+1 (halo for the shifted taps)
    w_ref  : [kh, kwc+1, TN]  bf16  folded weights; K-row kwc is zero (mask lane is a no-op)
    out_ref: [TM, TN]         bf16  conv output tile
    st_ref : [8, TN]          f32   row0 = sum(valid conv), row1 = sum(valid conv^2)
    """
    x_all = jnp.concatenate([x_ref[0], xh_ref[0]], axis=0)            # [TM + HALO, kwc+1] bf16
    acc = jnp.zeros((tm, tn), jnp.float32)
    for ki, s in enumerate(row_shifts):                               # kh unrolled row-shift taps
        acc = acc + jnp.dot(x_all[s:s + tm, :], w_ref[ki],
                            preferred_element_type=jnp.float32)
    out_ref[...] = acc.astype(out_ref.dtype)

    maskv = x_all[0:tm, kwc:kwc + 1].astype(jnp.float32)              # [TM, 1], 1.0 on real pixels
    yv = acc * maskv
    st_ref[0:1, :] = jnp.sum(yv, axis=0, keepdims=True)
    st_ref[1:2, :] = jnp.sum(yv * yv, axis=0, keepdims=True)          # rows 2..7 are don't-care


def _bn_relu_t_kernel(x_ref, scale_ref, shift_ref, o_ref):
    """BN affine + ReLU on a tile, written channel-major: o = relu(x*scale + shift).T."""
    y = jnp.maximum(x_ref[...].astype(jnp.float32) * scale_ref[...] + shift_ref[...], 0.0)
    o_ref[...] = y.T


# ----------------------------------------------------------------------------
# Wrappers
# ----------------------------------------------------------------------------
def prepare_weights(w):
    """[Cout, Cin, kh, kw] (PyTorch) -> [kh, kw*Cin + 1, Npad] bf16.  Done once at init.

    The kw axis is folded into the contraction dim (K order = (kj, c)); one extra zero K-row
    backs the validity lane that rides along with the folded activations."""
    cout, cin, kh, kw = w.shape
    npad = _round_up(cout, 128)
    wf = jnp.transpose(w, (2, 3, 1, 0)).reshape(kh, kw * cin, cout)
    wf = jnp.pad(wf, ((0, 0), (0, 1), (0, npad - cout)))
    return wf.astype(jnp.bfloat16)


def conv_bn_relu(x_nchw, wmat, gamma, beta, *, kh, kw, padding):
    n, cin, h, w_sp = x_nchw.shape
    kh_w, kwc1, npad = wmat.shape
    kwc = kw * cin
    assert kh_w == kh and kwc1 == kwc + 1
    cout = gamma.shape[0]

    hp, wp = h + 2 * padding, w_sp + 2 * padding
    ho, wo = hp - kh + 1, wp - kw + 1            # stride-1 output extents
    m = n * hp * wp                              # rows of the flat padded grid

    tn = TN_CAP if npad % TN_CAP == 0 else 128
    num_n = npad // tn
    tm = min(TM_CAP, _round_up(m, 16))
    num_m = pl.cdiv(m, tm)
    mp = num_m * tm
    halo = _round_up((kh - 1) * wp, 16)          # extra rows needed by the kh-1 shifted taps
    # TODO(synk): images wider than ~(TM_CAP/(kh-1) - 2*padding) px need a segmented halo fetch.
    assert halo <= tm

    # NCHW -> zero-padded NHWC (bf16) -> flat [rows, cin]; fold the kw taps into lanes so the
    # kernel only does kh row-shift taps: xfold[r, kj*cin + c] = x_flat[r + kj, c].  One extra
    # lane carries the "this row is a real output pixel" flag (its weight K-row is zero).
    rows = mp + tm                               # (num_m + 1) row tiles; last one backs the halo
    xf = jnp.transpose(x_nchw, (0, 2, 3, 1)).astype(jnp.bfloat16)
    xf = jnp.pad(xf, ((0, 0), (padding, padding), (padding, padding), (0, 0)))
    xf = xf.reshape(m, cin)
    xf = jnp.pad(xf, ((0, rows + kw - 1 - m), (0, 0)))
    xfold = jnp.stack([xf[kj:kj + rows] for kj in range(kw)], axis=1).reshape(rows, kwc)
    valid = (jnp.arange(hp) < ho)[:, None] & (jnp.arange(wp) < wo)[None, :]
    maskcol = jnp.broadcast_to(valid[None], (n, hp, wp)).reshape(m, 1).astype(jnp.bfloat16)
    maskcol = jnp.pad(maskcol, ((0, rows - m), (0, 0)))
    xfold = jnp.concatenate([xfold, maskcol], axis=1).reshape(num_m + 1, tm, kwc1)

    row_shifts = tuple(ki * wp for ki in range(kh))

    flops = 2 * mp * kh * kwc1 * npad
    bytes_accessed = ((num_m + 1) * tm * kwc1 * 2 + num_m * halo * kwc1 * 2
                      + (num_m if num_n > 1 else 1) * kh * kwc1 * npad * 2
                      + mp * npad * 2 + num_m * 8 * npad * 4)

    conv_out, stats = pl.pallas_call(
        functools.partial(_conv_stats_kernel, row_shifts=row_shifts, tm=tm, tn=tn, kwc=kwc),
        out_shape=(
            jax.ShapeDtypeStruct((mp, npad), jnp.bfloat16),       # bf16 intermediate slab
            jax.ShapeDtypeStruct((num_m * 8, npad), jnp.float32),
        ),
        grid_spec=pltpu.PrefetchScalarGridSpec(
            num_scalar_prefetch=0,
            grid=(num_m, num_n),
            in_specs=[
                pl.BlockSpec((1, tm, kwc1), lambda i, j: (i, 0, 0)),
                pl.BlockSpec((1, halo, kwc1), lambda i, j: (i + 1, 0, 0)),   # halo-only fetch
                # With Cout <= 256 (num_n == 1) the weight block is VMEM-resident across the grid;
                # wider layers would want a full-weight block + in-kernel TN slice instead.
                pl.BlockSpec((kh, kwc1, tn), lambda i, j: (0, 0, j)),
            ],
            out_specs=(
                pl.BlockSpec((tm, tn), lambda i, j: (i, j)),
                pl.BlockSpec((8, tn), lambda i, j: (i, j)),
            ),
        ),
        compiler_params=pltpu.CompilerParams(
            dimension_semantics=("parallel", "parallel"),
            vmem_limit_bytes=32 * 1024 * 1024,
        ),
        cost_estimate=pl.CostEstimate(
            flops=flops, transcendentals=0, bytes_accessed=bytes_accessed),
    )(xfold, xfold, wmat)

    # Global BN statistics (training-mode BatchNorm: batch mean, biased variance) from the fused
    # per-tile partials; the tiny per-channel math stays in plain f32 JAX.
    st = stats.reshape(num_m, 8, npad)
    cnt = float(n * ho * wo)
    mean = jnp.sum(st[:, 0, :], axis=0) / cnt
    var = jnp.maximum(jnp.sum(st[:, 1, :], axis=0) / cnt - mean * mean, 0.0)
    inv = jax.lax.rsqrt(var + BN_EPS)
    g = jnp.pad(gamma.astype(jnp.float32), (0, npad - cout))
    b = jnp.pad(beta.astype(jnp.float32), (0, npad - cout))
    scale = (g * inv).reshape(1, npad)
    shift = (b - mean * g * inv).reshape(1, npad)

    # Memory-bound BN/ReLU apply: large row tiles, channel-major (transposed) output so the
    # XLA epilogue is a crop + leading-axis swap instead of a full NHWC->NCHW transpose pass.
    tma = tm
    for f in range(min(num_m, 8), 0, -1):
        if num_m % f == 0 and tm * f <= TMA_CAP:
            tma = tm * f
            break
    num_ma = mp // tma

    y_t = pl.pallas_call(
        _bn_relu_t_kernel,
        out_shape=jax.ShapeDtypeStruct((npad, mp), jnp.float32),
        grid_spec=pltpu.PrefetchScalarGridSpec(
            num_scalar_prefetch=0,
            grid=(num_ma, num_n),
            in_specs=[
                pl.BlockSpec((tma, tn), lambda i, j: (i, j)),
                pl.BlockSpec((1, tn), lambda i, j: (0, j)),
                pl.BlockSpec((1, tn), lambda i, j: (0, j)),
            ],
            out_specs=pl.BlockSpec((tn, tma), lambda i, j: (j, i)),
        ),
        compiler_params=pltpu.CompilerParams(
            dimension_semantics=("parallel", "parallel"),
            vmem_limit_bytes=32 * 1024 * 1024,
        ),
    )(conv_out, scale, shift)

    # Channel-major -> crop padded rows/cols/channels -> NCHW (cheap leading-axis swap only).
    y = y_t[:cout, :m].reshape(cout, n, hp, wp)[:, :, :ho, :wo]
    return jnp.transpose(y, (1, 0, 2, 3))


# ----------------------------------------------------------------------------
# Demo / self-check
# ----------------------------------------------------------------------------
if __name__ == "__main__":
    key = jax.random.PRNGKey(0)
    kx, kw_ = jax.random.split(key)

    N, CIN, H, W = 2, 4, 16, 16
    COUT, KS, STRIDE, PAD = 16, 3, 1, 1

    x = jax.random.normal(kx, (N, CIN, H, W), jnp.float32)
    # nn.init.kaiming_normal_(a=1): std = sqrt(2/(1+1^2)) / sqrt(fan_in) = 1/sqrt(Cin*ks*ks)
    w = jax.random.normal(kw_, (COUT, CIN, KS, KS), jnp.float32) / jnp.sqrt(CIN * KS * KS)
    gamma = jnp.ones((COUT,), jnp.float32)   # BatchNorm2d default affine init
    beta = jnp.zeros((COUT,), jnp.float32)

    wmat = prepare_weights(w)                # transpose / fold / pad / bf16 once, off the fwd path
    fwd = jax.jit(functools.partial(conv_bn_relu, kh=KS, kw=KS, padding=PAD))
    out = fwd(x, wmat, gamma, beta)
    jax.block_until_ready(out)

    # Plain-JAX f32 reference: conv -> training-mode BN (biased var, eps=1e-5) -> ReLU.
    ref_c = jax.lax.conv_general_dilated(
        x, w, (STRIDE, STRIDE), [(PAD, PAD), (PAD, PAD)],
        dimension_numbers=("NCHW", "OIHW", "NCHW"))
    mu = jnp.mean(ref_c, axis=(0, 2, 3), keepdims=True)
    va = jnp.mean((ref_c - mu) ** 2, axis=(0, 2, 3), keepdims=True)
    ref = jnp.maximum(
        (ref_c - mu) * jax.lax.rsqrt(va + BN_EPS) * gamma.reshape(1, -1, 1, 1)
        + beta.reshape(1, -1, 1, 1), 0.0)

    assert out.shape == (N, COUT, H, W), out.shape
    assert bool(jnp.all(jnp.isfinite(out)))
    err = float(jnp.max(jnp.abs(out - ref)))
    assert err < 0.2, f"max abs err vs f32 reference: {err}"  # bf16-MXU / bf16-slab tolerance
    print("KERNEL_OK")
</pallas_src>

<mosaic_0001>
module attributes {stable_mosaic.version = 11 : i64} {
  func.func @_conv_stats_kernel(%arg0: i32, %arg1: i32, %arg2: memref<1x512x13xbf16, #tpu.memory_space<vmem>>, %arg3: memref<1x48x13xbf16, #tpu.memory_space<vmem>>, %arg4: memref<3x13x128xbf16, #tpu.memory_space<vmem>>, %arg5: memref<512x128xbf16, #tpu.memory_space<vmem>>, %arg6: memref<8x128xf32, #tpu.memory_space<vmem>>) attributes {dimension_semantics = [#tpu.dimension_semantics<parallel>, #tpu.dimension_semantics<parallel>], iteration_bounds = array<i64: 2, 1>, scalar_prefetch = 0 : i64, scratch_operands = 0 : i64, tpu.core_type = #tpu.core_type<tc>, window_params = [{transform_indices = @transform_0, window_bounds = array<i64: 1, 512, 13>}, {transform_indices = @transform_1, window_bounds = array<i64: 1, 48, 13>}, {transform_indices = @transform_2, window_bounds = array<i64: 3, 13, 128>}, {transform_indices = @transform_3, window_bounds = array<i64: 512, 128>}, {transform_indices = @transform_4, window_bounds = array<i64: 8, 128>}]} {
    %c0 = arith.constant 0 : index
    %c0_0 = arith.constant 0 : index
    %c0_1 = arith.constant 0 : index
    %0 = vector.load %arg2[%c0, %c0_0, %c0_1] : memref<1x512x13xbf16, #tpu.memory_space<vmem>>, vector<1x512x13xbf16>
    %1 = vector.shape_cast %0 : vector<1x512x13xbf16> to vector<512x13xbf16>
    %c0_2 = arith.constant 0 : index
    %c0_3 = arith.constant 0 : index
    %c0_4 = arith.constant 0 : index
    %2 = vector.load %arg3[%c0_2, %c0_3, %c0_4] : memref<1x48x13xbf16, #tpu.memory_space<vmem>>, vector<1x48x13xbf16>
    %3 = vector.shape_cast %2 : vector<1x48x13xbf16> to vector<48x13xbf16>
    %4 = tpu.concatenate %1, %3 in 0 : vector<512x13xbf16>, vector<48x13xbf16> -> vector<560x13xbf16>
    %cst = arith.constant 0.000000e+00 : f32
    %5 = vector.broadcast %cst : f32 to vector<512x128xf32>
    %6 = vector.extract_strided_slice %4 {offsets = [0, 0], sizes = [512, 13], strides = [1, 1]} : vector<560x13xbf16> to vector<512x13xbf16>
    %c0_5 = arith.constant 0 : index
    %c0_6 = arith.constant 0 : index
    %c0_7 = arith.constant 0 : index
    %7 = vector.load %arg4[%c0_5, %c0_6, %c0_7] : memref<3x13x128xbf16, #tpu.memory_space<vmem>>, vector<1x13x128xbf16>
    %8 = vector.shape_cast %7 : vector<1x13x128xbf16> to vector<13x128xbf16>
    %cst_8 = arith.constant dense<0.000000e+00> : vector<512x128xf32>
    %9 = tpu.matmul %6, %8, %cst_8 {dimension_numbers = #tpu.dot_dimension_numbers<[1], [0], [0], [1], [0, 0, 1, 1], [], []>} : vector<512x13xbf16>, vector<13x128xbf16>, vector<512x128xf32> -> vector<512x128xf32>
    %10 = arith.addf %5, %9 : vector<512x128xf32>
    %11 = vector.extract_strided_slice %4 {offsets = [18, 0], sizes = [512, 13], strides = [1, 1]} : vector<560x13xbf16> to vector<512x13xbf16>
    %c1 = arith.constant 1 : index
    %c0_9 = arith.constant 0 : index
    %c0_10 = arith.constant 0 : index
    %12 = vector.load %arg4[%c1, %c0_9, %c0_10] : memref<3x13x128xbf16, #tpu.memory_space<vmem>>, vector<1x13x128xbf16>
    %13 = vector.shape_cast %12 : vector<1x13x128xbf16> to vector<13x128xbf16>
    %cst_11 = arith.constant dense<0.000000e+00> : vector<512x128xf32>
    %14 = tpu.matmul %11, %13, %cst_11 {dimension_numbers = #tpu.dot_dimension_numbers<[1], [0], [0], [1], [0, 0, 1, 1], [], []>} : vector<512x13xbf16>, vector<13x128xbf16>, vector<512x128xf32> -> vector<512x128xf32>
    %15 = arith.addf %10, %14 : vector<512x128xf32>
    %16 = vector.extract_strided_slice %4 {offsets = [36, 0], sizes = [512, 13], strides = [1, 1]} : vector<560x13xbf16> to vector<512x13xbf16>
    %c2 = arith.constant 2 : index
    %c0_12 = arith.constant 0 : index
    %c0_13 = arith.constant 0 : index
    %17 = vector.load %arg4[%c2, %c0_12, %c0_13] : memref<3x13x128xbf16, #tpu.memory_space<vmem>>, vector<1x13x128xbf16>
    %18 = vector.shape_cast %17 : vector<1x13x128xbf16> to vector<13x128xbf16>
    %cst_14 = arith.constant dense<0.000000e+00> : vector<512x128xf32>
    %19 = tpu.matmul %16, %18, %cst_14 {dimension_numbers = #tpu.dot_dimension_numbers<[1], [0], [0], [1], [0, 0, 1, 1], [], []>} : vector<512x13xbf16>, vector<13x128xbf16>, vector<512x128xf32> -> vector<512x128xf32>
    %20 = arith.addf %15, %19 : vector<512x128xf32>
    %21 = arith.truncf %20 : vector<512x128xf32> to vector<512x128xbf16>
    %c0_15 = arith.constant 0 : index
    %c0_16 = arith.constant 0 : index
    %22 = vector.load %arg5[%c0_15, %c0_16] : memref<512x128xbf16, #tpu.memory_space<vmem>>, vector<512x128xbf16>
    tpu.vector_store %arg5[%c0_15, %c0_16], %21 {strides = array<i32>} : memref<512x128xbf16, #tpu.memory_space<vmem>>, vector<512x128xbf16>,
    %23 = vector.extract_strided_slice %4 {offsets = [0, 12], sizes = [512, 1], strides = [1, 1]} : vector<560x13xbf16> to vector<512x1xbf16>
    %24 = arith.extf %23 : vector<512x1xbf16> to vector<512x1xf32>
    %25 = vector.broadcast %24 : vector<512x1xf32> to vector<512x128xf32>
    %26 = arith.mulf %20, %25 : vector<512x128xf32>
    %cst_17 = arith.constant dense<0.000000e+00> : vector<128xf32>
    %27 = vector.multi_reduction <add>, %26, %cst_17 [0] : vector<512x128xf32> to vector<128xf32>
    %28 = vector.shape_cast %27 : vector<128xf32> to vector<1x128xf32>
    %c0_18 = arith.constant 0 : index
    %c0_19 = arith.constant 0 : index
    %29 = vector.load %arg6[%c0_18, %c0_19] : memref<8x128xf32, #tpu.memory_space<vmem>>, vector<1x128xf32>
    tpu.vector_store %arg6[%c0_18, %c0_19], %28 {strides = array<i32>} : memref<8x128xf32, #tpu.memory_space<vmem>>, vector<1x128xf32>,
    %30 = arith.mulf %26, %26 : vector<512x128xf32>
    %cst_20 = arith.constant dense<0.000000e+00> : vector<128xf32>
    %31 = vector.multi_reduction <add>, %30, %cst_20 [0] : vector<512x128xf32> to vector<128xf32>
    %32 = vector.shape_cast %31 : vector<128xf32> to vector<1x128xf32>
    %c1_21 = arith.constant 1 : index
    %c0_22 = arith.constant 0 : index
    %33 = vector.load %arg6[%c1_21, %c0_22] : memref<8x128xf32, #tpu.memory_space<vmem>>, vector<1x128xf32>
    tpu.vector_store %arg6[%c1_21, %c0_22], %32 {strides = array<i32>} : memref<8x128xf32, #tpu.memory_space<vmem>>, vector<1x128xf32>,
    return
  }
  func.func @transform_0(%arg0: i32, %arg1: i32) -> (i32, i32, i32) {
    %c0_i32 = arith.constant 0 : i32
    %c0_i32_0 = arith.constant 0 : i32
    %c0_i32_1 = arith.constant 0 : i32
    return %arg0, %c0_i32, %c0_i32_0 : i32, i32, i32
  }
  func.func @transform_1(%arg0: i32, %arg1: i32) -> (i32, i32, i32) {
    %c1_i32 = arith.constant 1 : i32
    %0 = arith.addi %arg0, %c1_i32 : i32
    %c0_i32 = arith.constant 0 : i32
    %c0_i32_0 = arith.constant 0 : i32
    %c0_i32_1 = arith.constant 0 : i32
    return %0, %c0_i32, %c0_i32_0 : i32, i32, i32
  }
  func.func @transform_2(%arg0: i32, %arg1: i32) -> (i32, i32, i32) {
    %c0_i32 = arith.constant 0 : i32
    %c0_i32_0 = arith.constant 0 : i32
    %c0_i32_1 = arith.constant 0 : i32
    return %c0_i32, %c0_i32_0, %arg1 : i32, i32, i32
  }
  func.func @transform_3(%arg0: i32, %arg1: i32) -> (i32, i32) {
    %c0_i32 = arith.constant 0 : i32
    return %arg0, %arg1 : i32, i32
  }
  func.func @transform_4(%arg0: i32, %arg1: i32) -> (i32, i32) {
    %c0_i32 = arith.constant 0 : i32
    return %arg0, %arg1 : i32, i32
  }
}

module attributes {stable_mosaic.version = 11 : i64} {
  func.func @_bn_relu_t_kernel(%arg0: i32, %arg1: i32, %arg2: memref<1024x128xbf16, #tpu.memory_space<vmem>>, %arg3: memref<1x128xf32, #tpu.memory_space<vmem>>, %arg4: memref<1x128xf32, #tpu.memory_space<vmem>>, %arg5: memref<128x1024xf32, #tpu.memory_space<vmem>>) attributes {dimension_semantics = [#tpu.dimension_semantics<parallel>, #tpu.dimension_semantics<parallel>], iteration_bounds = array<i64: 1, 1>, scalar_prefetch = 0 : i64, scratch_operands = 0 : i64, tpu.core_type = #tpu.core_type<tc>, window_params = [{transform_indices = @transform_0, window_bounds = array<i64: 1024, 128>}, {transform_indices = @transform_1, window_bounds = array<i64: 1, 128>}, {transform_indices = @transform_2, window_bounds = array<i64: 1, 128>}, {transform_indices = @transform_3, window_bounds = array<i64: 128, 1024>}]} {
    %c0 = arith.constant 0 : index
    %c0_0 = arith.constant 0 : index
    %0 = vector.load %arg2[%c0, %c0_0] : memref<1024x128xbf16, #tpu.memory_space<vmem>>, vector<1024x128xbf16>
    %1 = arith.extf %0 : vector<1024x128xbf16> to vector<1024x128xf32>
    %c0_1 = arith.constant 0 : index
    %c0_2 = arith.constant 0 : index
    %2 = vector.load %arg3[%c0_1, %c0_2] : memref<1x128xf32, #tpu.memory_space<vmem>>, vector<1x128xf32>
    %3 = vector.broadcast %2 : vector<1x128xf32> to vector<1024x128xf32>
    %4 = arith.mulf %1, %3 : vector<1024x128xf32>
    %c0_3 = arith.constant 0 : index
    %c0_4 = arith.constant 0 : index
    %5 = vector.load %arg4[%c0_3, %c0_4] : memref<1x128xf32, #tpu.memory_space<vmem>>, vector<1x128xf32>
    %6 = vector.broadcast %5 : vector<1x128xf32> to vector<1024x128xf32>
    %7 = arith.addf %4, %6 : vector<1024x128xf32>
    %cst = arith.constant 0.000000e+00 : f32
    %8 = vector.broadcast %cst : f32 to vector<1024x128xf32>
    %9 = arith.maximumf %7, %8 : vector<1024x128xf32>
    %10 = tpu.transpose %9, [1, 0] : vector<1024x128xf32> -> vector<128x1024xf32>
    %c0_5 = arith.constant 0 : index
    %c0_6 = arith.constant 0 : index
    %11 = vector.load %arg5[%c0_5, %c0_6] : memref<128x1024xf32, #tpu.memory_space<vmem>>, vector<128x1024xf32>
    tpu.vector_store %arg5[%c0_5, %c0_6], %10 {strides = array<i32>} : memref<128x1024xf32, #tpu.memory_space<vmem>>, vector<128x1024xf32>,
    return
  }
  func.func @transform_0(%arg0: i32, %arg1: i32) -> (i32, i32) {
    %c0_i32 = arith.constant 0 : i32
    return %arg0, %arg1 : i32, i32
  }
  func.func @transform_1(%arg0: i32, %arg1: i32) -> (i32, i32) {
    %c0_i32 = arith.constant 0 : i32
    %c0_i32_0 = arith.constant 0 : i32
    return %c0_i32, %arg1 : i32, i32
  }
  func.func @transform_2(%arg0: i32, %arg1: i32) -> (i32, i32) {
    %c0_i32 = arith.constant 0 : i32
    %c0_i32_0 = arith.constant 0 : i32
    return %c0_i32, %arg1 : i32, i32
  }
  func.func @transform_3(%arg0: i32, %arg1: i32) -> (i32, i32) {
    %c0_i32 = arith.constant 0 : i32
    return %arg1, %arg0 : i32, i32
  }
}

</mosaic_0001>

<llo_original>
// kernel: conv_bn_relu.2
$region0: #{conv_bn_relu.2}
  #allocation0 [shape = 'u32[]', space=smem, size = 0x4, offset = 0x4, fixed_abs, tag = 'smem constant byte address 0x4 - core index']
  #allocation1 [shape = 'u32[72,128]{1,0:T(1,128)}', space=vmem, size = 0x9000, scoped, tag = 'internal scratch']
  %s0 = inlined_call_operand.vmem [shape: bf16[3,512,13], index: 0, kind: input, shape index: {}, may-alias: {0,1}]
  %s1 = inlined_call_operand.vmem [shape: bf16[3,512,13], index: 1, kind: input, shape index: {}, may-alias: {0,1}]
  %s2 = inlined_call_operand.vmem [shape: bf16[3,13,128], index: 2, kind: input, shape index: {}]
  %s3 = inlined_call_operand.vmem [shape: bf16[1024,128], index: 3, kind: output, shape index: {0}]
  %s4 = inlined_call_operand.vmem [shape: f32[16,128], index: 4, kind: output, shape index: {1}]
  %5 = xla_tuple %s3, %s4
  %s6 = sld [smem:[#allocation0]]
  $region53: #{conv_bn_relu.2} parent=0
    _
  %s8 = ssub.s32 1, %s6
  %s9 = scalar_select 0, %s8, %s6
  loop: start=0, step=1, limit=4
  $region2: #{conv_bn_relu.2} parent=0 // loop_pre_header
    _
  $region3: #{conv_bn_relu.2} parent=0 // loop_header
    %s11 = sphi 0, %s15
    %p12 = scmp.ge.s32.totalorder %s11, 4
    %s18 = sphi 0, %s30
    %s19 = sphi 0, %s26
    %s20 = sphi 0, %s18
    %s21 = sphi 0, %s19
    %s22 = sphi 0, %s20
    %s23 = sphi 0, %s21
    %s33 = sphi 0, %s35
    %s36 = sphi 0, %s33
    %s37 = sphi 0, %s36
    %s53 = sphi 0, %s37
    %s61 = sphi 0, %s63
    %s64 = sphi 0, %s61
    %s65 = sphi 0, %s64
    %s81 = sphi 0, %s65
    %s87 = sphi 0, %s89
    %s90 = sphi 0, %s87
    %s91 = sphi 0, %s90
    %s107 = sphi 0, %s91
    %s115 = sphi 0, %s117
    %s118 = sphi 0, %s115
    %s119 = sphi 0, %s118
    %s135 = sphi 0, %s119
    %s143 = sphi 0, %s145
    %s146 = sphi 0, %s143
    %s147 = sphi 0, %s146
    %s163 = sphi 0, %s147
  $region4: #{conv_bn_relu.2} parent=0 // loop_header_branch
    %14 = sbr.rel (%p12) target = $region8
  $region5: #{conv_bn_relu.2} parent=0 // loop_body
    %s16 = ssub.s32 %s11, 1
    %s17 = ssub.s32 %s11, 2
    %s24 = sadd.s32 1, %s19
    %p25 = scmp.ge.s32.totalorder %s24, 1
    %s26 = scalar_select %p25, 0, %s24
    %s27 = sadd.s32 1, %s18
    %s28 = scalar_select %p25, %s27, %s18
    %p29 = scmp.ge.s32.totalorder %s28, 2
    %s30 = scalar_select %p29, 0, %s28
    %s31 = ssub.s32 %s18, %s30
    %p32 = scmp.eq.s32.totalorder %s31, 0
    %s34 = sadd.s32 %s33, 1
    %s35 = scalar_select %p32, %s33, %s34
    %p38 = pneg %p32
    %p39 = scmp.eq.s32.totalorder %s11, 1
    %p40 = por %p38, %p39
    %p41 = scmp.ne.s32.totalorder %s33, %s36
    %p42 = scmp.eq.s32.totalorder %s11, 0
    %p43 = por %p41, %p42
    %p44 = scmp.ne.s32.totalorder %s33, %s36
    %p45 = scmp.eq.s32.totalorder %s16, 1
    %p46 = por %p44, %p45
    %p47 = scmp.ne.s32.totalorder %s36, %s37
    %p48 = scmp.eq.s32.totalorder %s16, 0
    %p49 = por %p47, %p48
    %p50 = scmp.ne.s32.totalorder %s36, %s37
    %p51 = scmp.eq.s32.totalorder %s17, 1
    %p52 = por %p50, %p51
    %p54 = scmp.ne.s32.totalorder %s37, %s53
    %p55 = scmp.eq.s32.totalorder %s17, 0
    %p56 = por %p54, %p55
    %s57 = sadd.s32 %s18, 1
    %s58 = sadd.s32 %s30, 1
    %s59 = ssub.s32 %s57, %s58
    %p60 = scmp.eq.s32.totalorder %s59, 0
    %s62 = sadd.s32 %s61, 1
    %s63 = scalar_select %p60, %s61, %s62
    %p66 = pneg %p60
    %p67 = scmp.eq.s32.totalorder %s11, 1
    %p68 = por %p66, %p67
    %p69 = scmp.ne.s32.totalorder %s61, %s64
    %p70 = scmp.eq.s32.totalorder %s11, 0
    %p71 = por %p69, %p70
    %p72 = scmp.ne.s32.totalorder %s61, %s64
    %p73 = scmp.eq.s32.totalorder %s16, 1
    %p74 = por %p72, %p73
    %p75 = scmp.ne.s32.totalorder %s64, %s65
    %p76 = scmp.eq.s32.totalorder %s16, 0
    %p77 = por %p75, %p76
    %p78 = scmp.ne.s32.totalorder %s64, %s65
    %p79 = scmp.eq.s32.totalorder %s17, 1
    %p80 = por %p78, %p79
    %p82 = scmp.ne.s32.totalorder %s65, %s81
    %p83 = scmp.eq.s32.totalorder %s17, 0
    %p84 = por %p82, %p83
    %s85 = ssub.s32 %s19, %s26
    %p86 = scmp.eq.s32.totalorder %s85, 0
    %s88 = sadd.s32 %s87, 1
    %s89 = scalar_select %p86, %s87, %s88
    %p92 = pneg %p86
    %p93 = scmp.eq.s32.totalorder %s11, 1
    %p94 = por %p92, %p93
    %p95 = scmp.ne.s32.totalorder %s87, %s90
    %p96 = scmp.eq.s32.totalorder %s11, 0
    %p97 = por %p95, %p96
    %p98 = scmp.ne.s32.totalorder %s87, %s90
    %p99 = scmp.eq.s32.totalorder %s16, 1
    %p100 = por %p98, %p99
    %p101 = scmp.ne.s32.totalorder %s90, %s91
    %p102 = scmp.eq.s32.totalorder %s16, 0
    %p103 = por %p101, %p102
    %p104 = scmp.ne.s32.totalorder %s90, %s91
    %p105 = scmp.eq.s32.totalorder %s17, 1
    %p106 = por %p104, %p105
    %p108 = scmp.ne.s32.totalorder %s91, %s107
    %p109 = scmp.eq.s32.totalorder %s17, 0
    %p110 = por %p108, %p109
    %s111 = ssub.s32 %s18, %s30
    %s112 = ssub.s32 %s19, %s26
    %s113 = sor.u32 %s111, %s112
    %p114 = scmp.eq.s32.totalorder %s113, 0
    %s116 = sadd.s32 %s115, 1
    %s117 = scalar_select %p114, %s115, %s116
    %p120 = pneg %p114
    %p121 = scmp.eq.s32.totalorder %s11, 1
    %p122 = por %p120, %p121
    %p123 = scmp.ne.s32.totalorder %s115, %s118
    %p124 = scmp.eq.s32.totalorder %s11, 0
    %p125 = por %p123, %p124
    %p126 = scmp.ne.s32.totalorder %s115, %s118
    %p127 = scmp.eq.s32.totalorder %s16, 1
    %p128 = por %p126, %p127
    %p129 = scmp.ne.s32.totalorder %s118, %s119
    %p130 = scmp.eq.s32.totalorder %s16, 0
    %p131 = por %p129, %p130
    %p132 = scmp.ne.s32.totalorder %s118, %s119
    %p133 = scmp.eq.s32.totalorder %s17, 1
    %p134 = por %p132, %p133
    %p136 = scmp.ne.s32.totalorder %s119, %s135
    %p137 = scmp.eq.s32.totalorder %s17, 0
    %p138 = por %p136, %p137
    %s139 = ssub.s32 %s18, %s30
    %s140 = ssub.s32 %s19, %s26
    %s141 = sor.u32 %s139, %s140
    %p142 = scmp.eq.s32.totalorder %s141, 0
    %s144 = sadd.s32 %s143, 1
    %s145 = scalar_select %p142, %s143, %s144
    %p148 = pneg %p142
    %p149 = scmp.eq.s32.totalorder %s11, 1
    %p150 = por %p148, %p149
    %p151 = scmp.ne.s32.totalorder %s143, %s146
    %p152 = scmp.eq.s32.totalorder %s11, 0
    %p153 = por %p151, %p152
    %p154 = scmp.ne.s32.totalorder %s143, %s146
    %p155 = scmp.eq.s32.totalorder %s16, 1
    %p156 = por %p154, %p155
    %p157 = scmp.ne.s32.totalorder %s146, %s147
    %p158 = scmp.eq.s32.totalorder %s16, 0
    %p159 = por %p157, %p158
    %p160 = scmp.ne.s32.totalorder %s146, %s147
    %p161 = scmp.eq.s32.totalorder %s17, 1
    %p162 = por %p160, %p161
    %p164 = scmp.ne.s32.totalorder %s147, %s163
    %p165 = scmp.eq.s32.totalorder %s17, 0
    %p166 = por %p164, %p165
    %p167 = scmp.le.s32.totalorder 1, %s11
    %p168 = scmp.lt.s32.totalorder %s11, 3
    %p169 = pnand %p167, %p168
    %p170 = pneg %p169
    // Predicated region
    $region9: #{conv_bn_relu.2} parent=5 // pred_check
      _
    $region10: #{conv_bn_relu.2} parent=5 // pred_check_branch
      %172 = sbr.rel (%p169) target = $region12
    $region11: #{conv_bn_relu.2} parent=5 // pred_region
      %s173 = ssub.s32 %s11, 1
      // Predicated region
      $region13: #{conv_bn_relu.2} parent=11 // pred_check
        %p174 = pneg %p103
      $region14: #{conv_bn_relu.2} parent=11 // pred_check_branch
        %176 = sbr.rel (%p174) target = $region16
      $region15: #{conv_bn_relu.2} parent=11 // pred_region
        %p177 = scmp.lt.s32.totalorder %s21, 0
        %s178 = scalar_select %p177, %s21, 0
        %s179 = smul.addr %s178, 4
        %s180 = scalar_lea.vmem %s2, %s179
      $region16: #{conv_bn_relu.2} parent=11 // pred_fallthru
        _
    $region12: #{conv_bn_relu.2} parent=5 // pred_fallthru
      _
    %p181 = scmp.lt.s32.totalorder %s11, 2
    // Predicated region
    $region17: #{conv_bn_relu.2} parent=5 // pred_check
      %p182 = pneg %p181
    $region18: #{conv_bn_relu.2} parent=5 // pred_check_branch
      %184 = sbr.rel (%p182) target = $region20
    $region19: #{conv_bn_relu.2} parent=5 // pred_region
      // Predicated region
      $region21: #{conv_bn_relu.2} parent=19 // pred_check
        %p185 = pneg %p43
      $region22: #{conv_bn_relu.2} parent=19 // pred_check_branch
        %187 = sbr.rel (%p185) target = $region24
      $region23: #{conv_bn_relu.2} parent=19 // pred_region
        %p188 = scmp.lt.s32.totalorder %s18, 2
        %s189 = scalar_select %p188, %s18, 2
        %s190 = smul.addr %s189, 64
        %s191 = smul.addr %s190, 4
        %s192 = scalar_lea.vmem %s0, %s191
      $region24: #{conv_bn_relu.2} parent=19 // pred_fallthru
        _
      // Predicated region
      $region25: #{conv_bn_relu.2} parent=19 // pred_check
        %p193 = pneg %p71
      $region26: #{conv_bn_relu.2} parent=19 // pred_check_branch
        %195 = sbr.rel (%p193) target = $region28
      $region27: #{conv_bn_relu.2} parent=19 // pred_region
        %s196 = sadd.s32 %s18, 1
        %p197 = scmp.lt.s32.totalorder %s196, 2
        %s198 = scalar_select %p197, %s196, 2
        %s199 = smul.addr %s198, 64
        %s200 = smul.addr %s199, 4
        %s201 = scalar_lea.vmem %s1, %s200
        %s202 = sadd.s32 %s18, 1
      $region28: #{conv_bn_relu.2} parent=19 // pred_fallthru
        _
    $region20: #{conv_bn_relu.2} parent=5 // pred_fallthru
      _
    %p203 = scmp.le.s32.totalorder 1, %s11
    %p204 = scmp.lt.s32.totalorder %s11, 3
    %p205 = pnand %p203, %p204
    %p206 = pneg %p205
    // Predicated region
    $region29: #{conv_bn_relu.2} parent=5 // pred_check
      _
    $region30: #{conv_bn_relu.2} parent=5 // pred_check_branch
      %208 = sbr.rel (%p205) target = $region32
    $region31: #{conv_bn_relu.2} parent=5 // pred_region
      %s209 = ssub.s32 %s11, 1
      %p210 = scmp.lt.s32.totalorder %s20, 2
      %s211 = scalar_select %p210, %s20, 2
      %s212 = smul.addr %s211, 64
      %s213 = smul.addr %s212, 4
      %s214 = scalar_lea.vmem %s0, %s213
      %p215 = pneg %p49
      %p216 = pneg %p46
      %s217 = sadd.s32 %s20, 1
      %p218 = scmp.lt.s32.totalorder %s217, 2
      %s219 = scalar_select %p218, %s217, 2
      %s220 = smul.addr %s219, 64
      %s221 = smul.addr %s220, 4
      %s222 = scalar_lea.vmem %s1, %s221
      %p223 = pneg %p77
      %p224 = pneg %p74
      %p225 = scmp.lt.s32.totalorder %s21, 0
      %s226 = scalar_select %p225, %s21, 0
      %s227 = smul.addr %s226, 4
      %s228 = scalar_lea.vmem %s2, %s227
      %p229 = pneg %p103
      %p230 = pneg %p100
      %p231 = pneg %p131
      %p232 = pneg %p128
      %s233 = smul.u32 64, %s20
      %p234 = scmp.lt.s32.totalorder %s233, 127
      %s235 = scalar_select %p234, %s233, 127
      %p236 = scmp.lt.s32.totalorder %s21, 0
      %s237 = scalar_select %p236, %s21, 0
      %s238 = sadd.s32 %s237, %s235
      %s239 = smul.addr %s238, 4
      %s240 = scalar_lea.vmem %s3, %s239
      %p241 = pneg %p159
      %p242 = pneg %p156
      %p243 = scmp.lt.s32.totalorder %s20, 1
      %s244 = scalar_select %p243, %s20, 1
      %p245 = scmp.lt.s32.totalorder %s21, 0
      %s246 = scalar_select %p245, %s21, 0
      %s247 = sadd.s32 %s246, %s244
      %s248 = smul.addr %s247, 8
      %s249 = scalar_lea.vmem %s4, %s248
      %p250 = scmp.lt.s32.totalorder %s20, 2
      %s251 = scalar_select %p250, %s20, 2
      %s252 = smul.addr %s251, 64
      %s253 = smul.addr %s252, 4
      %s254 = scalar_lea.vmem %s0, %s253
      %s255 = sadd.s32 %s20, 1
      %p256 = scmp.lt.s32.totalorder %s255, 2
      %s257 = scalar_select %p256, %s255, 2
      %s258 = smul.addr %s257, 64
      %s259 = smul.addr %s258, 4
      %s260 = scalar_lea.vmem %s1, %s259
      %s261 = sadd.s32 %s20, 1
      %p262 = scmp.lt.s32.totalorder %s21, 0
      %s263 = scalar_select %p262, %s21, 0
      %s264 = smul.addr %s263, 4
      %s265 = scalar_lea.vmem %s2, %s264
      %s266 = smul.u32 64, %s20
      %p267 = scmp.lt.s32.totalorder %s266, 127
      %s268 = scalar_select %p267, %s266, 127
      %p269 = scmp.lt.s32.totalorder %s21, 0
      %s270 = scalar_select %p269, %s21, 0
      %s271 = sadd.s32 %s270, %s268
      %s272 = smul.addr %s271, 4
      %s273 = scalar_lea.vmem %s3, %s272
      %s274 = smul.u32 64, %s20
      %p275 = scmp.lt.s32.totalorder %s20, 1
      %s276 = scalar_select %p275, %s20, 1
      %p277 = scmp.lt.s32.totalorder %s21, 0
      %s278 = scalar_select %p277, %s21, 0
      %s279 = sadd.s32 %s278, %s276
      %s280 = smul.addr %s279, 8
      %s281 = scalar_lea.vmem %s4, %s280
      %v283 = vld [vmem:[%s254] sm:$0xf]
      %v284 = vld [vmem:[%s254 + $0x4] sm:$0xf]
      %v285 = vld [vmem:[%s254 + $0x8] sm:$0xf]
      %v286 = vld [vmem:[%s254 + $0xc] sm:$0xf]
      %v287 = vld [vmem:[%s254 + $0x10] sm:$0xf]
      %v288 = vld [vmem:[%s254 + $0x14] sm:$0xf]
      %v289 = vld [vmem:[%s254 + $0x18] sm:$0xf]
      %v290 = vld [vmem:[%s254 + $0x1c] sm:$0xf]
      %v291 = vld [vmem:[%s254 + $0x20] sm:$0xf]
      %v292 = vld [vmem:[%s254 + $0x24] sm:$0xf]
      %v293 = vld [vmem:[%s254 + $0x28] sm:$0xf]
      %v294 = vld [vmem:[%s254 + $0x2c] sm:$0xf]
      %v295 = vld [vmem:[%s254 + $0x30] sm:$0xf]
      %v296 = vld [vmem:[%s254 + $0x34] sm:$0xf]
      %v297 = vld [vmem:[%s254 + $0x38] sm:$0xf]
      %v298 = vld [vmem:[%s254 + $0x3c] sm:$0xf]
      %v299 = vld [vmem:[%s254 + $0x40] sm:$0xf]
      %v300 = vld [vmem:[%s254 + $0x44] sm:$0xf]
      %v301 = vld [vmem:[%s254 + $0x48] sm:$0xf]
      %v302 = vld [vmem:[%s254 + $0x4c] sm:$0xf]
      %v303 = vld [vmem:[%s254 + $0x50] sm:$0xf]
      %v304 = vld [vmem:[%s254 + $0x54] sm:$0xf]
      %v305 = vld [vmem:[%s254 + $0x58] sm:$0xf]
      %v306 = vld [vmem:[%s254 + $0x5c] sm:$0xf]
      %v307 = vld [vmem:[%s254 + $0x60] sm:$0xf]
      %v308 = vld [vmem:[%s254 + $0x64] sm:$0xf]
      %v309 = vld [vmem:[%s254 + $0x68] sm:$0xf]
      %v310 = vld [vmem:[%s254 + $0x6c] sm:$0xf]
      %v311 = vld [vmem:[%s254 + $0x70] sm:$0xf]
      %v312 = vld [vmem:[%s254 + $0x74] sm:$0xf]
      %v313 = vld [vmem:[%s254 + $0x78] sm:$0xf]
      %v314 = vld [vmem:[%s254 + $0x7c] sm:$0xf]
      %v315 = vld [vmem:[%s254 + $0x80] sm:$0xf]
      %v316 = vld [vmem:[%s254 + $0x84] sm:$0xf]
      %v317 = vld [vmem:[%s254 + $0x88] sm:$0xf]
      %v318 = vld [vmem:[%s254 + $0x8c] sm:$0xf]
      %v319 = vld [vmem:[%s254 + $0x90] sm:$0xf]
      %v320 = vld [vmem:[%s254 + $0x94] sm:$0xf]
      %v321 = vld [vmem:[%s254 + $0x98] sm:$0xf]
      %v322 = vld [vmem:[%s254 + $0x9c] sm:$0xf]
      %v323 = vld [vmem:[%s254 + $0xa0] sm:$0xf]
      %v324 = vld [vmem:[%s254 + $0xa4] sm:$0xf]
      %v325 = vld [vmem:[%s254 + $0xa8] sm:$0xf]
      %v326 = vld [vmem:[%s254 + $0xac] sm:$0xf]
      %v327 = vld [vmem:[%s254 + $0xb0] sm:$0xf]
      %v328 = vld [vmem:[%s254 + $0xb4] sm:$0xf]
      %v329 = vld [vmem:[%s254 + $0xb8] sm:$0xf]
      %v330 = vld [vmem:[%s254 + $0xbc] sm:$0xf]
      %v331 = vld [vmem:[%s254 + $0xc0] sm:$0xf]
      %v332 = vld [vmem:[%s254 + $0xc4] sm:$0xf]
      %v333 = vld [vmem:[%s254 + $0xc8] sm:$0xf]
      %v334 = vld [vmem:[%s254 + $0xcc] sm:$0xf]
      %v335 = vld [vmem:[%s254 + $0xd0] sm:$0xf]
      %v336 = vld [vmem:[%s254 + $0xd4] sm:$0xf]
      %v337 = vld [vmem:[%s254 + $0xd8] sm:$0xf]
      %v338 = vld [vmem:[%s254 + $0xdc] sm:$0xf]
      %v339 = vld [vmem:[%s254 + $0xe0] sm:$0xf]
      %v340 = vld [vmem:[%s254 + $0xe4] sm:$0xf]
      %v341 = vld [vmem:[%s254 + $0xe8] sm:$0xf]
      %v342 = vld [vmem:[%s254 + $0xec] sm:$0xf]
      %v343 = vld [vmem:[%s254 + $0xf0] sm:$0xf]
      %v344 = vld [vmem:[%s254 + $0xf4] sm:$0xf]
      %v345 = vld [vmem:[%s254 + $0xf8] sm:$0xf]
      %v346 = vld [vmem:[%s254 + $0xfc] sm:$0xf]
      %v347 = vld [vmem:[%s260] sm:$0xf]
      %v348 = vld [vmem:[%s260 + $0x4] sm:$0xf]
      %v349 = vld [vmem:[%s260 + $0x8] sm:$0xf]
      %v350 = vld [vmem:[%s260 + $0xc] sm:$0xf]
      %v351 = vld [vmem:[%s260 + $0x10] sm:$0xf]
      %v352 = vld [vmem:[%s260 + $0x14] sm:$0xf]
      %v417 = vunpack.c.l.b16 %v283
      %v418 = vunpack.c.l.b16 %v284
      %v419 = vunpack.c.l.b16 %v285
      %v420 = vunpack.c.l.b16 %v286
      %v421 = vunpack.c.l.b16 %v287
      %v422 = vunpack.c.l.b16 %v288
      %v423 = vunpack.c.l.b16 %v289
      %v424 = vunpack.c.l.b16 %v290
      %v425 = vunpack.c.l.b16 %v291
      %v426 = vunpack.c.l.b16 %v292
      %v427 = vunpack.c.l.b16 %v293
      %v428 = vunpack.c.l.b16 %v294
      %v429 = vunpack.c.l.b16 %v295
      %v430 = vunpack.c.l.b16 %v296
      %v431 = vunpack.c.l.b16 %v297
      %v432 = vunpack.c.l.b16 %v298
      %v433 = vunpack.c.l.b16 %v299
      %v434 = vunpack.c.l.b16 %v300
      %v435 = vunpack.c.l.b16 %v301
      %v436 = vunpack.c.l.b16 %v302
      %v437 = vunpack.c.l.b16 %v303
      %v438 = vunpack.c.l.b16 %v304
      %v439 = vunpack.c.l.b16 %v305
      %v440 = vunpack.c.l.b16 %v306
      %v441 = vunpack.c.l.b16 %v307
      %v442 = vunpack.c.l.b16 %v308
      %v443 = vunpack.c.l.b16 %v309
      %v444 = vunpack.c.l.b16 %v310
      %v445 = vunpack.c.l.b16 %v311
      %v446 = vunpack.c.l.b16 %v312
      %v447 = vunpack.c.l.b16 %v313
      %v448 = vunpack.c.l.b16 %v314
      %v449 = vunpack.c.l.b16 %v315
      %v450 = vunpack.c.l.b16 %v316
      %v451 = vunpack.c.l.b16 %v317
      %v452 = vunpack.c.l.b16 %v318
      %v453 = vunpack.c.l.b16 %v319
      %v454 = vunpack.c.l.b16 %v320
      %v455 = vunpack.c.l.b16 %v321
      %v456 = vunpack.c.l.b16 %v322
      %v457 = vunpack.c.l.b16 %v323
      %v458 = vunpack.c.l.b16 %v324
      %v459 = vunpack.c.l.b16 %v325
      %v460 = vunpack.c.l.b16 %v326
      %v461 = vunpack.c.l.b16 %v327
      %v462 = vunpack.c.l.b16 %v328
      %v463 = vunpack.c.l.b16 %v329
      %v464 = vunpack.c.l.b16 %v330
      %v465 = vunpack.c.l.b16 %v331
      %v466 = vunpack.c.l.b16 %v332
      %v467 = vunpack.c.l.b16 %v333
      %v468 = vunpack.c.l.b16 %v334
      %v469 = vunpack.c.l.b16 %v335
      %v470 = vunpack.c.l.b16 %v336
      %v471 = vunpack.c.l.b16 %v337
      %v472 = vunpack.c.l.b16 %v338
      %v473 = vunpack.c.l.b16 %v339
      %v474 = vunpack.c.l.b16 %v340
      %v475 = vunpack.c.l.b16 %v341
      %v476 = vunpack.c.l.b16 %v342
      %v477 = vunpack.c.l.b16 %v343
      %v478 = vunpack.c.l.b16 %v344
      %v479 = vunpack.c.l.b16 %v345
      %v480 = vunpack.c.l.b16 %v346
      %v481 = vpack.c.b16 %v418, %v417
      %v482 = vpack.c.b16 %v420, %v419
      %v483 = vpack.c.b16 %v422, %v421
      %v484 = vpack.c.b16 %v424, %v423
      %v485 = vpack.c.b16 %v426, %v425
      %v486 = vpack.c.b16 %v428, %v427
      %v487 = vpack.c.b16 %v430, %v429
      %v488 = vpack.c.b16 %v432, %v431
      %v489 = vpack.c.b16 %v434, %v433
      %v490 = vpack.c.b16 %v436, %v435
      %v491 = vpack.c.b16 %v438, %v437
      %v492 = vpack.c.b16 %v440, %v439
      %v493 = vpack.c.b16 %v442, %v441
      %v494 = vpack.c.b16 %v444, %v443
      %v495 = vpack.c.b16 %v446, %v445
      %v496 = vpack.c.b16 %v448, %v447
      %v497 = vpack.c.b16 %v450, %v449
      %v498 = vpack.c.b16 %v452, %v451
      %v499 = vpack.c.b16 %v454, %v453
      %v500 = vpack.c.b16 %v456, %v455
      %v501 = vpack.c.b16 %v458, %v457
      %v502 = vpack.c.b16 %v460, %v459
      %v503 = vpack.c.b16 %v462, %v461
      %v504 = vpack.c.b16 %v464, %v463
      %v505 = vpack.c.b16 %v466, %v465
      %v506 = vpack.c.b16 %v468, %v467
      %v507 = vpack.c.b16 %v470, %v469
      %v508 = vpack.c.b16 %v472, %v471
      %v509 = vpack.c.b16 %v474, %v473
      %v510 = vpack.c.b16 %v476, %v475
      %v511 = vpack.c.b16 %v478, %v477
      %v512 = vpack.c.b16 %v480, %v479
      %v551 = vunpack.c.l.b16 %v347
      %v552 = vunpack.c.l.b16 %v348
      %v553 = vunpack.c.l.b16 %v349
      %v554 = vunpack.c.l.b16 %v350
      %v555 = vunpack.c.l.b16 %v351
      %v556 = vunpack.c.l.b16 %v352
      %v557 = vpack.c.b16 %v552, %v551
      %v558 = vpack.c.b16 %v554, %v553
      %v559 = vpack.c.b16 %v556, %v555
      %v560 = vld [vmem:[%s265] sm:$0xf]
      %v561 = vld [vmem:[%s265 + $0x4] sm:$0x7]
      %s562 = scalar_lea.vmem %s265, 8
      %v563 = vld [vmem:[%s562] sm:$0xf]
      %v564 = vld [vmem:[%s562 + $0x4] sm:$0x7]
      %vm565 = vcmask 1046528
      %v566 = vrot.slane %v482, 1
      %v567 = vrot.slane %v483, 1
      %v568 = vsel %vm565, %v566, %v567
      %v569 = vrot.slane %v484, 1
      %v570 = vsel %vm565, %v567, %v569
      %v571 = vrot.slane %v485, 1
      %v572 = vsel %vm565, %v569, %v571
      %v573 = vrot.slane %v486, 1
      %v574 = vsel %vm565, %v571, %v573
      %v575 = vrot.slane %v487, 1
      %v576 = vsel %vm565, %v573, %v575
      %v577 = vrot.slane %v488, 1
      %v578 = vsel %vm565, %v575, %v577
      %v579 = vrot.slane %v489, 1
      %v580 = vsel %vm565, %v577, %v579
      %v581 = vrot.slane %v490, 1
      %v582 = vsel %vm565, %v579, %v581
      %v583 = vrot.slane %v491, 1
      %v584 = vsel %vm565, %v581, %v583
      %v585 = vrot.slane %v492, 1
      %v586 = vsel %vm565, %v583, %v585
      %v587 = vrot.slane %v493, 1
      %v588 = vsel %vm565, %v585, %v587
      %v589 = vrot.slane %v494, 1
      %v590 = vsel %vm565, %v587, %v589
      %v591 = vrot.slane %v495, 1
      %v592 = vsel %vm565, %v589, %v591
      %v593 = vrot.slane %v496, 1
      %v594 = vsel %vm565, %v591, %v593
      %v595 = vrot.slane %v497, 1
      %v596 = vsel %vm565, %v593, %v595
      %v597 = vrot.slane %v498, 1
      %v598 = vsel %vm565, %v595, %v597
      %v599 = vrot.slane %v499, 1
      %v600 = vsel %vm565, %v597, %v599
      %v601 = vrot.slane %v500, 1
      %v602 = vsel %vm565, %v599, %v601
      %v603 = vrot.slane %v501, 1
      %v604 = vsel %vm565, %v601, %v603
      %v605 = vrot.slane %v502, 1
      %v606 = vsel %vm565, %v603, %v605
      %v607 = vrot.slane %v503, 1
      %v608 = vsel %vm565, %v605, %v607
      %v609 = vrot.slane %v504, 1
      %v610 = vsel %vm565, %v607, %v609
      %v611 = vrot.slane %v505, 1
      %v612 = vsel %vm565, %v609, %v611
      %v613 = vrot.slane %v506, 1
      %v614 = vsel %vm565, %v611, %v613
      %v615 = vrot.slane %v507, 1
      %v616 = vsel %vm565, %v613, %v615
      %v617 = vrot.slane %v508, 1
      %v618 = vsel %vm565, %v615, %v617
      %v619 = vrot.slane %v509, 1
      %v620 = vsel %vm565, %v617, %v619
      %v621 = vrot.slane %v510, 1
      %v622 = vsel %vm565, %v619, %v621
      %v623 = vrot.slane %v511, 1
      %v624 = vsel %vm565, %v621, %v623
      %v625 = vrot.slane %v512, 1
      %v626 = vsel %vm565, %v623, %v625
      %v627 = vrot.slane %v557, 1
      %v628 = vsel %vm565, %v625, %v627
      %v629 = vrot.slane %v558, 1
      %v630 = vsel %vm565, %v627, %v629
      %v633 = vunpack.c.l.b16 %v563
      %v634 = vunpack.c.l.b16 %v564
      %v635 = vpack.c.b16 %v634, %v633
      %vm636 = vcmask 105472
      %v638 = vsel %vm636, %v568, 0
      %v641 = vsel %vm636, %v570, 0
      %v644 = vsel %vm636, %v572, 0
      %v647 = vsel %vm636, %v574, 0
      %v650 = vsel %vm636, %v576, 0
      %v653 = vsel %vm636, %v578, 0
      %v656 = vsel %vm636, %v580, 0
      %v659 = vsel %vm636, %v582, 0
      %v662 = vsel %vm636, %v584, 0
      %v665 = vsel %vm636, %v586, 0
      %v668 = vsel %vm636, %v588, 0
      %v671 = vsel %vm636, %v590, 0
      %v674 = vsel %vm636, %v592, 0
      %v677 = vsel %vm636, %v594, 0
      %v680 = vsel %vm636, %v596, 0
      %v683 = vsel %vm636, %v598, 0
      %v686 = vsel %vm636, %v600, 0
      %v689 = vsel %vm636, %v602, 0
      %v692 = vsel %vm636, %v604, 0
      %v695 = vsel %vm636, %v606, 0
      %v698 = vsel %vm636, %v608, 0
      %v701 = vsel %vm636, %v610, 0
      %v704 = vsel %vm636, %v612, 0
      %v707 = vsel %vm636, %v614, 0
      %v710 = vsel %vm636, %v616, 0
      %v713 = vsel %vm636, %v618, 0
      %v716 = vsel %vm636, %v620, 0
      %v719 = vsel %vm636, %v622, 0
      %v722 = vsel %vm636, %v624, 0
      %v725 = vsel %vm636, %v626, 0
      %v728 = vsel %vm636, %v628, 0
      %v731 = vsel %vm636, %v630, 0
      %vm733 = vcmask 1045504
      %vm734 = vcmask 1046528
      %v735 = vsel %vm733, 4294967295, 65535
      %v736 = vsel %vm734, %v735, 0
      %v738 = vand.u32 %v635, %v736
      %740 = vmatpush.bf16.msra.mxu0 0
      %741 = vmatpush.bf16.msra.mxu0 0
      %742 = vmatpush.bf16.msra.mxu0 0
      %743 = vmatpush.bf16.msra.mxu0 0
      %744 = vmatpush.bf16.msra.mxu0 0
      %745 = vmatpush.bf16.msra.mxu0 0
      %746 = vmatpush.bf16.msra.mxu0 0
      %747 = vmatpush.bf16.msra.mxu0 %v738
      %748 = vmatmul.bf16.gmra.mxu0 %v638
      %v749 = vpop.f32.mrf.mxu0
      %v750 = vadd.f32 0.0, %v749
      %v751 = vpop.f32.mrf.mxu0
      %v752 = vadd.f32 0.0, %v751
      %753 = vmatmul.bf16.gmra.mxu0 %v641
      %v754 = vpop.f32.mrf.mxu0
      %v755 = vadd.f32 0.0, %v754
      %v756 = vpop.f32.mrf.mxu0
      %v757 = vadd.f32 0.0, %v756
      %758 = vmatmul.bf16.gmra.mxu0 %v644
      %v759 = vpop.f32.mrf.mxu0
      %v760 = vadd.f32 0.0, %v759
      %v761 = vpop.f32.mrf.mxu0
      %v762 = vadd.f32 0.0, %v761
      %763 = vmatmul.bf16.gmra.mxu0 %v647
      %v764 = vpop.f32.mrf.mxu0
      %v765 = vadd.f32 0.0, %v764
      %v766 = vpop.f32.mrf.mxu0
      %v767 = vadd.f32 0.0, %v766
      %768 = vmatmul.bf16.gmra.mxu0 %v650
      %v769 = vpop.f32.mrf.mxu0
      %v770 = vadd.f32 0.0, %v769
      %v771 = vpop.f32.mrf.mxu0
      %v772 = vadd.f32 0.0, %v771
      %773 = vmatmul.bf16.gmra.mxu0 %v653
      %v774 = vpop.f32.mrf.mxu0
      %v775 = vadd.f32 0.0, %v774
      %v776 = vpop.f32.mrf.mxu0
      %v777 = vadd.f32 0.0, %v776
      %778 = vmatmul.bf16.gmra.mxu0 %v656
      %v779 = vpop.f32.mrf.mxu0
      %v780 = vadd.f32 0.0, %v779
      %v781 = vpop.f32.mrf.mxu0
      %v782 = vadd.f32 0.0, %v781
      %783 = vmatmul.bf16.gmra.mxu0 %v659
      %v784 = vpop.f32.mrf.mxu0
      %v785 = vadd.f32 0.0, %v784
      %v786 = vpop.f32.mrf.mxu0
      %v787 = vadd.f32 0.0, %v786
      %788 = vmatmul.bf16.gmra.mxu0 %v662
      %v789 = vpop.f32.mrf.mxu0
      %v790 = vadd.f32 0.0, %v789
      %v791 = vpop.f32.mrf.mxu0
      %v792 = vadd.f32 0.0, %v791
      %793 = vmatmul.bf16.gmra.mxu0 %v665
      %v794 = vpop.f32.mrf.mxu0
      %v795 = vadd.f32 0.0, %v794
      %v796 = vpop.f32.mrf.mxu0
      %v797 = vadd.f32 0.0, %v796
      %798 = vmatmul.bf16.gmra.mxu0 %v668
      %v799 = vpop.f32.mrf.mxu0
      %v800 = vadd.f32 0.0, %v799
      %v801 = vpop.f32.mrf.mxu0
      %v802 = vadd.f32 0.0, %v801
      %803 = vmatmul.bf16.gmra.mxu0 %v671
      %v804 = vpop.f32.mrf.mxu0
      %v805 = vadd.f32 0.0, %v804
      %v806 = vpop.f32.mrf.mxu0
      %v807 = vadd.f32 0.0, %v806
      %808 = vmatmul.bf16.gmra.mxu0 %v674
      %v809 = vpop.f32.mrf.mxu0
      %v810 = vadd.f32 0.0, %v809
      %v811 = vpop.f32.mrf.mxu0
      %v812 = vadd.f32 0.0, %v811
      %813 = vmatmul.bf16.gmra.mxu0 %v677
      %v814 = vpop.f32.mrf.mxu0
      %v815 = vadd.f32 0.0, %v814
      %v816 = vpop.f32.mrf.mxu0
      %v817 = vadd.f32 0.0, %v816
      %818 = vmatmul.bf16.gmra.mxu0 %v680
      %v819 = vpop.f32.mrf.mxu0
      %v820 = vadd.f32 0.0, %v819
      %v821 = vpop.f32.mrf.mxu0
      %v822 = vadd.f32 0.0, %v821
      %823 = vmatmul.bf16.gmra.mxu0 %v683
      %v824 = vpop.f32.mrf.mxu0
      %v825 = vadd.f32 0.0, %v824
      %v826 = vpop.f32.mrf.mxu0
      %v827 = vadd.f32 0.0, %v826
      %828 = vmatmul.bf16.gmra.mxu0 %v686
      %v829 = vpop.f32.mrf.mxu0
      %v830 = vadd.f32 0.0, %v829
      %v831 = vpop.f32.mrf.mxu0
      %v832 = vadd.f32 0.0, %v831
      %833 = vmatmul.bf16.gmra.mxu0 %v689
      %v834 = vpop.f32.mrf.mxu0
      %v835 = vadd.f32 0.0, %v834
      %v836 = vpop.f32.mrf.mxu0
      %v837 = vadd.f32 0.0, %v836
      %838 = vmatmul.bf16.gmra.mxu0 %v692
      %v839 = vpop.f32.mrf.mxu0
      %v840 = vadd.f32 0.0, %v839
      %v841 = vpop.f32.mrf.mxu0
      %v842 = vadd.f32 0.0, %v841
      %843 = vmatmul.bf16.gmra.mxu0 %v695
      %v844 = vpop.f32.mrf.mxu0
      %v845 = vadd.f32 0.0, %v844
      %v846 = vpop.f32.mrf.mxu0
      %v847 = vadd.f32 0.0, %v846
      %848 = vmatmul.bf16.gmra.mxu0 %v698
      %v849 = vpop.f32.mrf.mxu0
      %v850 = vadd.f32 0.0, %v849
      %v851 = vpop.f32.mrf.mxu0
      %v852 = vadd.f32 0.0, %v851
      %853 = vmatmul.bf16.gmra.mxu0 %v701
      %v854 = vpop.f32.mrf.mxu0
      %v855 = vadd.f32 0.0, %v854
      %v856 = vpop.f32.mrf.mxu0
      %v857 = vadd.f32 0.0, %v856
      %858 = vmatmul.bf16.gmra.mxu0 %v704
      %v859 = vpop.f32.mrf.mxu0
      %v860 = vadd.f32 0.0, %v859
      %v861 = vpop.f32.mrf.mxu0
      %v862 = vadd.f32 0.0, %v861
      %863 = vmatmul.bf16.gmra.mxu0 %v707
      %v864 = vpop.f32.mrf.mxu0
      %v865 = vadd.f32 0.0, %v864
      %v866 = vpop.f32.mrf.mxu0
      %v867 = vadd.f32 0.0, %v866
      %868 = vmatmul.bf16.gmra.mxu0 %v710
      %v869 = vpop.f32.mrf.mxu0
      %v870 = vadd.f32 0.0, %v869
      %v871 = vpop.f32.mrf.mxu0
      %v872 = vadd.f32 0.0, %v871
      %873 = vmatmul.bf16.gmra.mxu0 %v713
      %v874 = vpop.f32.mrf.mxu0
      %v875 = vadd.f32 0.0, %v874
      %v876 = vpop.f32.mrf.mxu0
      %v877 = vadd.f32 0.0, %v876
      %878 = vmatmul.bf16.gmra.mxu0 %v716
      %v879 = vpop.f32.mrf.mxu0
      %v880 = vadd.f32 0.0, %v879
      %v881 = vpop.f32.mrf.mxu0
      %v882 = vadd.f32 0.0, %v881
      %883 = vmatmul.bf16.gmra.mxu0 %v719
      %v884 = vpop.f32.mrf.mxu0
      %v885 = vadd.f32 0.0, %v884
      %v886 = vpop.f32.mrf.mxu0
      %v887 = vadd.f32 0.0, %v886
      %888 = vmatmul.bf16.gmra.mxu0 %v722
      %v889 = vpop.f32.mrf.mxu0
      %v890 = vadd.f32 0.0, %v889
      %v891 = vpop.f32.mrf.mxu0
      %v892 = vadd.f32 0.0, %v891
      %893 = vmatmul.bf16.gmra.mxu0 %v725
      %v894 = vpop.f32.mrf.mxu0
      %v895 = vadd.f32 0.0, %v894
      %v896 = vpop.f32.mrf.mxu0
      %v897 = vadd.f32 0.0, %v896
      %898 = vmatmul.bf16.gmra.mxu0 %v728
      %v899 = vpop.f32.mrf.mxu0
      %v900 = vadd.f32 0.0, %v899
      %v901 = vpop.f32.mrf.mxu0
      %v902 = vadd.f32 0.0, %v901
      %903 = vmatmul.bf16.gmra.mxu0 %v731
      %v904 = vpop.f32.mrf.mxu0
      %v905 = vadd.f32 0.0, %v904
      %v906 = vpop.f32.mrf.mxu0
      %v907 = vadd.f32 0.0, %v906
      %908 = vdwg.mxu0
      %v911 = vunpack.c.l.b16 %v560
      %v912 = vunpack.c.l.b16 %v561
      %v913 = vpack.c.b16 %v912, %v911
      %v915 = vsel %vm636, %v481, 0
      %v918 = vsel %vm636, %v482, 0
      %v921 = vsel %vm636, %v483, 0
      %v924 = vsel %vm636, %v484, 0
      %v927 = vsel %vm636, %v485, 0
      %v930 = vsel %vm636, %v486, 0
      %v933 = vsel %vm636, %v487, 0
      %v936 = vsel %vm636, %v488, 0
      %v939 = vsel %vm636, %v489, 0
      %v942 = vsel %vm636, %v490, 0
      %v945 = vsel %vm636, %v491, 0
      %v948 = vsel %vm636, %v492, 0
      %v951 = vsel %vm636, %v493, 0
      %v954 = vsel %vm636, %v494, 0
      %v957 = vsel %vm636, %v495, 0
      %v960 = vsel %vm636, %v496, 0
      %v963 = vsel %vm636, %v497, 0
      %v966 = vsel %vm636, %v498, 0
      %v969 = vsel %vm636, %v499, 0
      %v972 = vsel %vm636, %v500, 0
      %v975 = vsel %vm636, %v501, 0
      %v978 = vsel %vm636, %v502, 0
      %v981 = vsel %vm636, %v503, 0
      %v984 = vsel %vm636, %v504, 0
      %v987 = vsel %vm636, %v505, 0
      %v990 = vsel %vm636, %v506, 0
      %v993 = vsel %vm636, %v507, 0
      %v996 = vsel %vm636, %v508, 0
      %v999 = vsel %vm636, %v509, 0
      %v1002 = vsel %vm636, %v510, 0
      %v1005 = vsel %vm636, %v511, 0
      %v1008 = vsel %vm636, %v512, 0
      %v1011 = vand.u32 %v913, %v736
      %1013 = vmatpush.bf16.msra.mxu0 0
      %1014 = vmatpush.bf16.msra.mxu0 0
      %1015 = vmatpush.bf16.msra.mxu0 0
      %1016 = vmatpush.bf16.msra.mxu0 0
      %1017 = vmatpush.bf16.msra.mxu0 0
      %1018 = vmatpush.bf16.msra.mxu0 0
      %1019 = vmatpush.bf16.msra.mxu0 0
      %1020 = vmatpush.bf16.msra.mxu0 %v1011
      %1021 = vmatmul.bf16.gmra.mxu0 %v915
      %v1022 = vpop.f32.mrf.mxu0
      %v1023 = vadd.f32 %v750, %v1022
      %v1024 = vpop.f32.mrf.mxu0
      %v1025 = vadd.f32 %v752, %v1024
      %1026 = vmatmul.bf16.gmra.mxu0 %v918
      %v1027 = vpop.f32.mrf.mxu0
      %v1028 = vadd.f32 %v755, %v1027
      %v1029 = vpop.f32.mrf.mxu0
      %v1030 = vadd.f32 %v757, %v1029
      %1031 = vmatmul.bf16.gmra.mxu0 %v921
      %v1032 = vpop.f32.mrf.mxu0
      %v1033 = vadd.f32 %v760, %v1032
      %v1034 = vpop.f32.mrf.mxu0
      %v1035 = vadd.f32 %v762, %v1034
      %1036 = vmatmul.bf16.gmra.mxu0 %v924
      %v1037 = vpop.f32.mrf.mxu0
      %v1038 = vadd.f32 %v765, %v1037
      %v1039 = vpop.f32.mrf.mxu0
      %v1040 = vadd.f32 %v767, %v1039
      %1041 = vmatmul.bf16.gmra.mxu0 %v927
      %v1042 = vpop.f32.mrf.mxu0
      %v1043 = vadd.f32 %v770, %v1042
      %v1044 = vpop.f32.mrf.mxu0
      %v1045 = vadd.f32 %v772, %v1044
      %1046 = vmatmul.bf16.gmra.mxu0 %v930
      %v1047 = vpop.f32.mrf.mxu0
      %v1048 = vadd.f32 %v775, %v1047
      %v1049 = vpop.f32.mrf.mxu0
      %v1050 = vadd.f32 %v777, %v1049
      %1051 = vmatmul.bf16.gmra.mxu0 %v933
      %v1052 = vpop.f32.mrf.mxu0
      %v1053 = vadd.f32 %v780, %v1052
      %v1054 = vpop.f32.mrf.mxu0
      %v1055 = vadd.f32 %v782, %v1054
      %1056 = vmatmul.bf16.gmra.mxu0 %v936
      %v1057 = vpop.f32.mrf.mxu0
      %v1058 = vadd.f32 %v785, %v1057
      %v1059 = vpop.f32.mrf.mxu0
      %v1060 = vadd.f32 %v787, %v1059
      %1061 = vmatmul.bf16.gmra.mxu0 %v939
      %v1062 = vpop.f32.mrf.mxu0
      %v1063 = vadd.f32 %v790, %v1062
      %v1064 = vpop.f32.mrf.mxu0
      %v1065 = vadd.f32 %v792, %v1064
      %1066 = vmatmul.bf16.gmra.mxu0 %v942
      %v1067 = vpop.f32.mrf.mxu0
      %v1068 = vadd.f32 %v795, %v1067
      %v1069 = vpop.f32.mrf.mxu0
      %v1070 = vadd.f32 %v797, %v1069
      %1071 = vmatmul.bf16.gmra.mxu0 %v945
      %v1072 = vpop.f32.mrf.mxu0
      %v1073 = vadd.f32 %v800, %v1072
      %v1074 = vpop.f32.mrf.mxu0
      %v1075 = vadd.f32 %v802, %v1074
      %1076 = vmatmul.bf16.gmra.mxu0 %v948
      %v1077 = vpop.f32.mrf.mxu0
      %v1078 = vadd.f32 %v805, %v1077
      %v1079 = vpop.f32.mrf.mxu0
      %v1080 = vadd.f32 %v807, %v1079
      %1081 = vmatmul.bf16.gmra.mxu0 %v951
      %v1082 = vpop.f32.mrf.mxu0
      %v1083 = vadd.f32 %v810, %v1082
      %v1084 = vpop.f32.mrf.mxu0
      %v1085 = vadd.f32 %v812, %v1084
      %1086 = vmatmul.bf16.gmra.mxu0 %v954
      %v1087 = vpop.f32.mrf.mxu0
      %v1088 = vadd.f32 %v815, %v1087
      %v1089 = vpop.f32.mrf.mxu0
      %v1090 = vadd.f32 %v817, %v1089
      %1091 = vmatmul.bf16.gmra.mxu0 %v957
      %v1092 = vpop.f32.mrf.mxu0
      %v1093 = vadd.f32 %v820, %v1092
      %v1094 = vpop.f32.mrf.mxu0
      %v1095 = vadd.f32 %v822, %v1094
      %1096 = vmatmul.bf16.gmra.mxu0 %v960
      %v1097 = vpop.f32.mrf.mxu0
      %v1098 = vadd.f32 %v825, %v1097
      %v1099 = vpop.f32.mrf.mxu0
      %v1100 = vadd.f32 %v827, %v1099
      %1101 = vmatmul.bf16.gmra.mxu0 %v963
      %v1102 = vpop.f32.mrf.mxu0
      %v1103 = vadd.f32 %v830, %v1102
      %v1104 = vpop.f32.mrf.mxu0
      %v1105 = vadd.f32 %v832, %v1104
      %1106 = vmatmul.bf16.gmra.mxu0 %v966
      %v1107 = vpop.f32.mrf.mxu0
      %v1108 = vadd.f32 %v835, %v1107
      %v1109 = vpop.f32.mrf.mxu0
      %v1110 = vadd.f32 %v837, %v1109
      %1111 = vmatmul.bf16.gmra.mxu0 %v969
      %v1112 = vpop.f32.mrf.mxu0
      %v1113 = vadd.f32 %v840, %v1112
      %v1114 = vpop.f32.mrf.mxu0
      %v1115 = vadd.f32 %v842, %v1114
      %1116 = vmatmul.bf16.gmra.mxu0 %v972
      %v1117 = vpop.f32.mrf.mxu0
      %v1118 = vadd.f32 %v845, %v1117
      %v1119 = vpop.f32.mrf.mxu0
      %v1120 = vadd.f32 %v847, %v1119
      %1121 = vmatmul.bf16.gmra.mxu0 %v975
      %v1122 = vpop.f32.mrf.mxu0
      %v1123 = vadd.f32 %v850, %v1122
      %v1124 = vpop.f32.mrf.mxu0
      %v1125 = vadd.f32 %v852, %v1124
      %1126 = vmatmul.bf16.gmra.mxu0 %v978
      %v1127 = vpop.f32.mrf.mxu0
      %v1128 = vadd.f32 %v855, %v1127
      %v1129 = vpop.f32.mrf.mxu0
      %v1130 = vadd.f32 %v857, %v1129
      %1131 = vmatmul.bf16.gmra.mxu0 %v981
      %v1132 = vpop.f32.mrf.mxu0
      %v1133 = vadd.f32 %v860, %v1132
      %v1134 = vpop.f32.mrf.mxu0
      %v1135 = vadd.f32 %v862, %v1134
      %1136 = vmatmul.bf16.gmra.mxu0 %v984
      %v1137 = vpop.f32.mrf.mxu0
      %v1138 = vadd.f32 %v865, %v1137
      %v1139 = vpop.f32.mrf.mxu0
      %v1140 = vadd.f32 %v867, %v1139
      %1141 = vmatmul.bf16.gmra.mxu0 %v987
      %v1142 = vpop.f32.mrf.mxu0
      %v1143 = vadd.f32 %v870, %v1142
      %v1144 = vpop.f32.mrf.mxu0
      %v1145 = vadd.f32 %v872, %v1144
      %1146 = vmatmul.bf16.gmra.mxu0 %v990
      %v1147 = vpop.f32.mrf.mxu0
      %v1148 = vadd.f32 %v875, %v1147
      %v1149 = vpop.f32.mrf.mxu0
      %v1150 = vadd.f32 %v877, %v1149
      %1151 = vmatmul.bf16.gmra.mxu0 %v993
      %v1152 = vpop.f32.mrf.mxu0
      %v1153 = vadd.f32 %v880, %v1152
      %v1154 = vpop.f32.mrf.mxu0
      %v1155 = vadd.f32 %v882, %v1154
      %1156 = vmatmul.bf16.gmra.mxu0 %v996
      %v1157 = vpop.f32.mrf.mxu0
      %v1158 = vadd.f32 %v885, %v1157
      %v1159 = vpop.f32.mrf.mxu0
      %v1160 = vadd.f32 %v887, %v1159
      %1161 = vmatmul.bf16.gmra.mxu0 %v999
      %v1162 = vpop.f32.mrf.mxu0
      %v1163 = vadd.f32 %v890, %v1162
      %v1164 = vpop.f32.mrf.mxu0
      %v1165 = vadd.f32 %v892, %v1164
      %1166 = vmatmul.bf16.gmra.mxu0 %v1002
      %v1167 = vpop.f32.mrf.mxu0
      %v1168 = vadd.f32 %v895, %v1167
      %v1169 = vpop.f32.mrf.mxu0
      %v1170 = vadd.f32 %v897, %v1169
      %1171 = vmatmul.bf16.gmra.mxu0 %v1005
      %v1172 = vpop.f32.mrf.mxu0
      %v1173 = vadd.f32 %v900, %v1172
      %v1174 = vpop.f32.mrf.mxu0
      %v1175 = vadd.f32 %v902, %v1174
      %1176 = vmatmul.bf16.gmra.mxu0 %v1008
      %v1177 = vpop.f32.mrf.mxu0
      %v1178 = vadd.f32 %v905, %v1177
      %v1179 = vpop.f32.mrf.mxu0
      %v1180 = vadd.f32 %v907, %v1179
      %1181 = vdwg.mxu0
      %s1182 = scalar_lea.vmem %s265, 16
      %v1183 = vld [vmem:[%s1182] sm:$0xf]
      %v1184 = vld [vmem:[%s1182 + $0x4] sm:$0x7]
      %vm1185 = vcmask 1045504
      %v1186 = vrot.slane %v483, 2
      %v1187 = vrot.slane %v484, 2
      %v1188 = vsel %vm1185, %v1186, %v1187
      %v1189 = vrot.slane %v485, 2
      %v1190 = vsel %vm1185, %v1187, %v1189
      %v1191 = vrot.slane %v486, 2
      %v1192 = vsel %vm1185, %v1189, %v1191
      %v1193 = vrot.slane %v487, 2
      %v1194 = vsel %vm1185, %v1191, %v1193
      %v1195 = vrot.slane %v488, 2
      %v1196 = vsel %vm1185, %v1193, %v1195
      %v1197 = vrot.slane %v489, 2
      %v1198 = vsel %vm1185, %v1195, %v1197
      %v1199 = vrot.slane %v490, 2
      %v1200 = vsel %vm1185, %v1197, %v1199
      %v1201 = vrot.slane %v491, 2
      %v1202 = vsel %vm1185, %v1199, %v1201
      %v1203 = vrot.slane %v492, 2
      %v1204 = vsel %vm1185, %v1201, %v1203
      %v1205 = vrot.slane %v493, 2
      %v1206 = vsel %vm1185, %v1203, %v1205
      %v1207 = vrot.slane %v494, 2
      %v1208 = vsel %vm1185, %v1205, %v1207
      %v1209 = vrot.slane %v495, 2
      %v1210 = vsel %vm1185, %v1207, %v1209
      %v1211 = vrot.slane %v496, 2
      %v1212 = vsel %vm1185, %v1209, %v1211
      %v1213 = vrot.slane %v497, 2
      %v1214 = vsel %vm1185, %v1211, %v1213
      %v1215 = vrot.slane %v498, 2
      %v1216 = vsel %vm1185, %v1213, %v1215
      %v1217 = vrot.slane %v499, 2
      %v1218 = vsel %vm1185, %v1215, %v1217
      %v1219 = vrot.slane %v500, 2
      %v1220 = vsel %vm1185, %v1217, %v1219
      %v1221 = vrot.slane %v501, 2
      %v1222 = vsel %vm1185, %v1219, %v1221
      %v1223 = vrot.slane %v502, 2
      %v1224 = vsel %vm1185, %v1221, %v1223
      %v1225 = vrot.slane %v503, 2
      %v1226 = vsel %vm1185, %v1223, %v1225
      %v1227 = vrot.slane %v504, 2
      %v1228 = vsel %vm1185, %v1225, %v1227
      %v1229 = vrot.slane %v505, 2
      %v1230 = vsel %vm1185, %v1227, %v1229
      %v1231 = vrot.slane %v506, 2
      %v1232 = vsel %vm1185, %v1229, %v1231
      %v1233 = vrot.slane %v507, 2
      %v1234 = vsel %vm1185, %v1231, %v1233
      %v1235 = vrot.slane %v508, 2
      %v1236 = vsel %vm1185, %v1233, %v1235
      %v1237 = vrot.slane %v509, 2
      %v1238 = vsel %vm1185, %v1235, %v1237
      %v1239 = vrot.slane %v510, 2
      %v1240 = vsel %vm1185, %v1237, %v1239
      %v1241 = vrot.slane %v511, 2
      %v1242 = vsel %vm1185, %v1239, %v1241
      %v1243 = vrot.slane %v512, 2
      %v1244 = vsel %vm1185, %v1241, %v1243
      %v1245 = vrot.slane %v557, 2
      %v1246 = vsel %vm1185, %v1243, %v1245
      %v1247 = vrot.slane %v558, 2
      %v1248 = vsel %vm1185, %v1245, %v1247
      %v1249 = vrot.slane %v559, 2
      %v1250 = vsel %vm1185, %v1247, %v1249
      %v1253 = vunpack.c.l.b16 %v1183
      %v1254 = vunpack.c.l.b16 %v1184
      %v1255 = vpack.c.b16 %v1254, %v1253
      %v1257 = vsel %vm636, %v1188, 0
      %v1260 = vsel %vm636, %v1190, 0
      %v1263 = vsel %vm636, %v1192, 0
      %v1266 = vsel %vm636, %v1194, 0
      %v1269 = vsel %vm636, %v1196, 0
      %v1272 = vsel %vm636, %v1198, 0
      %v1275 = vsel %vm636, %v1200, 0
      %v1278 = vsel %vm636, %v1202, 0
      %v1281 = vsel %vm636, %v1204, 0
      %v1284 = vsel %vm636, %v1206, 0
      %v1287 = vsel %vm636, %v1208, 0
      %v1290 = vsel %vm636, %v1210, 0
      %v1293 = vsel %vm636, %v1212, 0
      %v1296 = vsel %vm636, %v1214, 0
      %v1299 = vsel %vm636, %v1216, 0
      %v1302 = vsel %vm636, %v1218, 0
      %v1305 = vsel %vm636, %v1220, 0
      %v1308 = vsel %vm636, %v1222, 0
      %v1311 = vsel %vm636, %v1224, 0
      %v1314 = vsel %vm636, %v1226, 0
      %v1317 = vsel %vm636, %v1228, 0
      %v1320 = vsel %vm636, %v1230, 0
      %v1323 = vsel %vm636, %v1232, 0
      %v1326 = vsel %vm636, %v1234, 0
      %v1329 = vsel %vm636, %v1236, 0
      %v1332 = vsel %vm636, %v1238, 0
      %v1335 = vsel %vm636, %v1240, 0
      %v1338 = vsel %vm636, %v1242, 0
      %v1341 = vsel %vm636, %v1244, 0
      %v1344 = vsel %vm636, %v1246, 0
      %v1347 = vsel %vm636, %v1248, 0
      %v1350 = vsel %vm636, %v1250, 0
      %v1353 = vand.u32 %v1255, %v736
      %1355 = vmatpush.bf16.msra.mxu0 0
      %1356 = vmatpush.bf16.msra.mxu0 0
      %1357 = vmatpush.bf16.msra.mxu0 0
      %1358 = vmatpush.bf16.msra.mxu0 0
      %1359 = vmatpush.bf16.msra.mxu0 0
      %1360 = vmatpush.bf16.msra.mxu0 0
      %1361 = vmatpush.bf16.msra.mxu0 0
      %1362 = vmatpush.bf16.msra.mxu0 %v1353
      %1363 = vmatmul.bf16.gmra.mxu0 %v1257
      %v1364 = vpop.f32.mrf.mxu0
      %v1365 = vadd.f32 0.0, %v1364
      %v1366 = vpop.f32.mrf.mxu0
      %v1367 = vadd.f32 0.0, %v1366
      %1368 = vmatmul.bf16.gmra.mxu0 %v1260
      %v1369 = vpop.f32.mrf.mxu0
      %v1370 = vadd.f32 0.0, %v1369
      %v1371 = vpop.f32.mrf.mxu0
      %v1372 = vadd.f32 0.0, %v1371
      %1373 = vmatmul.bf16.gmra.mxu0 %v1263
      %v1374 = vpop.f32.mrf.mxu0
      %v1375 = vadd.f32 0.0, %v1374
      %v1376 = vpop.f32.mrf.mxu0
      %v1377 = vadd.f32 0.0, %v1376
      %1378 = vmatmul.bf16.gmra.mxu0 %v1266
      %v1379 = vpop.f32.mrf.mxu0
      %v1380 = vadd.f32 0.0, %v1379
      %v1381 = vpop.f32.mrf.mxu0
      %v1382 = vadd.f32 0.0, %v1381
      %1383 = vmatmul.bf16.gmra.mxu0 %v1269
      %v1384 = vpop.f32.mrf.mxu0
      %v1385 = vadd.f32 0.0, %v1384
      %v1386 = vpop.f32.mrf.mxu0
      %v1387 = vadd.f32 0.0, %v1386
      %1388 = vmatmul.bf16.gmra.mxu0 %v1272
      %v1389 = vpop.f32.mrf.mxu0
      %v1390 = vadd.f32 0.0, %v1389
      %v1391 = vpop.f32.mrf.mxu0
      %v1392 = vadd.f32 0.0, %v1391
      %1393 = vmatmul.bf16.gmra.mxu0 %v1275
      %v1394 = vpop.f32.mrf.mxu0
      %v1395 = vadd.f32 0.0, %v1394
      %v1396 = vpop.f32.mrf.mxu0
      %v1397 = vadd.f32 0.0, %v1396
      %1398 = vmatmul.bf16.gmra.mxu0 %v1278
      %v1399 = vpop.f32.mrf.mxu0
      %v1400 = vadd.f32 0.0, %v1399
      %v1401 = vpop.f32.mrf.mxu0
      %v1402 = vadd.f32 0.0, %v1401
      %1403 = vmatmul.bf16.gmra.mxu0 %v1281
      %v1404 = vpop.f32.mrf.mxu0
      %v1405 = vadd.f32 0.0, %v1404
      %v1406 = vpop.f32.mrf.mxu0
      %v1407 = vadd.f32 0.0, %v1406
      %1408 = vmatmul.bf16.gmra.mxu0 %v1284
      %v1409 = vpop.f32.mrf.mxu0
      %v1410 = vadd.f32 0.0, %v1409
      %v1411 = vpop.f32.mrf.mxu0
      %v1412 = vadd.f32 0.0, %v1411
      %1413 = vmatmul.bf16.gmra.mxu0 %v1287
      %v1414 = vpop.f32.mrf.mxu0
      %v1415 = vadd.f32 0.0, %v1414
      %v1416 = vpop.f32.mrf.mxu0
      %v1417 = vadd.f32 0.0, %v1416
      %1418 = vmatmul.bf16.gmra.mxu0 %v1290
      %v1419 = vpop.f32.mrf.mxu0
      %v1420 = vadd.f32 0.0, %v1419
      %v1421 = vpop.f32.mrf.mxu0
      %v1422 = vadd.f32 0.0, %v1421
      %1423 = vmatmul.bf16.gmra.mxu0 %v1293
      %v1424 = vpop.f32.mrf.mxu0
      %v1425 = vadd.f32 0.0, %v1424
      %v1426 = vpop.f32.mrf.mxu0
      %v1427 = vadd.f32 0.0, %v1426
      %1428 = vmatmul.bf16.gmra.mxu0 %v1296
      %v1429 = vpop.f32.mrf.mxu0
      %v1430 = vadd.f32 0.0, %v1429
      %v1431 = vpop.f32.mrf.mxu0
      %v1432 = vadd.f32 0.0, %v1431
      %1433 = vmatmul.bf16.gmra.mxu0 %v1299
      %v1434 = vpop.f32.mrf.mxu0
      %v1435 = vadd.f32 0.0, %v1434
      %v1436 = vpop.f32.mrf.mxu0
      %v1437 = vadd.f32 0.0, %v1436
      %1438 = vmatmul.bf16.gmra.mxu0 %v1302
      %v1439 = vpop.f32.mrf.mxu0
      %v1440 = vadd.f32 0.0, %v1439
      %v1441 = vpop.f32.mrf.mxu0
      %v1442 = vadd.f32 0.0, %v1441
      %1443 = vmatmul.bf16.gmra.mxu0 %v1305
      %v1444 = vpop.f32.mrf.mxu0
      %v1445 = vadd.f32 0.0, %v1444
      %v1446 = vpop.f32.mrf.mxu0
      %v1447 = vadd.f32 0.0, %v1446
      %1448 = vmatmul.bf16.gmra.mxu0 %v1308
      %v1449 = vpop.f32.mrf.mxu0
      %v1450 = vadd.f32 0.0, %v1449
      %v1451 = vpop.f32.mrf.mxu0
      %v1452 = vadd.f32 0.0, %v1451
      %1453 = vmatmul.bf16.gmra.mxu0 %v1311
      %v1454 = vpop.f32.mrf.mxu0
      %v1455 = vadd.f32 0.0, %v1454
      %v1456 = vpop.f32.mrf.mxu0
      %v1457 = vadd.f32 0.0, %v1456
      %1458 = vmatmul.bf16.gmra.mxu0 %v1314
      %v1459 = vpop.f32.mrf.mxu0
      %v1460 = vadd.f32 0.0, %v1459
      %v1461 = vpop.f32.mrf.mxu0
      %v1462 = vadd.f32 0.0, %v1461
      %1463 = vmatmul.bf16.gmra.mxu0 %v1317
      %v1464 = vpop.f32.mrf.mxu0
      %v1465 = vadd.f32 0.0, %v1464
      %v1466 = vpop.f32.mrf.mxu0
      %v1467 = vadd.f32 0.0, %v1466
      %1468 = vmatmul.bf16.gmra.mxu0 %v1320
      %v1469 = vpop.f32.mrf.mxu0
      %v1470 = vadd.f32 0.0, %v1469
      %v1471 = vpop.f32.mrf.mxu0
      %v1472 = vadd.f32 0.0, %v1471
      %1473 = vmatmul.bf16.gmra.mxu0 %v1323
      %v1474 = vpop.f32.mrf.mxu0
      %v1475 = vadd.f32 0.0, %v1474
      %v1476 = vpop.f32.mrf.mxu0
      %v1477 = vadd.f32 0.0, %v1476
      %1478 = vmatmul.bf16.gmra.mxu0 %v1326
      %v1479 = vpop.f32.mrf.mxu0
      %v1480 = vadd.f32 0.0, %v1479
      %v1481 = vpop.f32.mrf.mxu0
      %v1482 = vadd.f32 0.0, %v1481
      %1483 = vmatmul.bf16.gmra.mxu0 %v1329
      %v1484 = vpop.f32.mrf.mxu0
      %v1485 = vadd.f32 0.0, %v1484
      %v1486 = vpop.f32.mrf.mxu0
      %v1487 = vadd.f32 0.0, %v1486
      %1488 = vmatmul.bf16.gmra.mxu0 %v1332
      %v1489 = vpop.f32.mrf.mxu0
      %v1490 = vadd.f32 0.0, %v1489
      %v1491 = vpop.f32.mrf.mxu0
      %v1492 = vadd.f32 0.0, %v1491
      %1493 = vmatmul.bf16.gmra.mxu0 %v1335
      %v1494 = vpop.f32.mrf.mxu0
      %v1495 = vadd.f32 0.0, %v1494
      %v1496 = vpop.f32.mrf.mxu0
      %v1497 = vadd.f32 0.0, %v1496
      %1498 = vmatmul.bf16.gmra.mxu0 %v1338
      %v1499 = vpop.f32.mrf.mxu0
      %v1500 = vadd.f32 0.0, %v1499
      %v1501 = vpop.f32.mrf.mxu0
      %v1502 = vadd.f32 0.0, %v1501
      %1503 = vmatmul.bf16.gmra.mxu0 %v1341
      %v1504 = vpop.f32.mrf.mxu0
      %v1505 = vadd.f32 0.0, %v1504
      %v1506 = vpop.f32.mrf.mxu0
      %v1507 = vadd.f32 0.0, %v1506
      %1508 = vmatmul.bf16.gmra.mxu0 %v1344
      %v1509 = vpop.f32.mrf.mxu0
      %v1510 = vadd.f32 0.0, %v1509
      %v1511 = vpop.f32.mrf.mxu0
      %v1512 = vadd.f32 0.0, %v1511
      %1513 = vmatmul.bf16.gmra.mxu0 %v1347
      %v1514 = vpop.f32.mrf.mxu0
      %v1515 = vadd.f32 0.0, %v1514
      %v1516 = vpop.f32.mrf.mxu0
      %v1517 = vadd.f32 0.0, %v1516
      %1518 = vmatmul.bf16.gmra.mxu0 %v1350
      %v1519 = vpop.f32.mrf.mxu0
      %v1520 = vadd.f32 0.0, %v1519
      %v1521 = vpop.f32.mrf.mxu0
      %v1522 = vadd.f32 0.0, %v1521
      %1523 = vdwg.mxu0
      %v1524 = vadd.f32 %v1023, %v1365
      %v1525 = vadd.f32 %v1025, %v1367
      %v1526 = vadd.f32 %v1028, %v1370
      %v1527 = vadd.f32 %v1030, %v1372
      %v1528 = vadd.f32 %v1033, %v1375
      %v1529 = vadd.f32 %v1035, %v1377
      %v1530 = vadd.f32 %v1038, %v1380
      %v1531 = vadd.f32 %v1040, %v1382
      %v1532 = vadd.f32 %v1043, %v1385
      %v1533 = vadd.f32 %v1045, %v1387
      %v1534 = vadd.f32 %v1048, %v1390
      %v1535 = vadd.f32 %v1050, %v1392
      %v1536 = vadd.f32 %v1053, %v1395
      %v1537 = vadd.f32 %v1055, %v1397
      %v1538 = vadd.f32 %v1058, %v1400
      %v1539 = vadd.f32 %v1060, %v1402
      %v1540 = vadd.f32 %v1063, %v1405
      %v1541 = vadd.f32 %v1065, %v1407
      %v1542 = vadd.f32 %v1068, %v1410
      %v1543 = vadd.f32 %v1070, %v1412
      %v1544 = vadd.f32 %v1073, %v1415
      %v1545 = vadd.f32 %v1075, %v1417
      %v1546 = vadd.f32 %v1078, %v1420
      %v1547 = vadd.f32 %v1080, %v1422
      %v1548 = vadd.f32 %v1083, %v1425
      %v1549 = vadd.f32 %v1085, %v1427
      %v1550 = vadd.f32 %v1088, %v1430
      %v1551 = vadd.f32 %v1090, %v1432
      %v1552 = vadd.f32 %v1093, %v1435
      %v1553 = vadd.f32 %v1095, %v1437
      %v1554 = vadd.f32 %v1098, %v1440
      %v1555 = vadd.f32 %v1100, %v1442
      %v1556 = vadd.f32 %v1103, %v1445
      %v1557 = vadd.f32 %v1105, %v1447
      %v1558 = vadd.f32 %v1108, %v1450
      %v1559 = vadd.f32 %v1110, %v1452
      %v1560 = vadd.f32 %v1113, %v1455
      %v1561 = vadd.f32 %v1115, %v1457
      %v1562 = vadd.f32 %v1118, %v1460
      %v1563 = vadd.f32 %v1120, %v1462
      %v1564 = vadd.f32 %v1123, %v1465
      %v1565 = vadd.f32 %v1125, %v1467
      %v1566 = vadd.f32 %v1128, %v1470
      %v1567 = vadd.f32 %v1130, %v1472
      %v1568 = vadd.f32 %v1133, %v1475
      %v1569 = vadd.f32 %v1135, %v1477
      %v1570 = vadd.f32 %v1138, %v1480
      %v1571 = vadd.f32 %v1140, %v1482
      %v1572 = vadd.f32 %v1143, %v1485
      %v1573 = vadd.f32 %v1145, %v1487
      %v1574 = vadd.f32 %v1148, %v1490
      %v1575 = vadd.f32 %v1150, %v1492
      %v1576 = vadd.f32 %v1153, %v1495
      %v1577 = vadd.f32 %v1155, %v1497
      %v1578 = vadd.f32 %v1158, %v1500
      %v1579 = vadd.f32 %v1160, %v1502
      %v1580 = vadd.f32 %v1163, %v1505
      %v1581 = vadd.f32 %v1165, %v1507
      %v1582 = vadd.f32 %v1168, %v1510
      %v1583 = vadd.f32 %v1170, %v1512
      %v1584 = vadd.f32 %v1173, %v1515
      %v1585 = vadd.f32 %v1175, %v1517
      %v1586 = vadd.f32 %v1178, %v1520
      %v1587 = vadd.f32 %v1180, %v1522
      %v1588 = vpack.c.bf16 %v1524, %v1524
      %v1589 = vpack.c.bf16 %v1525, %v1525
      %v1590 = vpack.c.bf16 %v1526, %v1526
      %v1591 = vpack.c.bf16 %v1527, %v1527
      %v1592 = vpack.c.bf16 %v1528, %v1528
      %v1593 = vpack.c.bf16 %v1529, %v1529
      %v1594 = vpack.c.bf16 %v1530, %v1530
      %v1595 = vpack.c.bf16 %v1531, %v1531
      %v1596 = vpack.c.bf16 %v1532, %v1532
      %v1597 = vpack.c.bf16 %v1533, %v1533
      %v1598 = vpack.c.bf16 %v1534, %v1534
      %v1599 = vpack.c.bf16 %v1535, %v1535
      %v1600 = vpack.c.bf16 %v1536, %v1536
      %v1601 = vpack.c.bf16 %v1537, %v1537
      %v1602 = vpack.c.bf16 %v1538, %v1538
      %v1603 = vpack.c.bf16 %v1539, %v1539
      %v1604 = vpack.c.bf16 %v1540, %v1540
      %v1605 = vpack.c.bf16 %v1541, %v1541
      %v1606 = vpack.c.bf16 %v1542, %v1542
      %v1607 = vpack.c.bf16 %v1543, %v1543
      %v1608 = vpack.c.bf16 %v1544, %v1544
      %v1609 = vpack.c.bf16 %v1545, %v1545
      %v1610 = vpack.c.bf16 %v1546, %v1546
      %v1611 = vpack.c.bf16 %v1547, %v1547
      %v1612 = vpack.c.bf16 %v1548, %v1548
      %v1613 = vpack.c.bf16 %v1549, %v1549
      %v1614 = vpack.c.bf16 %v1550, %v1550
      %v1615 = vpack.c.bf16 %v1551, %v1551
      %v1616 = vpack.c.bf16 %v1552, %v1552
      %v1617 = vpack.c.bf16 %v1553, %v1553
      %v1618 = vpack.c.bf16 %v1554, %v1554
      %v1619 = vpack.c.bf16 %v1555, %v1555
      %v1620 = vpack.c.bf16 %v1556, %v1556
      %v1621 = vpack.c.bf16 %v1557, %v1557
      %v1622 = vpack.c.bf16 %v1558, %v1558
      %v1623 = vpack.c.bf16 %v1559, %v1559
      %v1624 = vpack.c.bf16 %v1560, %v1560
      %v1625 = vpack.c.bf16 %v1561, %v1561
      %v1626 = vpack.c.bf16 %v1562, %v1562
      %v1627 = vpack.c.bf16 %v1563, %v1563
      %v1628 = vpack.c.bf16 %v1564, %v1564
      %v1629 = vpack.c.bf16 %v1565, %v1565
      %v1630 = vpack.c.bf16 %v1566, %v1566
      %v1631 = vpack.c.bf16 %v1567, %v1567
      %v1632 = vpack.c.bf16 %v1568, %v1568
      %v1633 = vpack.c.bf16 %v1569, %v1569
      %v1634 = vpack.c.bf16 %v1570, %v1570
      %v1635 = vpack.c.bf16 %v1571, %v1571
      %v1636 = vpack.c.bf16 %v1572, %v1572
      %v1637 = vpack.c.bf16 %v1573, %v1573
      %v1638 = vpack.c.bf16 %v1574, %v1574
      %v1639 = vpack.c.bf16 %v1575, %v1575
      %v1640 = vpack.c.bf16 %v1576, %v1576
      %v1641 = vpack.c.bf16 %v1577, %v1577
      %v1642 = vpack.c.bf16 %v1578, %v1578
      %v1643 = vpack.c.bf16 %v1579, %v1579
      %v1644 = vpack.c.bf16 %v1580, %v1580
      %v1645 = vpack.c.bf16 %v1581, %v1581
      %v1646 = vpack.c.bf16 %v1582, %v1582
      %v1647 = vpack.c.bf16 %v1583, %v1583
      %v1648 = vpack.c.bf16 %v1584, %v1584
      %v1649 = vpack.c.bf16 %v1585, %v1585
      %v1650 = vpack.c.bf16 %v1586, %v1586
      %v1651 = vpack.c.bf16 %v1587, %v1587
      %1652 = vst [vmem:[%s273] sm:$0xf] %v1588
      %1653 = vst [vmem:[%s273 + $0x4] sm:$0xf] %v1589
      %1654 = vst [vmem:[%s273 + $0x8] sm:$0xf] %v1590
      %1655 = vst [vmem:[%s273 + $0xc] sm:$0xf] %v1591
      %1656 = vst [vmem:[%s273 + $0x10] sm:$0xf] %v1592
      %1657 = vst [vmem:[%s273 + $0x14] sm:$0xf] %v1593
      %1658 = vst [vmem:[%s273 + $0x18] sm:$0xf] %v1594
      %1659 = vst [vmem:[%s273 + $0x1c] sm:$0xf] %v1595
      %1660 = vst [vmem:[%s273 + $0x20] sm:$0xf] %v1596
      %1661 = vst [vmem:[%s273 + $0x24] sm:$0xf] %v1597
      %1662 = vst [vmem:[%s273 + $0x28] sm:$0xf] %v1598
      %1663 = vst [vmem:[%s273 + $0x2c] sm:$0xf] %v1599
      %1664 = vst [vmem:[%s273 + $0x30] sm:$0xf] %v1600
      %1665 = vst [vmem:[%s273 + $0x34] sm:$0xf] %v1601
      %1666 = vst [vmem:[%s273 + $0x38] sm:$0xf] %v1602
      %1667 = vst [vmem:[%s273 + $0x3c] sm:$0xf] %v1603
      %1668 = vst [vmem:[%s273 + $0x40] sm:$0xf] %v1604
      %1669 = vst [vmem:[%s273 + $0x44] sm:$0xf] %v1605
      %1670 = vst [vmem:[%s273 + $0x48] sm:$0xf] %v1606
      %1671 = vst [vmem:[%s273 + $0x4c] sm:$0xf] %v1607
      %1672 = vst [vmem:[%s273 + $0x50] sm:$0xf] %v1608
      %1673 = vst [vmem:[%s273 + $0x54] sm:$0xf] %v1609
      %1674 = vst [vmem:[%s273 + $0x58] sm:$0xf] %v1610
      %1675 = vst [vmem:[%s273 + $0x5c] sm:$0xf] %v1611
      %1676 = vst [vmem:[%s273 + $0x60] sm:$0xf] %v1612
      %1677 = vst [vmem:[%s273 + $0x64] sm:$0xf] %v1613
      %1678 = vst [vmem:[%s273 + $0x68] sm:$0xf] %v1614
      %1679 = vst [vmem:[%s273 + $0x6c] sm:$0xf] %v1615
      %1680 = vst [vmem:[%s273 + $0x70] sm:$0xf] %v1616
      %1681 = vst [vmem:[%s273 + $0x74] sm:$0xf] %v1617
      %1682 = vst [vmem:[%s273 + $0x78] sm:$0xf] %v1618
      %1683 = vst [vmem:[%s273 + $0x7c] sm:$0xf] %v1619
      %1684 = vst [vmem:[%s273 + $0x80] sm:$0xf] %v1620
      %1685 = vst [vmem:[%s273 + $0x84] sm:$0xf] %v1621
      %1686 = vst [vmem:[%s273 + $0x88] sm:$0xf] %v1622
      %1687 = vst [vmem:[%s273 + $0x8c] sm:$0xf] %v1623
      %1688 = vst [vmem:[%s273 + $0x90] sm:$0xf] %v1624
      %1689 = vst [vmem:[%s273 + $0x94] sm:$0xf] %v1625
      %1690 = vst [vmem:[%s273 + $0x98] sm:$0xf] %v1626
      %1691 = vst [vmem:[%s273 + $0x9c] sm:$0xf] %v1627
      %1692 = vst [vmem:[%s273 + $0xa0] sm:$0xf] %v1628
      %1693 = vst [vmem:[%s273 + $0xa4] sm:$0xf] %v1629
      %1694 = vst [vmem:[%s273 + $0xa8] sm:$0xf] %v1630
      %1695 = vst [vmem:[%s273 + $0xac] sm:$0xf] %v1631
      %1696 = vst [vmem:[%s273 + $0xb0] sm:$0xf] %v1632
      %1697 = vst [vmem:[%s273 + $0xb4] sm:$0xf] %v1633
      %1698 = vst [vmem:[%s273 + $0xb8] sm:$0xf] %v1634
      %1699 = vst [vmem:[%s273 + $0xbc] sm:$0xf] %v1635
      %1700 = vst [vmem:[%s273 + $0xc0] sm:$0xf] %v1636
      %1701 = vst [vmem:[%s273 + $0xc4] sm:$0xf] %v1637
      %1702 = vst [vmem:[%s273 + $0xc8] sm:$0xf] %v1638
      %1703 = vst [vmem:[%s273 + $0xcc] sm:$0xf] %v1639
      %1704 = vst [vmem:[%s273 + $0xd0] sm:$0xf] %v1640
      %1705 = vst [vmem:[%s273 + $0xd4] sm:$0xf] %v1641
      %1706 = vst [vmem:[%s273 + $0xd8] sm:$0xf] %v1642
      %1707 = vst [vmem:[%s273 + $0xdc] sm:$0xf] %v1643
      %1708 = vst [vmem:[%s273 + $0xe0] sm:$0xf] %v1644
      %1709 = vst [vmem:[%s273 + $0xe4] sm:$0xf] %v1645
      %1710 = vst [vmem:[%s273 + $0xe8] sm:$0xf] %v1646
      %1711 = vst [vmem:[%s273 + $0xec] sm:$0xf] %v1647
      %1712 = vst [vmem:[%s273 + $0xf0] sm:$0xf] %v1648
      %1713 = vst [vmem:[%s273 + $0xf4] sm:$0xf] %v1649
      %1714 = vst [vmem:[%s273 + $0xf8] sm:$0xf] %v1650
      %1715 = vst [vmem:[%s273 + $0xfc] sm:$0xf] %v1651
      %v1716 = vunpack.c.l.bf16 %v481
      %v1717 = vunpack.c.h.bf16 %v481
      %v1718 = vunpack.c.l.bf16 %v482
      %v1719 = vunpack.c.h.bf16 %v482
      %v1720 = vunpack.c.l.bf16 %v483
      %v1721 = vunpack.c.h.bf16 %v483
      %v1722 = vunpack.c.l.bf16 %v484
      %v1723 = vunpack.c.h.bf16 %v484
      %v1724 = vunpack.c.l.bf16 %v485
      %v1725 = vunpack.c.h.bf16 %v485
      %v1726 = vunpack.c.l.bf16 %v486
      %v1727 = vunpack.c.h.bf16 %v486
      %v1728 = vunpack.c.l.bf16 %v487
      %v1729 = vunpack.c.h.bf16 %v487
      %v1730 = vunpack.c.l.bf16 %v488
      %v1731 = vunpack.c.h.bf16 %v488
      %v1732 = vunpack.c.l.bf16 %v489
      %v1733 = vunpack.c.h.bf16 %v489
      %v1734 = vunpack.c.l.bf16 %v490
      %v1735 = vunpack.c.h.bf16 %v490
      %v1736 = vunpack.c.l.bf16 %v491
      %v1737 = vunpack.c.h.bf16 %v491
      %v1738 = vunpack.c.l.bf16 %v492
      %v1739 = vunpack.c.h.bf16 %v492
      %v1740 = vunpack.c.l.bf16 %v493
      %v1741 = vunpack.c.h.bf16 %v493
      %v1742 = vunpack.c.l.bf16 %v494
      %v1743 = vunpack.c.h.bf16 %v494
      %v1744 = vunpack.c.l.bf16 %v495
      %v1745 = vunpack.c.h.bf16 %v495
      %v1746 = vunpack.c.l.bf16 %v496
      %v1747 = vunpack.c.h.bf16 %v496
      %v1748 = vunpack.c.l.bf16 %v497
      %v1749 = vunpack.c.h.bf16 %v497
      %v1750 = vunpack.c.l.bf16 %v498
      %v1751 = vunpack.c.h.bf16 %v498
      %v1752 = vunpack.c.l.bf16 %v499
      %v1753 = vunpack.c.h.bf16 %v499
      %v1754 = vunpack.c.l.bf16 %v500
      %v1755 = vunpack.c.h.bf16 %v500
      %v1756 = vunpack.c.l.bf16 %v501
      %v1757 = vunpack.c.h.bf16 %v501
      %v1758 = vunpack.c.l.bf16 %v502
      %v1759 = vunpack.c.h.bf16 %v502
      %v1760 = vunpack.c.l.bf16 %v503
      %v1761 = vunpack.c.h.bf16 %v503
      %v1762 = vunpack.c.l.bf16 %v504
      %v1763 = vunpack.c.h.bf16 %v504
      %v1764 = vunpack.c.l.bf16 %v505
      %v1765 = vunpack.c.h.bf16 %v505
      %v1766 = vunpack.c.l.bf16 %v506
      %v1767 = vunpack.c.h.bf16 %v506
      %v1768 = vunpack.c.l.bf16 %v507
      %v1769 = vunpack.c.h.bf16 %v507
      %v1770 = vunpack.c.l.bf16 %v508
      %v1771 = vunpack.c.h.bf16 %v508
      %v1772 = vunpack.c.l.bf16 %v509
      %v1773 = vunpack.c.h.bf16 %v509
      %v1774 = vunpack.c.l.bf16 %v510
      %v1775 = vunpack.c.h.bf16 %v510
      %v1776 = vunpack.c.l.bf16 %v511
      %v1777 = vunpack.c.h.bf16 %v511
      %v1778 = vunpack.c.l.bf16 %v512
      %v1779 = vunpack.c.h.bf16 %v512
      %1781 = vset.pattern.permute.xlu0 12
      %1782 = vperm.xlu0 %1781, %v1716
      %v1783 = vpop.permute.xlu0 %1782
      %1786 = vset.pattern.permute.xlu0 12
      %1787 = vperm.xlu0 %1786, %v1717
      %v1788 = vpop.permute.xlu0 %1787
      %1791 = vset.pattern.permute.xlu0 12
      %1792 = vperm.xlu0 %1791, %v1718
      %v1793 = vpop.permute.xlu0 %1792
      %1796 = vset.pattern.permute.xlu0 12
      %1797 = vperm.xlu0 %1796, %v1719
      %v1798 = vpop.permute.xlu0 %1797
      %1801 = vset.pattern.permute.xlu0 12
      %1802 = vperm.xlu0 %1801, %v1720
      %v1803 = vpop.permute.xlu0 %1802
      %1806 = vset.pattern.permute.xlu0 12
      %1807 = vperm.xlu0 %1806, %v1721
      %v1808 = vpop.permute.xlu0 %1807
      %1811 = vset.pattern.permute.xlu0 12
      %1812 = vperm.xlu0 %1811, %v1722
      %v1813 = vpop.permute.xlu0 %1812
      %1816 = vset.pattern.permute.xlu0 12
      %1817 = vperm.xlu0 %1816, %v1723
      %v1818 = vpop.permute.xlu0 %1817
      %1821 = vset.pattern.permute.xlu0 12
      %1822 = vperm.xlu0 %1821, %v1724
      %v1823 = vpop.permute.xlu0 %1822
      %1826 = vset.pattern.permute.xlu0 12
      %1827 = vperm.xlu0 %1826, %v1725
      %v1828 = vpop.permute.xlu0 %1827
      %1831 = vset.pattern.permute.xlu0 12
      %1832 = vperm.xlu0 %1831, %v1726
      %v1833 = vpop.permute.xlu0 %1832
      %1836 = vset.pattern.permute.xlu0 12
      %1837 = vperm.xlu0 %1836, %v1727
      %v1838 = vpop.permute.xlu0 %1837
      %1841 = vset.pattern.permute.xlu0 12
      %1842 = vperm.xlu0 %1841, %v1728
      %v1843 = vpop.permute.xlu0 %1842
      %1846 = vset.pattern.permute.xlu0 12
      %1847 = vperm.xlu0 %1846, %v1729
      %v1848 = vpop.permute.xlu0 %1847
      %1851 = vset.pattern.permute.xlu0 12
      %1852 = vperm.xlu0 %1851, %v1730
      %v1853 = vpop.permute.xlu0 %1852
      %1856 = vset.pattern.permute.xlu0 12
      %1857 = vperm.xlu0 %1856, %v1731
      %v1858 = vpop.permute.xlu0 %1857
      %1861 = vset.pattern.permute.xlu0 12
      %1862 = vperm.xlu0 %1861, %v1732
      %v1863 = vpop.permute.xlu0 %1862
      %1866 = vset.pattern.permute.xlu0 12
      %1867 = vperm.xlu0 %1866, %v1733
      %v1868 = vpop.permute.xlu0 %1867
      %1871 = vset.pattern.permute.xlu0 12
      %1872 = vperm.xlu0 %1871, %v1734
      %v1873 = vpop.permute.xlu0 %1872
      %1876 = vset.pattern.permute.xlu0 12
      %1877 = vperm.xlu0 %1876, %v1735
      %v1878 = vpop.permute.xlu0 %1877
      %1881 = vset.pattern.permute.xlu0 12
      %1882 = vperm.xlu0 %1881, %v1736
      %v1883 = vpop.permute.xlu0 %1882
      %1886 = vset.pattern.permute.xlu0 12
      %1887 = vperm.xlu0 %1886, %v1737
      %v1888 = vpop.permute.xlu0 %1887
      %1891 = vset.pattern.permute.xlu0 12
      %1892 = vperm.xlu0 %1891, %v1738
      %v1893 = vpop.permute.xlu0 %1892
      %1896 = vset.pattern.permute.xlu0 12
      %1897 = vperm.xlu0 %1896, %v1739
      %v1898 = vpop.permute.xlu0 %1897
      %1901 = vset.pattern.permute.xlu0 12
      %1902 = vperm.xlu0 %1901, %v1740
      %v1903 = vpop.permute.xlu0 %1902
      %1906 = vset.pattern.permute.xlu0 12
      %1907 = vperm.xlu0 %1906, %v1741
      %v1908 = vpop.permute.xlu0 %1907
      %1911 = vset.pattern.permute.xlu0 12
      %1912 = vperm.xlu0 %1911, %v1742
      %v1913 = vpop.permute.xlu0 %1912
      %1916 = vset.pattern.permute.xlu0 12
      %1917 = vperm.xlu0 %1916, %v1743
      %v1918 = vpop.permute.xlu0 %1917
      %1921 = vset.pattern.permute.xlu0 12
      %1922 = vperm.xlu0 %1921, %v1744
      %v1923 = vpop.permute.xlu0 %1922
      %1926 = vset.pattern.permute.xlu0 12
      %1927 = vperm.xlu0 %1926, %v1745
      %v1928 = vpop.permute.xlu0 %1927
      %1931 = vset.pattern.permute.xlu0 12
      %1932 = vperm.xlu0 %1931, %v1746
      %v1933 = vpop.permute.xlu0 %1932
      %1936 = vset.pattern.permute.xlu0 12
      %1937 = vperm.xlu0 %1936, %v1747
      %v1938 = vpop.permute.xlu0 %1937
      %1941 = vset.pattern.permute.xlu0 12
      %1942 = vperm.xlu0 %1941, %v1748
      %v1943 = vpop.permute.xlu0 %1942
      %1946 = vset.pattern.permute.xlu0 12
      %1947 = vperm.xlu0 %1946, %v1749
      %v1948 = vpop.permute.xlu0 %1947
      %1951 = vset.pattern.permute.xlu0 12
      %1952 = vperm.xlu0 %1951, %v1750
      %v1953 = vpop.permute.xlu0 %1952
      %1956 = vset.pattern.permute.xlu0 12
      %1957 = vperm.xlu0 %1956, %v1751
      %v1958 = vpop.permute.xlu0 %1957
      %1961 = vset.pattern.permute.xlu0 12
      %1962 = vperm.xlu0 %1961, %v1752
      %v1963 = vpop.permute.xlu0 %1962
      %1966 = vset.pattern.permute.xlu0 12
      %1967 = vperm.xlu0 %1966, %v1753
      %v1968 = vpop.permute.xlu0 %1967
      %1971 = vset.pattern.permute.xlu0 12
      %1972 = vperm.xlu0 %1971, %v1754
      %v1973 = vpop.permute.xlu0 %1972
      %1976 = vset.pattern.permute.xlu0 12
      %1977 = vperm.xlu0 %1976, %v1755
      %v1978 = vpop.permute.xlu0 %1977
      %1981 = vset.pattern.permute.xlu0 12
      %1982 = vperm.xlu0 %1981, %v1756
      %v1983 = vpop.permute.xlu0 %1982
      %1986 = vset.pattern.permute.xlu0 12
      %1987 = vperm.xlu0 %1986, %v1757
      %v1988 = vpop.permute.xlu0 %1987
      %1991 = vset.pattern.permute.xlu0 12
      %1992 = vperm.xlu0 %1991, %v1758
      %v1993 = vpop.permute.xlu0 %1992
      %1996 = vset.pattern.permute.xlu0 12
      %1997 = vperm.xlu0 %1996, %v1759
      %v1998 = vpop.permute.xlu0 %1997
      %2001 = vset.pattern.permute.xlu0 12
      %2002 = vperm.xlu0 %2001, %v1760
      %v2003 = vpop.permute.xlu0 %2002
      %2006 = vset.pattern.permute.xlu0 12
      %2007 = vperm.xlu0 %2006, %v1761
      %v2008 = vpop.permute.xlu0 %2007
      %2011 = vset.pattern.permute.xlu0 12
      %2012 = vperm.xlu0 %2011, %v1762
      %v2013 = vpop.permute.xlu0 %2012
      %2016 = vset.pattern.permute.xlu0 12
      %2017 = vperm.xlu0 %2016, %v1763
      %v2018 = vpop.permute.xlu0 %2017
      %2021 = vset.pattern.permute.xlu0 12
      %2022 = vperm.xlu0 %2021, %v1764
      %v2023 = vpop.permute.xlu0 %2022
      %2026 = vset.pattern.permute.xlu0 12
      %2027 = vperm.xlu0 %2026, %v1765
      %v2028 = vpop.permute.xlu0 %2027
      %2031 = vset.pattern.permute.xlu0 12
      %2032 = vperm.xlu0 %2031, %v1766
      %v2033 = vpop.permute.xlu0 %2032
      %2036 = vset.pattern.permute.xlu0 12
      %2037 = vperm.xlu0 %2036, %v1767
      %v2038 = vpop.permute.xlu0 %2037
      %2041 = vset.pattern.permute.xlu0 12
      %2042 = vperm.xlu0 %2041, %v1768
      %v2043 = vpop.permute.xlu0 %2042
      %2046 = vset.pattern.permute.xlu0 12
      %2047 = vperm.xlu0 %2046, %v1769
      %v2048 = vpop.permute.xlu0 %2047
      %2051 = vset.pattern.permute.xlu0 12
      %2052 = vperm.xlu0 %2051, %v1770
      %v2053 = vpop.permute.xlu0 %2052
      %2056 = vset.pattern.permute.xlu0 12
      %2057 = vperm.xlu0 %2056, %v1771
      %v2058 = vpop.permute.xlu0 %2057
      %2061 = vset.pattern.permute.xlu0 12
      %2062 = vperm.xlu0 %2061, %v1772
      %v2063 = vpop.permute.xlu0 %2062
      %2066 = vset.pattern.permute.xlu0 12
      %2067 = vperm.xlu0 %2066, %v1773
      %v2068 = vpop.permute.xlu0 %2067
      %2071 = vset.pattern.permute.xlu0 12
      %2072 = vperm.xlu0 %2071, %v1774
      %v2073 = vpop.permute.xlu0 %2072
      %2076 = vset.pattern.permute.xlu0 12
      %2077 = vperm.xlu0 %2076, %v1775
      %v2078 = vpop.permute.xlu0 %2077
      %2081 = vset.pattern.permute.xlu0 12
      %2082 = vperm.xlu0 %2081, %v1776
      %v2083 = vpop.permute.xlu0 %2082
      %2086 = vset.pattern.permute.xlu0 12
      %2087 = vperm.xlu0 %2086, %v1777
      %v2088 = vpop.permute.xlu0 %2087
      %2091 = vset.pattern.permute.xlu0 12
      %2092 = vperm.xlu0 %2091, %v1778
      %v2093 = vpop.permute.xlu0 %2092
      %2096 = vset.pattern.permute.xlu0 12
      %2097 = vperm.xlu0 %2096, %v1779
      %v2098 = vpop.permute.xlu0 %2097
      %v2100 = vmul.f32 %v1524, %v1783
      %v2101 = vmul.f32 %v1525, %v1788
      %v2102 = vmul.f32 %v1526, %v1793
      %v2103 = vmul.f32 %v1527, %v1798
      %v2104 = vmul.f32 %v1528, %v1803
      %v2105 = vmul.f32 %v1529, %v1808
      %v2106 = vmul.f32 %v1530, %v1813
      %v2107 = vmul.f32 %v1531, %v1818
      %v2108 = vmul.f32 %v1532, %v1823
      %v2109 = vmul.f32 %v1533, %v1828
      %v2110 = vmul.f32 %v1534, %v1833
      %v2111 = vmul.f32 %v1535, %v1838
      %v2112 = vmul.f32 %v1536, %v1843
      %v2113 = vmul.f32 %v1537, %v1848
      %v2114 = vmul.f32 %v1538, %v1853
      %v2115 = vmul.f32 %v1539, %v1858
      %v2116 = vmul.f32 %v1540, %v1863
      %v2117 = vmul.f32 %v1541, %v1868
      %v2118 = vmul.f32 %v1542, %v1873
      %v2119 = vmul.f32 %v1543, %v1878
      %v2120 = vmul.f32 %v1544, %v1883
      %v2121 = vmul.f32 %v1545, %v1888
      %v2122 = vmul.f32 %v1546, %v1893
      %v2123 = vmul.f32 %v1547, %v1898
      %v2124 = vmul.f32 %v1548, %v1903
      %v2125 = vmul.f32 %v1549, %v1908
      %v2126 = vmul.f32 %v1550, %v1913
      %v2127 = vmul.f32 %v1551, %v1918
      %v2128 = vmul.f32 %v1552, %v1923
      %v2129 = vmul.f32 %v1553, %v1928
      %v2130 = vmul.f32 %v1554, %v1933
      %v2131 = vmul.f32 %v1555, %v1938
      %v2132 = vmul.f32 %v1556, %v1943
      %v2133 = vmul.f32 %v1557, %v1948
      %v2134 = vmul.f32 %v1558, %v1953
      %v2135 = vmul.f32 %v1559, %v1958
      %v2136 = vmul.f32 %v1560, %v1963
      %v2137 = vmul.f32 %v1561, %v1968
      %v2138 = vmul.f32 %v1562, %v1973
      %v2139 = vmul.f32 %v1563, %v1978
      %v2140 = vmul.f32 %v1564, %v1983
      %v2141 = vmul.f32 %v1565, %v1988
      %v2142 = vmul.f32 %v1566, %v1993
      %v2143 = vmul.f32 %v1567, %v1998
      %v2144 = vmul.f32 %v1568, %v2003
      %v2145 = vmul.f32 %v1569, %v2008
      %v2146 = vmul.f32 %v1570, %v2013
      %v2147 = vmul.f32 %v1571, %v2018
      %v2148 = vmul.f32 %v1572, %v2023
      %v2149 = vmul.f32 %v1573, %v2028
      %v2150 = vmul.f32 %v1574, %v2033
      %v2151 = vmul.f32 %v1575, %v2038
      %v2152 = vmul.f32 %v1576, %v2043
      %v2153 = vmul.f32 %v1577, %v2048
      %v2154 = vmul.f32 %v1578, %v2053
      %v2155 = vmul.f32 %v1579, %v2058
      %v2156 = vmul.f32 %v1580, %v2063
      %v2157 = vmul.f32 %v1581, %v2068
      %v2158 = vmul.f32 %v1582, %v2073
      %v2159 = vmul.f32 %v1583, %v2078
      %v2160 = vmul.f32 %v1584, %v2083
      %v2161 = vmul.f32 %v1585, %v2088
      %v2162 = vmul.f32 %v1586, %v2093
      %v2163 = vmul.f32 %v1587, %v2098
      %v2164 = vadd.f32 %v2100, %v2101
      %v2165 = vadd.f32 %v2164, %v2102
      %v2166 = vadd.f32 %v2165, %v2103
      %v2167 = vadd.f32 %v2166, %v2104
      %v2168 = vadd.f32 %v2167, %v2105
      %v2169 = vadd.f32 %v2168, %v2106
      %v2170 = vadd.f32 %v2169, %v2107
      %v2171 = vadd.f32 %v2170, %v2108
      %v2172 = vadd.f32 %v2171, %v2109
      %v2173 = vadd.f32 %v2172, %v2110
      %v2174 = vadd.f32 %v2173, %v2111
      %v2175 = vadd.f32 %v2174, %v2112
      %v2176 = vadd.f32 %v2175, %v2113
      %v2177 = vadd.f32 %v2176, %v2114
      %v2178 = vadd.f32 %v2177, %v2115
      %v2179 = vadd.f32 %v2178, %v2116
      %v2180 = vadd.f32 %v2179, %v2117
      %v2181 = vadd.f32 %v2180, %v2118
      %v2182 = vadd.f32 %v2181, %v2119
      %v2183 = vadd.f32 %v2182, %v2120
      %v2184 = vadd.f32 %v2183, %v2121
      %v2185 = vadd.f32 %v2184, %v2122
      %v2186 = vadd.f32 %v2185, %v2123
      %v2187 = vadd.f32 %v2186, %v2124
      %v2188 = vadd.f32 %v2187, %v2125
      %v2189 = vadd.f32 %v2188, %v2126
      %v2190 = vadd.f32 %v2189, %v2127
      %v2191 = vadd.f32 %v2190, %v2128
      %v2192 = vadd.f32 %v2191, %v2129
      %v2193 = vadd.f32 %v2192, %v2130
      %v2194 = vadd.f32 %v2193, %v2131
      %v2195 = vadd.f32 %v2194, %v2132
      %v2196 = vadd.f32 %v2195, %v2133
      %v2197 = vadd.f32 %v2196, %v2134
      %v2198 = vadd.f32 %v2197, %v2135
      %v2199 = vadd.f32 %v2198, %v2136
      %v2200 = vadd.f32 %v2199, %v2137
      %v2201 = vadd.f32 %v2200, %v2138
      %v2202 = vadd.f32 %v2201, %v2139
      %v2203 = vadd.f32 %v2202, %v2140
      %v2204 = vadd.f32 %v2203, %v2141
      %v2205 = vadd.f32 %v2204, %v2142
      %v2206 = vadd.f32 %v2205, %v2143
      %v2207 = vadd.f32 %v2206, %v2144
      %v2208 = vadd.f32 %v2207, %v2145
      %v2209 = vadd.f32 %v2208, %v2146
      %v2210 = vadd.f32 %v2209, %v2147
      %v2211 = vadd.f32 %v2210, %v2148
      %v2212 = vadd.f32 %v2211, %v2149
      %v2213 = vadd.f32 %v2212, %v2150
      %v2214 = vadd.f32 %v2213, %v2151
      %v2215 = vadd.f32 %v2214, %v2152
      %v2216 = vadd.f32 %v2215, %v2153
      %v2217 = vadd.f32 %v2216, %v2154
      %v2218 = vadd.f32 %v2217, %v2155
      %v2219 = vadd.f32 %v2218, %v2156
      %v2220 = vadd.f32 %v2219, %v2157
      %v2221 = vadd.f32 %v2220, %v2158
      %v2222 = vadd.f32 %v2221, %v2159
      %v2223 = vadd.f32 %v2222, %v2160
      %v2224 = vadd.f32 %v2223, %v2161
      %v2225 = vadd.f32 %v2224, %v2162
      %v2226 = vadd.f32 %v2225, %v2163
      %v2227 = vrot.slane %v2226, 4
      %v2228 = vadd.f32 %v2226, %v2227
      %v2229 = vrot.slane %v2228, 2
      %v2230 = vadd.f32 %v2228, %v2229
      %v2231 = vrot.slane %v2230, 1
      %v2232 = vadd.f32 %v2230, %v2231
      %2233 = vst [vmem:[%s281] sm:$0x1] %v2232
      %v2234 = vmul.f32 %v2100, %v2100
      %v2235 = vmul.f32 %v2101, %v2101
      %v2236 = vmul.f32 %v2102, %v2102
      %v2237 = vmul.f32 %v2103, %v2103
      %v2238 = vmul.f32 %v2104, %v2104
      %v2239 = vmul.f32 %v2105, %v2105
      %v2240 = vmul.f32 %v2106, %v2106
      %v2241 = vmul.f32 %v2107, %v2107
      %v2242 = vmul.f32 %v2108, %v2108
      %v2243 = vmul.f32 %v2109, %v2109
      %v2244 = vmul.f32 %v2110, %v2110
      %v2245 = vmul.f32 %v2111, %v2111
      %v2246 = vmul.f32 %v2112, %v2112
      %v2247 = vmul.f32 %v2113, %v2113
      %v2248 = vmul.f32 %v2114, %v2114
      %v2249 = vmul.f32 %v2115, %v2115
      %v2250 = vmul.f32 %v2116, %v2116
      %v2251 = vmul.f32 %v2117, %v2117
      %v2252 = vmul.f32 %v2118, %v2118
      %v2253 = vmul.f32 %v2119, %v2119
      %v2254 = vmul.f32 %v2120, %v2120
      %v2255 = vmul.f32 %v2121, %v2121
      %v2256 = vmul.f32 %v2122, %v2122
      %v2257 = vmul.f32 %v2123, %v2123
      %v2258 = vmul.f32 %v2124, %v2124
      %v2259 = vmul.f32 %v2125, %v2125
      %v2260 = vmul.f32 %v2126, %v2126
      %v2261 = vmul.f32 %v2127, %v2127
      %v2262 = vmul.f32 %v2128, %v2128
      %v2263 = vmul.f32 %v2129, %v2129
      %v2264 = vmul.f32 %v2130, %v2130
      %v2265 = vmul.f32 %v2131, %v2131
      %v2266 = vmul.f32 %v2132, %v2132
      %v2267 = vmul.f32 %v2133, %v2133
      %v2268 = vmul.f32 %v2134, %v2134
      %v2269 = vmul.f32 %v2135, %v2135
      %v2270 = vmul.f32 %v2136, %v2136
      %v2271 = vmul.f32 %v2137, %v2137
      %v2272 = vmul.f32 %v2138, %v2138
      %v2273 = vmul.f32 %v2139, %v2139
      %v2274 = vmul.f32 %v2140, %v2140
      %v2275 = vmul.f32 %v2141, %v2141
      %v2276 = vmul.f32 %v2142, %v2142
      %v2277 = vmul.f32 %v2143, %v2143
      %v2278 = vmul.f32 %v2144, %v2144
      %v2279 = vmul.f32 %v2145, %v2145
      %v2280 = vmul.f32 %v2146, %v2146
      %v2281 = vmul.f32 %v2147, %v2147
      %v2282 = vmul.f32 %v2148, %v2148
      %v2283 = vmul.f32 %v2149, %v2149
      %v2284 = vmul.f32 %v2150, %v2150
      %v2285 = vmul.f32 %v2151, %v2151
      %v2286 = vmul.f32 %v2152, %v2152
      %v2287 = vmul.f32 %v2153, %v2153
      %v2288 = vmul.f32 %v2154, %v2154
      %v2289 = vmul.f32 %v2155, %v2155
      %v2290 = vmul.f32 %v2156, %v2156
      %v2291 = vmul.f32 %v2157, %v2157
      %v2292 = vmul.f32 %v2158, %v2158
      %v2293 = vmul.f32 %v2159, %v2159
      %v2294 = vmul.f32 %v2160, %v2160
      %v2295 = vmul.f32 %v2161, %v2161
      %v2296 = vmul.f32 %v2162, %v2162
      %v2297 = vmul.f32 %v2163, %v2163
      %v2298 = vadd.f32 %v2234, %v2235
      %v2299 = vadd.f32 %v2298, %v2236
      %v2300 = vadd.f32 %v2299, %v2237
      %v2301 = vadd.f32 %v2300, %v2238
      %v2302 = vadd.f32 %v2301, %v2239
      %v2303 = vadd.f32 %v2302, %v2240
      %v2304 = vadd.f32 %v2303, %v2241
      %v2305 = vadd.f32 %v2304, %v2242
      %v2306 = vadd.f32 %v2305, %v2243
      %v2307 = vadd.f32 %v2306, %v2244
      %v2308 = vadd.f32 %v2307, %v2245
      %v2309 = vadd.f32 %v2308, %v2246
      %v2310 = vadd.f32 %v2309, %v2247
      %v2311 = vadd.f32 %v2310, %v2248
      %v2312 = vadd.f32 %v2311, %v2249
      %v2313 = vadd.f32 %v2312, %v2250
      %v2314 = vadd.f32 %v2313, %v2251
      %v2315 = vadd.f32 %v2314, %v2252
      %v2316 = vadd.f32 %v2315, %v2253
      %v2317 = vadd.f32 %v2316, %v2254
      %v2318 = vadd.f32 %v2317, %v2255
      %v2319 = vadd.f32 %v2318, %v2256
      %v2320 = vadd.f32 %v2319, %v2257
      %v2321 = vadd.f32 %v2320, %v2258
      %v2322 = vadd.f32 %v2321, %v2259
      %v2323 = vadd.f32 %v2322, %v2260
      %v2324 = vadd.f32 %v2323, %v2261
      %v2325 = vadd.f32 %v2324, %v2262
      %v2326 = vadd.f32 %v2325, %v2263
      %v2327 = vadd.f32 %v2326, %v2264
      %v2328 = vadd.f32 %v2327, %v2265
      %v2329 = vadd.f32 %v2328, %v2266
      %v2330 = vadd.f32 %v2329, %v2267
      %v2331 = vadd.f32 %v2330, %v2268
      %v2332 = vadd.f32 %v2331, %v2269
      %v2333 = vadd.f32 %v2332, %v2270
      %v2334 = vadd.f32 %v2333, %v2271
      %v2335 = vadd.f32 %v2334, %v2272
      %v2336 = vadd.f32 %v2335, %v2273
      %v2337 = vadd.f32 %v2336, %v2274
      %v2338 = vadd.f32 %v2337, %v2275
      %v2339 = vadd.f32 %v2338, %v2276
      %v2340 = vadd.f32 %v2339, %v2277
      %v2341 = vadd.f32 %v2340, %v2278
      %v2342 = vadd.f32 %v2341, %v2279
      %v2343 = vadd.f32 %v2342, %v2280
      %v2344 = vadd.f32 %v2343, %v2281
      %v2345 = vadd.f32 %v2344, %v2282
      %v2346 = vadd.f32 %v2345, %v2283
      %v2347 = vadd.f32 %v2346, %v2284
      %v2348 = vadd.f32 %v2347, %v2285
      %v2349 = vadd.f32 %v2348, %v2286
      %v2350 = vadd.f32 %v2349, %v2287
      %v2351 = vadd.f32 %v2350, %v2288
      %v2352 = vadd.f32 %v2351, %v2289
      %v2353 = vadd.f32 %v2352, %v2290
      %v2354 = vadd.f32 %v2353, %v2291
      %v2355 = vadd.f32 %v2354, %v2292
      %v2356 = vadd.f32 %v2355, %v2293
      %v2357 = vadd.f32 %v2356, %v2294
      %v2358 = vadd.f32 %v2357, %v2295
      %v2359 = vadd.f32 %v2358, %v2296
      %v2360 = vadd.f32 %v2359, %v2297
      %v2361 = vrot.slane %v2360, 4
      %v2362 = vadd.f32 %v2360, %v2361
      %v2363 = vrot.slane %v2362, 2
      %v2364 = vadd.f32 %v2362, %v2363
      %v2365 = vrot.slane %v2364, 1
      %v2366 = vadd.f32 %v2364, %v2365
      %2367 = vst [vmem:[%s281 + $0x1] sm:$0x1] %v2366
      %s2368 = smul.u32 64, %s20
      %p2369 = scmp.lt.s32.totalorder %s2368, 127
      %s2370 = scalar_select %p2369, %s2368, 127
      %p2371 = scmp.lt.s32.totalorder %s21, 0
      %s2372 = scalar_select %p2371, %s21, 0
      %s2373 = sadd.s32 %s2372, %s2370
      %s2374 = smul.addr %s2373, 4
      %s2375 = scalar_lea.vmem %s3, %s2374
      %p2376 = scmp.lt.s32.totalorder %s20, 1
      %s2377 = scalar_select %p2376, %s20, 1
      %p2378 = scmp.lt.s32.totalorder %s21, 0
      %s2379 = scalar_select %p2378, %s21, 0
      %s2380 = sadd.s32 %s2379, %s2377
      %s2381 = smul.addr %s2380, 8
      %s2382 = scalar_lea.vmem %s4, %s2381
      // Predicated region
      $region33: #{conv_bn_relu.2} parent=31 // pred_check
        %p2383 = pneg %p128
      $region34: #{conv_bn_relu.2} parent=31 // pred_check_branch
        %2385 = sbr.rel (%p2383) target = $region36
      $region35: #{conv_bn_relu.2} parent=31 // pred_region
        %s2386 = smul.u32 64, %s20
      $region36: #{conv_bn_relu.2} parent=31 // pred_fallthru
        _
      // Predicated region
      $region37: #{conv_bn_relu.2} parent=31 // pred_check
        %p2387 = pneg %p156
      $region38: #{conv_bn_relu.2} parent=31 // pred_check_branch
        %2389 = sbr.rel (%p2387) target = $region40
      $region39: #{conv_bn_relu.2} parent=31 // pred_region
        _
      $region40: #{conv_bn_relu.2} parent=31 // pred_fallthru
        _
    $region32: #{conv_bn_relu.2} parent=5 // pred_fallthru
      _
    %p2390 = scmp.le.s32.totalorder 2, %s11
    // Predicated region
    $region41: #{conv_bn_relu.2} parent=5 // pred_check
      %p2391 = pneg %p2390
    $region42: #{conv_bn_relu.2} parent=5 // pred_check_branch
      %2393 = sbr.rel (%p2391) target = $region44
    $region43: #{conv_bn_relu.2} parent=5 // pred_region
      %s2394 = ssub.s32 %s11, 2
      // Predicated region
      $region45: #{conv_bn_relu.2} parent=43 // pred_check
        %p2395 = pneg %p134
      $region46: #{conv_bn_relu.2} parent=43 // pred_check_branch
        %2397 = sbr.rel (%p2395) target = $region48
      $region47: #{conv_bn_relu.2} parent=43 // pred_region
        %s2398 = smul.u32 64, %s22
        %p2399 = scmp.lt.s32.totalorder %s2398, 127
        %s2400 = scalar_select %p2399, %s2398, 127
        %p2401 = scmp.lt.s32.totalorder %s23, 0
        %s2402 = scalar_select %p2401, %s23, 0
        %s2403 = sadd.s32 %s2402, %s2400
        %s2404 = smul.addr %s2403, 4
        %s2405 = scalar_lea.vmem %s3, %s2404
      $region48: #{conv_bn_relu.2} parent=43 // pred_fallthru
        _
      // Predicated region
      $region49: #{conv_bn_relu.2} parent=43 // pred_check
        %p2406 = pneg %p162
      $region50: #{conv_bn_relu.2} parent=43 // pred_check_branch
        %2408 = sbr.rel (%p2406) target = $region52
      $region51: #{conv_bn_relu.2} parent=43 // pred_region
        %p2409 = scmp.lt.s32.totalorder %s22, 1
        %s2410 = scalar_select %p2409, %s22, 1
        %p2411 = scmp.lt.s32.totalorder %s23, 0
        %s2412 = scalar_select %p2411, %s23, 0
        %s2413 = sadd.s32 %s2412, %s2410
        %s2414 = smul.addr %s2413, 8
        %s2415 = scalar_lea.vmem %s4, %s2414
      $region52: #{conv_bn_relu.2} parent=43 // pred_fallthru
        _
    $region44: #{conv_bn_relu.2} parent=5 // pred_fallthru
      _
  $region6: #{conv_bn_relu.2} parent=0 // loop_footer
    %s15 = sadd.s32 1, %s11
  $region7: #{conv_bn_relu.2} parent=0 // loop_footer_branch
    %10 = sbr.rel target = $region3
  $region8: #{conv_bn_relu.2} parent=0 // loop_exit
    _

// kernel: conv_bn_relu.3
$region0: #{conv_bn_relu.3}
  #allocation0 [shape = 'u32[]', space=smem, size = 0x4, offset = 0x4, fixed_abs, tag = 'smem constant byte address 0x4 - core index']
  #allocation1 [shape = 'u32[72,128]{1,0:T(1,128)}', space=vmem, size = 0x9000, scoped, tag = 'internal scratch']
  %s0 = inlined_call_operand.vmem [shape: bf16[1024,128], index: 0, kind: input, shape index: {}]
  %s1 = inlined_call_operand.vmem [shape: f32[1,128], index: 1, kind: input, shape index: {}]
  %s2 = inlined_call_operand.vmem [shape: f32[1,128], index: 2, kind: input, shape index: {}]
  %s3 = inlined_call_operand.vmem [shape: f32[128,1024], index: 3, kind: output, shape index: {}]
  %s4 = sld [smem:[#allocation0]]
  $region22: #{conv_bn_relu.3} parent=0
    _
  %s6 = ssub.s32 1, %s4
  %s7 = scalar_select 0, %s6, %s4
  // Predicated region
  $region2: #{conv_bn_relu.3} parent=0 // pred_check
    _
  $region3: #{conv_bn_relu.3} parent=0 // pred_check_branch
    %9 = sbr.rel (0) target = $region5
  $region4: #{conv_bn_relu.3} parent=0 // pred_region
    _
  $region5: #{conv_bn_relu.3} parent=0 // pred_fallthru
    _
  // Predicated region
  $region6: #{conv_bn_relu.3} parent=0 // pred_check
    _
  $region7: #{conv_bn_relu.3} parent=0 // pred_check_branch
    %11 = sbr.rel (0) target = $region9
  $region8: #{conv_bn_relu.3} parent=0 // pred_region
    _
  $region9: #{conv_bn_relu.3} parent=0 // pred_fallthru
    _
  // Predicated region
  $region10: #{conv_bn_relu.3} parent=0 // pred_check
    _
  $region11: #{conv_bn_relu.3} parent=0 // pred_check_branch
    %13 = sbr.rel (0) target = $region13
  $region12: #{conv_bn_relu.3} parent=0 // pred_region
    _
  $region13: #{conv_bn_relu.3} parent=0 // pred_fallthru
    _
  %v14 = vld [vmem:[%s0] sm:$0xf]
  %v15 = vld [vmem:[%s0 + $0x4] sm:$0xf]
  %v16 = vld [vmem:[%s0 + $0x8] sm:$0xf]
  %v17 = vld [vmem:[%s0 + $0xc] sm:$0xf]
  %v18 = vld [vmem:[%s0 + $0x10] sm:$0xf]
  %v19 = vld [vmem:[%s0 + $0x14] sm:$0xf]
  %v20 = vld [vmem:[%s0 + $0x18] sm:$0xf]
  %v21 = vld [vmem:[%s0 + $0x1c] sm:$0xf]
  %v22 = vld [vmem:[%s0 + $0x20] sm:$0xf]
  %v23 = vld [vmem:[%s0 + $0x24] sm:$0xf]
  %v24 = vld [vmem:[%s0 + $0x28] sm:$0xf]
  %v25 = vld [vmem:[%s0 + $0x2c] sm:$0xf]
  %v26 = vld [vmem:[%s0 + $0x30] sm:$0xf]
  %v27 = vld [vmem:[%s0 + $0x34] sm:$0xf]
  %v28 = vld [vmem:[%s0 + $0x38] sm:$0xf]
  %v29 = vld [vmem:[%s0 + $0x3c] sm:$0xf]
  %v30 = vld [vmem:[%s0 + $0x40] sm:$0xf]
  %v31 = vld [vmem:[%s0 + $0x44] sm:$0xf]
  %v32 = vld [vmem:[%s0 + $0x48] sm:$0xf]
  %v33 = vld [vmem:[%s0 + $0x4c] sm:$0xf]
  %v34 = vld [vmem:[%s0 + $0x50] sm:$0xf]
  %v35 = vld [vmem:[%s0 + $0x54] sm:$0xf]
  %v36 = vld [vmem:[%s0 + $0x58] sm:$0xf]
  %v37 = vld [vmem:[%s0 + $0x5c] sm:$0xf]
  %v38 = vld [vmem:[%s0 + $0x60] sm:$0xf]
  %v39 = vld [vmem:[%s0 + $0x64] sm:$0xf]
  %v40 = vld [vmem:[%s0 + $0x68] sm:$0xf]
  %v41 = vld [vmem:[%s0 + $0x6c] sm:$0xf]
  %v42 = vld [vmem:[%s0 + $0x70] sm:$0xf]
  %v43 = vld [vmem:[%s0 + $0x74] sm:$0xf]
  %v44 = vld [vmem:[%s0 + $0x78] sm:$0xf]
  %v45 = vld [vmem:[%s0 + $0x7c] sm:$0xf]
  %v46 = vld [vmem:[%s0 + $0x80] sm:$0xf]
  %v47 = vld [vmem:[%s0 + $0x84] sm:$0xf]
  %v48 = vld [vmem:[%s0 + $0x88] sm:$0xf]
  %v49 = vld [vmem:[%s0 + $0x8c] sm:$0xf]
  %v50 = vld [vmem:[%s0 + $0x90] sm:$0xf]
  %v51 = vld [vmem:[%s0 + $0x94] sm:$0xf]
  %v52 = vld [vmem:[%s0 + $0x98] sm:$0xf]
  %v53 = vld [vmem:[%s0 + $0x9c] sm:$0xf]
  %v54 = vld [vmem:[%s0 + $0xa0] sm:$0xf]
  %v55 = vld [vmem:[%s0 + $0xa4] sm:$0xf]
  %v56 = vld [vmem:[%s0 + $0xa8] sm:$0xf]
  %v57 = vld [vmem:[%s0 + $0xac] sm:$0xf]
  %v58 = vld [vmem:[%s0 + $0xb0] sm:$0xf]
  %v59 = vld [vmem:[%s0 + $0xb4] sm:$0xf]
  %v60 = vld [vmem:[%s0 + $0xb8] sm:$0xf]
  %v61 = vld [vmem:[%s0 + $0xbc] sm:$0xf]
  %v62 = vld [vmem:[%s0 + $0xc0] sm:$0xf]
  %v63 = vld [vmem:[%s0 + $0xc4] sm:$0xf]
  %v64 = vld [vmem:[%s0 + $0xc8] sm:$0xf]
  %v65 = vld [vmem:[%s0 + $0xcc] sm:$0xf]
  %v66 = vld [vmem:[%s0 + $0xd0] sm:$0xf]
  %v67 = vld [vmem:[%s0 + $0xd4] sm:$0xf]
  %v68 = vld [vmem:[%s0 + $0xd8] sm:$0xf]
  %v69 = vld [vmem:[%s0 + $0xdc] sm:$0xf]
  %v70 = vld [vmem:[%s0 + $0xe0] sm:$0xf]
  %v71 = vld [vmem:[%s0 + $0xe4] sm:$0xf]
  %v72 = vld [vmem:[%s0 + $0xe8] sm:$0xf]
  %v73 = vld [vmem:[%s0 + $0xec] sm:$0xf]
  %v74 = vld [vmem:[%s0 + $0xf0] sm:$0xf]
  %v75 = vld [vmem:[%s0 + $0xf4] sm:$0xf]
  %v76 = vld [vmem:[%s0 + $0xf8] sm:$0xf]
  %v77 = vld [vmem:[%s0 + $0xfc] sm:$0xf]
  %v78 = vld [vmem:[%s0 + $0x100] sm:$0xf]
  %v79 = vld [vmem:[%s0 + $0x104] sm:$0xf]
  %v80 = vld [vmem:[%s0 + $0x108] sm:$0xf]
  %v81 = vld [vmem:[%s0 + $0x10c] sm:$0xf]
  %v82 = vld [vmem:[%s0 + $0x110] sm:$0xf]
  %v83 = vld [vmem:[%s0 + $0x114] sm:$0xf]
  %v84 = vld [vmem:[%s0 + $0x118] sm:$0xf]
  %v85 = vld [vmem:[%s0 + $0x11c] sm:$0xf]
  %v86 = vld [vmem:[%s0 + $0x120] sm:$0xf]
  %v87 = vld [vmem:[%s0 + $0x124] sm:$0xf]
  %v88 = vld [vmem:[%s0 + $0x128] sm:$0xf]
  %v89 = vld [vmem:[%s0 + $0x12c] sm:$0xf]
  %v90 = vld [vmem:[%s0 + $0x130] sm:$0xf]
  %v91 = vld [vmem:[%s0 + $0x134] sm:$0xf]
  %v92 = vld [vmem:[%s0 + $0x138] sm:$0xf]
  %v93 = vld [vmem:[%s0 + $0x13c] sm:$0xf]
  %v94 = vld [vmem:[%s0 + $0x140] sm:$0xf]
  %v95 = vld [vmem:[%s0 + $0x144] sm:$0xf]
  %v96 = vld [vmem:[%s0 + $0x148] sm:$0xf]
  %v97 = vld [vmem:[%s0 + $0x14c] sm:$0xf]
  %v98 = vld [vmem:[%s0 + $0x150] sm:$0xf]
  %v99 = vld [vmem:[%s0 + $0x154] sm:$0xf]
  %v100 = vld [vmem:[%s0 + $0x158] sm:$0xf]
  %v101 = vld [vmem:[%s0 + $0x15c] sm:$0xf]
  %v102 = vld [vmem:[%s0 + $0x160] sm:$0xf]
  %v103 = vld [vmem:[%s0 + $0x164] sm:$0xf]
  %v104 = vld [vmem:[%s0 + $0x168] sm:$0xf]
  %v105 = vld [vmem:[%s0 + $0x16c] sm:$0xf]
  %v106 = vld [vmem:[%s0 + $0x170] sm:$0xf]
  %v107 = vld [vmem:[%s0 + $0x174] sm:$0xf]
  %v108 = vld [vmem:[%s0 + $0x178] sm:$0xf]
  %v109 = vld [vmem:[%s0 + $0x17c] sm:$0xf]
  %v110 = vld [vmem:[%s0 + $0x180] sm:$0xf]
  %v111 = vld [vmem:[%s0 + $0x184] sm:$0xf]
  %v112 = vld [vmem:[%s0 + $0x188] sm:$0xf]
  %v113 = vld [vmem:[%s0 + $0x18c] sm:$0xf]
  %v114 = vld [vmem:[%s0 + $0x190] sm:$0xf]
  %v115 = vld [vmem:[%s0 + $0x194] sm:$0xf]
  %v116 = vld [vmem:[%s0 + $0x198] sm:$0xf]
  %v117 = vld [vmem:[%s0 + $0x19c] sm:$0xf]
  %v118 = vld [vmem:[%s0 + $0x1a0] sm:$0xf]
  %v119 = vld [vmem:[%s0 + $0x1a4] sm:$0xf]
  %v120 = vld [vmem:[%s0 + $0x1a8] sm:$0xf]
  %v121 = vld [vmem:[%s0 + $0x1ac] sm:$0xf]
  %v122 = vld [vmem:[%s0 + $0x1b0] sm:$0xf]
  %v123 = vld [vmem:[%s0 + $0x1b4] sm:$0xf]
  %v124 = vld [vmem:[%s0 + $0x1b8] sm:$0xf]
  %v125 = vld [vmem:[%s0 + $0x1bc] sm:$0xf]
  %v126 = vld [vmem:[%s0 + $0x1c0] sm:$0xf]
  %v127 = vld [vmem:[%s0 + $0x1c4] sm:$0xf]
  %v128 = vld [vmem:[%s0 + $0x1c8] sm:$0xf]
  %v129 = vld [vmem:[%s0 + $0x1cc] sm:$0xf]
  %v130 = vld [vmem:[%s0 + $0x1d0] sm:$0xf]
  %v131 = vld [vmem:[%s0 + $0x1d4] sm:$0xf]
  %v132 = vld [vmem:[%s0 + $0x1d8] sm:$0xf]
  %v133 = vld [vmem:[%s0 + $0x1dc] sm:$0xf]
  %v134 = vld [vmem:[%s0 + $0x1e0] sm:$0xf]
  %v135 = vld [vmem:[%s0 + $0x1e4] sm:$0xf]
  %v136 = vld [vmem:[%s0 + $0x1e8] sm:$0xf]
  %v137 = vld [vmem:[%s0 + $0x1ec] sm:$0xf]
  %v138 = vld [vmem:[%s0 + $0x1f0] sm:$0xf]
  %v139 = vld [vmem:[%s0 + $0x1f4] sm:$0xf]
  %v140 = vld [vmem:[%s0 + $0x1f8] sm:$0xf]
  %v141 = vld [vmem:[%s0 + $0x1fc] sm:$0xf]
  %v142 = vunpack.c.l.bf16 %v14
  %v143 = vunpack.c.l.bf16 %v15
  %v144 = vunpack.c.l.bf16 %v16
  %v145 = vunpack.c.l.bf16 %v17
  %v146 = vunpack.c.l.bf16 %v18
  %v147 = vunpack.c.l.bf16 %v19
  %v148 = vunpack.c.l.bf16 %v20
  %v149 = vunpack.c.l.bf16 %v21
  %v150 = vunpack.c.l.bf16 %v22
  %v151 = vunpack.c.l.bf16 %v23
  %v152 = vunpack.c.l.bf16 %v24
  %v153 = vunpack.c.l.bf16 %v25
  %v154 = vunpack.c.l.bf16 %v26
  %v155 = vunpack.c.l.bf16 %v27
  %v156 = vunpack.c.l.bf16 %v28
  %v157 = vunpack.c.l.bf16 %v29
  %v158 = vunpack.c.l.bf16 %v30
  %v159 = vunpack.c.l.bf16 %v31
  %v160 = vunpack.c.l.bf16 %v32
  %v161 = vunpack.c.l.bf16 %v33
  %v162 = vunpack.c.l.bf16 %v34
  %v163 = vunpack.c.l.bf16 %v35
  %v164 = vunpack.c.l.bf16 %v36
  %v165 = vunpack.c.l.bf16 %v37
  %v166 = vunpack.c.l.bf16 %v38
  %v167 = vunpack.c.l.bf16 %v39
  %v168 = vunpack.c.l.bf16 %v40
  %v169 = vunpack.c.l.bf16 %v41
  %v170 = vunpack.c.l.bf16 %v42
  %v171 = vunpack.c.l.bf16 %v43
  %v172 = vunpack.c.l.bf16 %v44
  %v173 = vunpack.c.l.bf16 %v45
  %v174 = vunpack.c.l.bf16 %v46
  %v175 = vunpack.c.l.bf16 %v47
  %v176 = vunpack.c.l.bf16 %v48
  %v177 = vunpack.c.l.bf16 %v49
  %v178 = vunpack.c.l.bf16 %v50
  %v179 = vunpack.c.l.bf16 %v51
  %v180 = vunpack.c.l.bf16 %v52
  %v181 = vunpack.c.l.bf16 %v53
  %v182 = vunpack.c.l.bf16 %v54
  %v183 = vunpack.c.l.bf16 %v55
  %v184 = vunpack.c.l.bf16 %v56
  %v185 = vunpack.c.l.bf16 %v57
  %v186 = vunpack.c.l.bf16 %v58
  %v187 = vunpack.c.l.bf16 %v59
  %v188 = vunpack.c.l.bf16 %v60
  %v189 = vunpack.c.l.bf16 %v61
  %v190 = vunpack.c.l.bf16 %v62
  %v191 = vunpack.c.l.bf16 %v63
  %v192 = vunpack.c.l.bf16 %v64
  %v193 = vunpack.c.l.bf16 %v65
  %v194 = vunpack.c.l.bf16 %v66
  %v195 = vunpack.c.l.bf16 %v67
  %v196 = vunpack.c.l.bf16 %v68
  %v197 = vunpack.c.l.bf16 %v69
  %v198 = vunpack.c.l.bf16 %v70
  %v199 = vunpack.c.l.bf16 %v71
  %v200 = vunpack.c.l.bf16 %v72
  %v201 = vunpack.c.l.bf16 %v73
  %v202 = vunpack.c.l.bf16 %v74
  %v203 = vunpack.c.l.bf16 %v75
  %v204 = vunpack.c.l.bf16 %v76
  %v205 = vunpack.c.l.bf16 %v77
  %v206 = vunpack.c.l.bf16 %v78
  %v207 = vunpack.c.l.bf16 %v79
  %v208 = vunpack.c.l.bf16 %v80
  %v209 = vunpack.c.l.bf16 %v81
  %v210 = vunpack.c.l.bf16 %v82
  %v211 = vunpack.c.l.bf16 %v83
  %v212 = vunpack.c.l.bf16 %v84
  %v213 = vunpack.c.l.bf16 %v85
  %v214 = vunpack.c.l.bf16 %v86
  %v215 = vunpack.c.l.bf16 %v87
  %v216 = vunpack.c.l.bf16 %v88
  %v217 = vunpack.c.l.bf16 %v89
  %v218 = vunpack.c.l.bf16 %v90
  %v219 = vunpack.c.l.bf16 %v91
  %v220 = vunpack.c.l.bf16 %v92
  %v221 = vunpack.c.l.bf16 %v93
  %v222 = vunpack.c.l.bf16 %v94
  %v223 = vunpack.c.l.bf16 %v95
  %v224 = vunpack.c.l.bf16 %v96
  %v225 = vunpack.c.l.bf16 %v97
  %v226 = vunpack.c.l.bf16 %v98
  %v227 = vunpack.c.l.bf16 %v99
  %v228 = vunpack.c.l.bf16 %v100
  %v229 = vunpack.c.l.bf16 %v101
  %v230 = vunpack.c.l.bf16 %v102
  %v231 = vunpack.c.l.bf16 %v103
  %v232 = vunpack.c.l.bf16 %v104
  %v233 = vunpack.c.l.bf16 %v105
  %v234 = vunpack.c.l.bf16 %v106
  %v235 = vunpack.c.l.bf16 %v107
  %v236 = vunpack.c.l.bf16 %v108
  %v237 = vunpack.c.l.bf16 %v109
  %v238 = vunpack.c.l.bf16 %v110
  %v239 = vunpack.c.l.bf16 %v111
  %v240 = vunpack.c.l.bf16 %v112
  %v241 = vunpack.c.l.bf16 %v113
  %v242 = vunpack.c.l.bf16 %v114
  %v243 = vunpack.c.l.bf16 %v115
  %v244 = vunpack.c.l.bf16 %v116
  %v245 = vunpack.c.l.bf16 %v117
  %v246 = vunpack.c.l.bf16 %v118
  %v247 = vunpack.c.l.bf16 %v119
  %v248 = vunpack.c.l.bf16 %v120
  %v249 = vunpack.c.l.bf16 %v121
  %v250 = vunpack.c.l.bf16 %v122
  %v251 = vunpack.c.l.bf16 %v123
  %v252 = vunpack.c.l.bf16 %v124
  %v253 = vunpack.c.l.bf16 %v125
  %v254 = vunpack.c.l.bf16 %v126
  %v255 = vunpack.c.l.bf16 %v127
  %v256 = vunpack.c.l.bf16 %v128
  %v257 = vunpack.c.l.bf16 %v129
  %v258 = vunpack.c.l.bf16 %v130
  %v259 = vunpack.c.l.bf16 %v131
  %v260 = vunpack.c.l.bf16 %v132
  %v261 = vunpack.c.l.bf16 %v133
  %v262 = vunpack.c.l.bf16 %v134
  %v263 = vunpack.c.l.bf16 %v135
  %v264 = vunpack.c.l.bf16 %v136
  %v265 = vunpack.c.l.bf16 %v137
  %v266 = vunpack.c.l.bf16 %v138
  %v267 = vunpack.c.l.bf16 %v139
  %v268 = vunpack.c.l.bf16 %v140
  %v269 = vunpack.c.l.bf16 %v141
  %v270 = vld [vmem:[%s1] sm:$0x1]
  %v272 = vperm.slane %v270, 0
  %v274 = vmul.f32 %v142, %v272
  %v275 = vmul.f32 %v143, %v272
  %v276 = vmul.f32 %v144, %v272
  %v277 = vmul.f32 %v145, %v272
  %v278 = vmul.f32 %v146, %v272
  %v279 = vmul.f32 %v147, %v272
  %v280 = vmul.f32 %v148, %v272
  %v281 = vmul.f32 %v149, %v272
  %v282 = vmul.f32 %v150, %v272
  %v283 = vmul.f32 %v151, %v272
  %v284 = vmul.f32 %v152, %v272
  %v285 = vmul.f32 %v153, %v272
  %v286 = vmul.f32 %v154, %v272
  %v287 = vmul.f32 %v155, %v272
  %v288 = vmul.f32 %v156, %v272
  %v289 = vmul.f32 %v157, %v272
  %v290 = vmul.f32 %v158, %v272
  %v291 = vmul.f32 %v159, %v272
  %v292 = vmul.f32 %v160, %v272
  %v293 = vmul.f32 %v161, %v272
  %v294 = vmul.f32 %v162, %v272
  %v295 = vmul.f32 %v163, %v272
  %v296 = vmul.f32 %v164, %v272
  %v297 = vmul.f32 %v165, %v272
  %v298 = vmul.f32 %v166, %v272
  %v299 = vmul.f32 %v167, %v272
  %v300 = vmul.f32 %v168, %v272
  %v301 = vmul.f32 %v169, %v272
  %v302 = vmul.f32 %v170, %v272
  %v303 = vmul.f32 %v171, %v272
  %v304 = vmul.f32 %v172, %v272
  %v305 = vmul.f32 %v173, %v272
  %v306 = vmul.f32 %v174, %v272
  %v307 = vmul.f32 %v175, %v272
  %v308 = vmul.f32 %v176, %v272
  %v309 = vmul.f32 %v177, %v272
  %v310 = vmul.f32 %v178, %v272
  %v311 = vmul.f32 %v179, %v272
  %v312 = vmul.f32 %v180, %v272
  %v313 = vmul.f32 %v181, %v272
  %v314 = vmul.f32 %v182, %v272
  %v315 = vmul.f32 %v183, %v272
  %v316 = vmul.f32 %v184, %v272
  %v317 = vmul.f32 %v185, %v272
  %v318 = vmul.f32 %v186, %v272
  %v319 = vmul.f32 %v187, %v272
  %v320 = vmul.f32 %v188, %v272
  %v321 = vmul.f32 %v189, %v272
  %v322 = vmul.f32 %v190, %v272
  %v323 = vmul.f32 %v191, %v272
  %v324 = vmul.f32 %v192, %v272
  %v325 = vmul.f32 %v193, %v272
  %v326 = vmul.f32 %v194, %v272
  %v327 = vmul.f32 %v195, %v272
  %v328 = vmul.f32 %v196, %v272
  %v329 = vmul.f32 %v197, %v272
  %v330 = vmul.f32 %v198, %v272
  %v331 = vmul.f32 %v199, %v272
  %v332 = vmul.f32 %v200, %v272
  %v333 = vmul.f32 %v201, %v272
  %v334 = vmul.f32 %v202, %v272
  %v335 = vmul.f32 %v203, %v272
  %v336 = vmul.f32 %v204, %v272
  %v337 = vmul.f32 %v205, %v272
  %v338 = vmul.f32 %v206, %v272
  %v339 = vmul.f32 %v207, %v272
  %v340 = vmul.f32 %v208, %v272
  %v341 = vmul.f32 %v209, %v272
  %v342 = vmul.f32 %v210, %v272
  %v343 = vmul.f32 %v211, %v272
  %v344 = vmul.f32 %v212, %v272
  %v345 = vmul.f32 %v213, %v272
  %v346 = vmul.f32 %v214, %v272
  %v347 = vmul.f32 %v215, %v272
  %v348 = vmul.f32 %v216, %v272
  %v349 = vmul.f32 %v217, %v272
  %v350 = vmul.f32 %v218, %v272
  %v351 = vmul.f32 %v219, %v272
  %v352 = vmul.f32 %v220, %v272
  %v353 = vmul.f32 %v221, %v272
  %v354 = vmul.f32 %v222, %v272
  %v355 = vmul.f32 %v223, %v272
  %v356 = vmul.f32 %v224, %v272
  %v357 = vmul.f32 %v225, %v272
  %v358 = vmul.f32 %v226, %v272
  %v359 = vmul.f32 %v227, %v272
  %v360 = vmul.f32 %v228, %v272
  %v361 = vmul.f32 %v229, %v272
  %v362 = vmul.f32 %v230, %v272
  %v363 = vmul.f32 %v231, %v272
  %v364 = vmul.f32 %v232, %v272
  %v365 = vmul.f32 %v233, %v272
  %v366 = vmul.f32 %v234, %v272
  %v367 = vmul.f32 %v235, %v272
  %v368 = vmul.f32 %v236, %v272
  %v369 = vmul.f32 %v237, %v272
  %v370 = vmul.f32 %v238, %v272
  %v371 = vmul.f32 %v239, %v272
  %v372 = vmul.f32 %v240, %v272
  %v373 = vmul.f32 %v241, %v272
  %v374 = vmul.f32 %v242, %v272
  %v375 = vmul.f32 %v243, %v272
  %v376 = vmul.f32 %v244, %v272
  %v377 = vmul.f32 %v245, %v272
  %v378 = vmul.f32 %v246, %v272
  %v379 = vmul.f32 %v247, %v272
  %v380 = vmul.f32 %v248, %v272
  %v381 = vmul.f32 %v249, %v272
  %v382 = vmul.f32 %v250, %v272
  %v383 = vmul.f32 %v251, %v272
  %v384 = vmul.f32 %v252, %v272
  %v385 = vmul.f32 %v253, %v272
  %v386 = vmul.f32 %v254, %v272
  %v387 = vmul.f32 %v255, %v272
  %v388 = vmul.f32 %v256, %v272
  %v389 = vmul.f32 %v257, %v272
  %v390 = vmul.f32 %v258, %v272
  %v391 = vmul.f32 %v259, %v272
  %v392 = vmul.f32 %v260, %v272
  %v393 = vmul.f32 %v261, %v272
  %v394 = vmul.f32 %v262, %v272
  %v395 = vmul.f32 %v263, %v272
  %v396 = vmul.f32 %v264, %v272
  %v397 = vmul.f32 %v265, %v272
  %v398 = vmul.f32 %v266, %v272
  %v399 = vmul.f32 %v267, %v272
  %v400 = vmul.f32 %v268, %v272
  %v401 = vmul.f32 %v269, %v272
  %v402 = vld [vmem:[%s2] sm:$0x1]
  %v404 = vperm.slane %v402, 0
  %v406 = vadd.f32 %v274, %v404
  %v407 = vadd.f32 %v275, %v404
  %v408 = vadd.f32 %v276, %v404
  %v409 = vadd.f32 %v277, %v404
  %v410 = vadd.f32 %v278, %v404
  %v411 = vadd.f32 %v279, %v404
  %v412 = vadd.f32 %v280, %v404
  %v413 = vadd.f32 %v281, %v404
  %v414 = vadd.f32 %v282, %v404
  %v415 = vadd.f32 %v283, %v404
  %v416 = vadd.f32 %v284, %v404
  %v417 = vadd.f32 %v285, %v404
  %v418 = vadd.f32 %v286, %v404
  %v419 = vadd.f32 %v287, %v404
  %v420 = vadd.f32 %v288, %v404
  %v421 = vadd.f32 %v289, %v404
  %v422 = vadd.f32 %v290, %v404
  %v423 = vadd.f32 %v291, %v404
  %v424 = vadd.f32 %v292, %v404
  %v425 = vadd.f32 %v293, %v404
  %v426 = vadd.f32 %v294, %v404
  %v427 = vadd.f32 %v295, %v404
  %v428 = vadd.f32 %v296, %v404
  %v429 = vadd.f32 %v297, %v404
  %v430 = vadd.f32 %v298, %v404
  %v431 = vadd.f32 %v299, %v404
  %v432 = vadd.f32 %v300, %v404
  %v433 = vadd.f32 %v301, %v404
  %v434 = vadd.f32 %v302, %v404
  %v435 = vadd.f32 %v303, %v404
  %v436 = vadd.f32 %v304, %v404
  %v437 = vadd.f32 %v305, %v404
  %v438 = vadd.f32 %v306, %v404
  %v439 = vadd.f32 %v307, %v404
  %v440 = vadd.f32 %v308, %v404
  %v441 = vadd.f32 %v309, %v404
  %v442 = vadd.f32 %v310, %v404
  %v443 = vadd.f32 %v311, %v404
  %v444 = vadd.f32 %v312, %v404
  %v445 = vadd.f32 %v313, %v404
  %v446 = vadd.f32 %v314, %v404
  %v447 = vadd.f32 %v315, %v404
  %v448 = vadd.f32 %v316, %v404
  %v449 = vadd.f32 %v317, %v404
  %v450 = vadd.f32 %v318, %v404
  %v451 = vadd.f32 %v319, %v404
  %v452 = vadd.f32 %v320, %v404
  %v453 = vadd.f32 %v321, %v404
  %v454 = vadd.f32 %v322, %v404
  %v455 = vadd.f32 %v323, %v404
  %v456 = vadd.f32 %v324, %v404
  %v457 = vadd.f32 %v325, %v404
  %v458 = vadd.f32 %v326, %v404
  %v459 = vadd.f32 %v327, %v404
  %v460 = vadd.f32 %v328, %v404
  %v461 = vadd.f32 %v329, %v404
  %v462 = vadd.f32 %v330, %v404
  %v463 = vadd.f32 %v331, %v404
  %v464 = vadd.f32 %v332, %v404
  %v465 = vadd.f32 %v333, %v404
  %v466 = vadd.f32 %v334, %v404
  %v467 = vadd.f32 %v335, %v404
  %v468 = vadd.f32 %v336, %v404
  %v469 = vadd.f32 %v337, %v404
  %v470 = vadd.f32 %v338, %v404
  %v471 = vadd.f32 %v339, %v404
  %v472 = vadd.f32 %v340, %v404
  %v473 = vadd.f32 %v341, %v404
  %v474 = vadd.f32 %v342, %v404
  %v475 = vadd.f32 %v343, %v404
  %v476 = vadd.f32 %v344, %v404
  %v477 = vadd.f32 %v345, %v404
  %v478 = vadd.f32 %v346, %v404
  %v479 = vadd.f32 %v347, %v404
  %v480 = vadd.f32 %v348, %v404
  %v481 = vadd.f32 %v349, %v404
  %v482 = vadd.f32 %v350, %v404
  %v483 = vadd.f32 %v351, %v404
  %v484 = vadd.f32 %v352, %v404
  %v485 = vadd.f32 %v353, %v404
  %v486 = vadd.f32 %v354, %v404
  %v487 = vadd.f32 %v355, %v404
  %v488 = vadd.f32 %v356, %v404
  %v489 = vadd.f32 %v357, %v404
  %v490 = vadd.f32 %v358, %v404
  %v491 = vadd.f32 %v359, %v404
  %v492 = vadd.f32 %v360, %v404
  %v493 = vadd.f32 %v361, %v404
  %v494 = vadd.f32 %v362, %v404
  %v495 = vadd.f32 %v363, %v404
  %v496 = vadd.f32 %v364, %v404
  %v497 = vadd.f32 %v365, %v404
  %v498 = vadd.f32 %v366, %v404
  %v499 = vadd.f32 %v367, %v404
  %v500 = vadd.f32 %v368, %v404
  %v501 = vadd.f32 %v369, %v404
  %v502 = vadd.f32 %v370, %v404
  %v503 = vadd.f32 %v371, %v404
  %v504 = vadd.f32 %v372, %v404
  %v505 = vadd.f32 %v373, %v404
  %v506 = vadd.f32 %v374, %v404
  %v507 = vadd.f32 %v375, %v404
  %v508 = vadd.f32 %v376, %v404
  %v509 = vadd.f32 %v377, %v404
  %v510 = vadd.f32 %v378, %v404
  %v511 = vadd.f32 %v379, %v404
  %v512 = vadd.f32 %v380, %v404
  %v513 = vadd.f32 %v381, %v404
  %v514 = vadd.f32 %v382, %v404
  %v515 = vadd.f32 %v383, %v404
  %v516 = vadd.f32 %v384, %v404
  %v517 = vadd.f32 %v385, %v404
  %v518 = vadd.f32 %v386, %v404
  %v519 = vadd.f32 %v387, %v404
  %v520 = vadd.f32 %v388, %v404
  %v521 = vadd.f32 %v389, %v404
  %v522 = vadd.f32 %v390, %v404
  %v523 = vadd.f32 %v391, %v404
  %v524 = vadd.f32 %v392, %v404
  %v525 = vadd.f32 %v393, %v404
  %v526 = vadd.f32 %v394, %v404
  %v527 = vadd.f32 %v395, %v404
  %v528 = vadd.f32 %v396, %v404
  %v529 = vadd.f32 %v397, %v404
  %v530 = vadd.f32 %v398, %v404
  %v531 = vadd.f32 %v399, %v404
  %v532 = vadd.f32 %v400, %v404
  %v533 = vadd.f32 %v401, %v404
  %v534 = vmax.f32 %v406, 0.0
  %v535 = vmax.f32 %v407, 0.0
  %v536 = vmax.f32 %v408, 0.0
  %v537 = vmax.f32 %v409, 0.0
  %v538 = vmax.f32 %v410, 0.0
  %v539 = vmax.f32 %v411, 0.0
  %v540 = vmax.f32 %v412, 0.0
  %v541 = vmax.f32 %v413, 0.0
  %v542 = vmax.f32 %v414, 0.0
  %v543 = vmax.f32 %v415, 0.0
  %v544 = vmax.f32 %v416, 0.0
  %v545 = vmax.f32 %v417, 0.0
  %v546 = vmax.f32 %v418, 0.0
  %v547 = vmax.f32 %v419, 0.0
  %v548 = vmax.f32 %v420, 0.0
  %v549 = vmax.f32 %v421, 0.0
  %v550 = vmax.f32 %v422, 0.0
  %v551 = vmax.f32 %v423, 0.0
  %v552 = vmax.f32 %v424, 0.0
  %v553 = vmax.f32 %v425, 0.0
  %v554 = vmax.f32 %v426, 0.0
  %v555 = vmax.f32 %v427, 0.0
  %v556 = vmax.f32 %v428, 0.0
  %v557 = vmax.f32 %v429, 0.0
  %v558 = vmax.f32 %v430, 0.0
  %v559 = vmax.f32 %v431, 0.0
  %v560 = vmax.f32 %v432, 0.0
  %v561 = vmax.f32 %v433, 0.0
  %v562 = vmax.f32 %v434, 0.0
  %v563 = vmax.f32 %v435, 0.0
  %v564 = vmax.f32 %v436, 0.0
  %v565 = vmax.f32 %v437, 0.0
  %v566 = vmax.f32 %v438, 0.0
  %v567 = vmax.f32 %v439, 0.0
  %v568 = vmax.f32 %v440, 0.0
  %v569 = vmax.f32 %v441, 0.0
  %v570 = vmax.f32 %v442, 0.0
  %v571 = vmax.f32 %v443, 0.0
  %v572 = vmax.f32 %v444, 0.0
  %v573 = vmax.f32 %v445, 0.0
  %v574 = vmax.f32 %v446, 0.0
  %v575 = vmax.f32 %v447, 0.0
  %v576 = vmax.f32 %v448, 0.0
  %v577 = vmax.f32 %v449, 0.0
  %v578 = vmax.f32 %v450, 0.0
  %v579 = vmax.f32 %v451, 0.0
  %v580 = vmax.f32 %v452, 0.0
  %v581 = vmax.f32 %v453, 0.0
  %v582 = vmax.f32 %v454, 0.0
  %v583 = vmax.f32 %v455, 0.0
  %v584 = vmax.f32 %v456, 0.0
  %v585 = vmax.f32 %v457, 0.0
  %v586 = vmax.f32 %v458, 0.0
  %v587 = vmax.f32 %v459, 0.0
  %v588 = vmax.f32 %v460, 0.0
  %v589 = vmax.f32 %v461, 0.0
  %v590 = vmax.f32 %v462, 0.0
  %v591 = vmax.f32 %v463, 0.0
  %v592 = vmax.f32 %v464, 0.0
  %v593 = vmax.f32 %v465, 0.0
  %v594 = vmax.f32 %v466, 0.0
  %v595 = vmax.f32 %v467, 0.0
  %v596 = vmax.f32 %v468, 0.0
  %v597 = vmax.f32 %v469, 0.0
  %v598 = vmax.f32 %v470, 0.0
  %v599 = vmax.f32 %v471, 0.0
  %v600 = vmax.f32 %v472, 0.0
  %v601 = vmax.f32 %v473, 0.0
  %v602 = vmax.f32 %v474, 0.0
  %v603 = vmax.f32 %v475, 0.0
  %v604 = vmax.f32 %v476, 0.0
  %v605 = vmax.f32 %v477, 0.0
  %v606 = vmax.f32 %v478, 0.0
  %v607 = vmax.f32 %v479, 0.0
  %v608 = vmax.f32 %v480, 0.0
  %v609 = vmax.f32 %v481, 0.0
  %v610 = vmax.f32 %v482, 0.0
  %v611 = vmax.f32 %v483, 0.0
  %v612 = vmax.f32 %v484, 0.0
  %v613 = vmax.f32 %v485, 0.0
  %v614 = vmax.f32 %v486, 0.0
  %v615 = vmax.f32 %v487, 0.0
  %v616 = vmax.f32 %v488, 0.0
  %v617 = vmax.f32 %v489, 0.0
  %v618 = vmax.f32 %v490, 0.0
  %v619 = vmax.f32 %v491, 0.0
  %v620 = vmax.f32 %v492, 0.0
  %v621 = vmax.f32 %v493, 0.0
  %v622 = vmax.f32 %v494, 0.0
  %v623 = vmax.f32 %v495, 0.0
  %v624 = vmax.f32 %v496, 0.0
  %v625 = vmax.f32 %v497, 0.0
  %v626 = vmax.f32 %v498, 0.0
  %v627 = vmax.f32 %v499, 0.0
  %v628 = vmax.f32 %v500, 0.0
  %v629 = vmax.f32 %v501, 0.0
  %v630 = vmax.f32 %v502, 0.0
  %v631 = vmax.f32 %v503, 0.0
  %v632 = vmax.f32 %v504, 0.0
  %v633 = vmax.f32 %v505, 0.0
  %v634 = vmax.f32 %v506, 0.0
  %v635 = vmax.f32 %v507, 0.0
  %v636 = vmax.f32 %v508, 0.0
  %v637 = vmax.f32 %v509, 0.0
  %v638 = vmax.f32 %v510, 0.0
  %v639 = vmax.f32 %v511, 0.0
  %v640 = vmax.f32 %v512, 0.0
  %v641 = vmax.f32 %v513, 0.0
  %v642 = vmax.f32 %v514, 0.0
  %v643 = vmax.f32 %v515, 0.0
  %v644 = vmax.f32 %v516, 0.0
  %v645 = vmax.f32 %v517, 0.0
  %v646 = vmax.f32 %v518, 0.0
  %v647 = vmax.f32 %v519, 0.0
  %v648 = vmax.f32 %v520, 0.0
  %v649 = vmax.f32 %v521, 0.0
  %v650 = vmax.f32 %v522, 0.0
  %v651 = vmax.f32 %v523, 0.0
  %v652 = vmax.f32 %v524, 0.0
  %v653 = vmax.f32 %v525, 0.0
  %v654 = vmax.f32 %v526, 0.0
  %v655 = vmax.f32 %v527, 0.0
  %v656 = vmax.f32 %v528, 0.0
  %v657 = vmax.f32 %v529, 0.0
  %v658 = vmax.f32 %v530, 0.0
  %v659 = vmax.f32 %v531, 0.0
  %v660 = vmax.f32 %v532, 0.0
  %v661 = vmax.f32 %v533, 0.0
  %662 = vxpose.xlu0.b32.start [1/16] %v534, 128
  %663 = vxpose.xlu0.b32.cont [2/16] %v535, 128
  %664 = vxpose.xlu0.b32.cont [3/16] %v536, 128
  %665 = vxpose.xlu0.b32.cont [4/16] %v537, 128
  %666 = vxpose.xlu0.b32.cont [5/16] %v538, 128
  %667 = vxpose.xlu0.b32.cont [6/16] %v539, 128
  %668 = vxpose.xlu0.b32.cont [7/16] %v540, 128
  %669 = vxpose.xlu0.b32.cont [8/16] %v541, 128
  %670 = vxpose.xlu0.b32.cont [9/16] %v542, 128
  %671 = vxpose.xlu0.b32.cont [10/16] %v543, 128
  %672 = vxpose.xlu0.b32.cont [11/16] %v544, 128
  %673 = vxpose.xlu0.b32.cont [12/16] %v545, 128
  %674 = vxpose.xlu0.b32.cont [13/16] %v546, 128
  %675 = vxpose.xlu0.b32.cont [14/16] %v547, 128
  %676 = vxpose.xlu0.b32.cont [15/16] %v548, 128
  %677 = vxpose.xlu0.b32.end [16/16] %v549, 128
  %v678 = vpop.trf.xlu0
  %v679 = vpop.trf.xlu0
  %v680 = vpop.trf.xlu0
  %v681 = vpop.trf.xlu0
  %v682 = vpop.trf.xlu0
  %v683 = vpop.trf.xlu0
  %v684 = vpop.trf.xlu0
  %v685 = vpop.trf.xlu0
  %v686 = vpop.trf.xlu0
  %v687 = vpop.trf.xlu0
  %v688 = vpop.trf.xlu0
  %v689 = vpop.trf.xlu0
  %v690 = vpop.trf.xlu0
  %v691 = vpop.trf.xlu0
  %v692 = vpop.trf.xlu0
  %v693 = vpop.trf.xlu0
  %694 = vxpose.xlu0.b32.start [1/16] %v550, 128
  %695 = vxpose.xlu0.b32.cont [2/16] %v551, 128
  %696 = vxpose.xlu0.b32.cont [3/16] %v552, 128
  %697 = vxpose.xlu0.b32.cont [4/16] %v553, 128
  %698 = vxpose.xlu0.b32.cont [5/16] %v554, 128
  %699 = vxpose.xlu0.b32.cont [6/16] %v555, 128
  %700 = vxpose.xlu0.b32.cont [7/16] %v556, 128
  %701 = vxpose.xlu0.b32.cont [8/16] %v557, 128
  %702 = vxpose.xlu0.b32.cont [9/16] %v558, 128
  %703 = vxpose.xlu0.b32.cont [10/16] %v559, 128
  %704 = vxpose.xlu0.b32.cont [11/16] %v560, 128
  %705 = vxpose.xlu0.b32.cont [12/16] %v561, 128
  %706 = vxpose.xlu0.b32.cont [13/16] %v562, 128
  %707 = vxpose.xlu0.b32.cont [14/16] %v563, 128
  %708 = vxpose.xlu0.b32.cont [15/16] %v564, 128
  %709 = vxpose.xlu0.b32.end [16/16] %v565, 128
  %v710 = vpop.trf.xlu0
  %v711 = vpop.trf.xlu0
  %v712 = vpop.trf.xlu0
  %v713 = vpop.trf.xlu0
  %v714 = vpop.trf.xlu0
  %v715 = vpop.trf.xlu0
  %v716 = vpop.trf.xlu0
  %v717 = vpop.trf.xlu0
  %v718 = vpop.trf.xlu0
  %v719 = vpop.trf.xlu0
  %v720 = vpop.trf.xlu0
  %v721 = vpop.trf.xlu0
  %v722 = vpop.trf.xlu0
  %v723 = vpop.trf.xlu0
  %v724 = vpop.trf.xlu0
  %v725 = vpop.trf.xlu0
  %726 = vxpose.xlu0.b32.start [1/16] %v566, 128
  %727 = vxpose.xlu0.b32.cont [2/16] %v567, 128
  %728 = vxpose.xlu0.b32.cont [3/16] %v568, 128
  %729 = vxpose.xlu0.b32.cont [4/16] %v569, 128
  %730 = vxpose.xlu0.b32.cont [5/16] %v570, 128
  %731 = vxpose.xlu0.b32.cont [6/16] %v571, 128
  %732 = vxpose.xlu0.b32.cont [7/16] %v572, 128
  %733 = vxpose.xlu0.b32.cont [8/16] %v573, 128
  %734 = vxpose.xlu0.b32.cont [9/16] %v574, 128
  %735 = vxpose.xlu0.b32.cont [10/16] %v575, 128
  %736 = vxpose.xlu0.b32.cont [11/16] %v576, 128
  %737 = vxpose.xlu0.b32.cont [12/16] %v577, 128
  %738 = vxpose.xlu0.b32.cont [13/16] %v578, 128
  %739 = vxpose.xlu0.b32.cont [14/16] %v579, 128
  %740 = vxpose.xlu0.b32.cont [15/16] %v580, 128
  %741 = vxpose.xlu0.b32.end [16/16] %v581, 128
  %v742 = vpop.trf.xlu0
  %v743 = vpop.trf.xlu0
  %v744 = vpop.trf.xlu0
  %v745 = vpop.trf.xlu0
  %v746 = vpop.trf.xlu0
  %v747 = vpop.trf.xlu0
  %v748 = vpop.trf.xlu0
  %v749 = vpop.trf.xlu0
  %v750 = vpop.trf.xlu0
  %v751 = vpop.trf.xlu0
  %v752 = vpop.trf.xlu0
  %v753 = vpop.trf.xlu0
  %v754 = vpop.trf.xlu0
  %v755 = vpop.trf.xlu0
  %v756 = vpop.trf.xlu0
  %v757 = vpop.trf.xlu0
  %758 = vxpose.xlu0.b32.start [1/16] %v582, 128
  %759 = vxpose.xlu0.b32.cont [2/16] %v583, 128
  %760 = vxpose.xlu0.b32.cont [3/16] %v584, 128
  %761 = vxpose.xlu0.b32.cont [4/16] %v585, 128
  %762 = vxpose.xlu0.b32.cont [5/16] %v586, 128
  %763 = vxpose.xlu0.b32.cont [6/16] %v587, 128
  %764 = vxpose.xlu0.b32.cont [7/16] %v588, 128
  %765 = vxpose.xlu0.b32.cont [8/16] %v589, 128
  %766 = vxpose.xlu0.b32.cont [9/16] %v590, 128
  %767 = vxpose.xlu0.b32.cont [10/16] %v591, 128
  %768 = vxpose.xlu0.b32.cont [11/16] %v592, 128
  %769 = vxpose.xlu0.b32.cont [12/16] %v593, 128
  %770 = vxpose.xlu0.b32.cont [13/16] %v594, 128
  %771 = vxpose.xlu0.b32.cont [14/16] %v595, 128
  %772 = vxpose.xlu0.b32.cont [15/16] %v596, 128
  %773 = vxpose.xlu0.b32.end [16/16] %v597, 128
  %v774 = vpop.trf.xlu0
  %v775 = vpop.trf.xlu0
  %v776 = vpop.trf.xlu0
  %v777 = vpop.trf.xlu0
  %v778 = vpop.trf.xlu0
  %v779 = vpop.trf.xlu0
  %v780 = vpop.trf.xlu0
  %v781 = vpop.trf.xlu0
  %v782 = vpop.trf.xlu0
  %v783 = vpop.trf.xlu0
  %v784 = vpop.trf.xlu0
  %v785 = vpop.trf.xlu0
  %v786 = vpop.trf.xlu0
  %v787 = vpop.trf.xlu0
  %v788 = vpop.trf.xlu0
  %v789 = vpop.trf.xlu0
  %790 = vxpose.xlu0.b32.start [1/16] %v598, 128
  %791 = vxpose.xlu0.b32.cont [2/16] %v599, 128
  %792 = vxpose.xlu0.b32.cont [3/16] %v600, 128
  %793 = vxpose.xlu0.b32.cont [4/16] %v601, 128
  %794 = vxpose.xlu0.b32.cont [5/16] %v602, 128
  %795 = vxpose.xlu0.b32.cont [6/16] %v603, 128
  %796 = vxpose.xlu0.b32.cont [7/16] %v604, 128
  %797 = vxpose.xlu0.b32.cont [8/16] %v605, 128
  %798 = vxpose.xlu0.b32.cont [9/16] %v606, 128
  %799 = vxpose.xlu0.b32.cont [10/16] %v607, 128
  %800 = vxpose.xlu0.b32.cont [11/16] %v608, 128
  %801 = vxpose.xlu0.b32.cont [12/16] %v609, 128
  %802 = vxpose.xlu0.b32.cont [13/16] %v610, 128
  %803 = vxpose.xlu0.b32.cont [14/16] %v611, 128
  %804 = vxpose.xlu0.b32.cont [15/16] %v612, 128
  %805 = vxpose.xlu0.b32.end [16/16] %v613, 128
  %v806 = vpop.trf.xlu0
  %v807 = vpop.trf.xlu0
  %v808 = vpop.trf.xlu0
  %v809 = vpop.trf.xlu0
  %v810 = vpop.trf.xlu0
  %v811 = vpop.trf.xlu0
  %v812 = vpop.trf.xlu0
  %v813 = vpop.trf.xlu0
  %v814 = vpop.trf.xlu0
  %v815 = vpop.trf.xlu0
  %v816 = vpop.trf.xlu0
  %v817 = vpop.trf.xlu0
  %v818 = vpop.trf.xlu0
  %v819 = vpop.trf.xlu0
  %v820 = vpop.trf.xlu0
  %v821 = vpop.trf.xlu0
  %822 = vxpose.xlu0.b32.start [1/16] %v614, 128
  %823 = vxpose.xlu0.b32.cont [2/16] %v615, 128
  %824 = vxpose.xlu0.b32.cont [3/16] %v616, 128
  %825 = vxpose.xlu0.b32.cont [4/16] %v617, 128
  %826 = vxpose.xlu0.b32.cont [5/16] %v618, 128
  %827 = vxpose.xlu0.b32.cont [6/16] %v619, 128
  %828 = vxpose.xlu0.b32.cont [7/16] %v620, 128
  %829 = vxpose.xlu0.b32.cont [8/16] %v621, 128
  %830 = vxpose.xlu0.b32.cont [9/16] %v622, 128
  %831 = vxpose.xlu0.b32.cont [10/16] %v623, 128
  %832 = vxpose.xlu0.b32.cont [11/16] %v624, 128
  %833 = vxpose.xlu0.b32.cont [12/16] %v625, 128
  %834 = vxpose.xlu0.b32.cont [13/16] %v626, 128
  %835 = vxpose.xlu0.b32.cont [14/16] %v627, 128
  %836 = vxpose.xlu0.b32.cont [15/16] %v628, 128
  %837 = vxpose.xlu0.b32.end [16/16] %v629, 128
  %v838 = vpop.trf.xlu0
  %v839 = vpop.trf.xlu0
  %v840 = vpop.trf.xlu0
  %v841 = vpop.trf.xlu0
  %v842 = vpop.trf.xlu0
  %v843 = vpop.trf.xlu0
  %v844 = vpop.trf.xlu0
  %v845 = vpop.trf.xlu0
  %v846 = vpop.trf.xlu0
  %v847 = vpop.trf.xlu0
  %v848 = vpop.trf.xlu0
  %v849 = vpop.trf.xlu0
  %v850 = vpop.trf.xlu0
  %v851 = vpop.trf.xlu0
  %v852 = vpop.trf.xlu0
  %v853 = vpop.trf.xlu0
  %854 = vxpose.xlu0.b32.start [1/16] %v630, 128
  %855 = vxpose.xlu0.b32.cont [2/16] %v631, 128
  %856 = vxpose.xlu0.b32.cont [3/16] %v632, 128
  %857 = vxpose.xlu0.b32.cont [4/16] %v633, 128
  %858 = vxpose.xlu0.b32.cont [5/16] %v634, 128
  %859 = vxpose.xlu0.b32.cont [6/16] %v635, 128
  %860 = vxpose.xlu0.b32.cont [7/16] %v636, 128
  %861 = vxpose.xlu0.b32.cont [8/16] %v637, 128
  %862 = vxpose.xlu0.b32.cont [9/16] %v638, 128
  %863 = vxpose.xlu0.b32.cont [10/16] %v639, 128
  %864 = vxpose.xlu0.b32.cont [11/16] %v640, 128
  %865 = vxpose.xlu0.b32.cont [12/16] %v641, 128
  %866 = vxpose.xlu0.b32.cont [13/16] %v642, 128
  %867 = vxpose.xlu0.b32.cont [14/16] %v643, 128
  %868 = vxpose.xlu0.b32.cont [15/16] %v644, 128
  %869 = vxpose.xlu0.b32.end [16/16] %v645, 128
  %v870 = vpop.trf.xlu0
  %v871 = vpop.trf.xlu0
  %v872 = vpop.trf.xlu0
  %v873 = vpop.trf.xlu0
  %v874 = vpop.trf.xlu0
  %v875 = vpop.trf.xlu0
  %v876 = vpop.trf.xlu0
  %v877 = vpop.trf.xlu0
  %v878 = vpop.trf.xlu0
  %v879 = vpop.trf.xlu0
  %v880 = vpop.trf.xlu0
  %v881 = vpop.trf.xlu0
  %v882 = vpop.trf.xlu0
  %v883 = vpop.trf.xlu0
  %v884 = vpop.trf.xlu0
  %v885 = vpop.trf.xlu0
  %886 = vxpose.xlu0.b32.start [1/16] %v646, 128
  %887 = vxpose.xlu0.b32.cont [2/16] %v647, 128
  %888 = vxpose.xlu0.b32.cont [3/16] %v648, 128
  %889 = vxpose.xlu0.b32.cont [4/16] %v649, 128
  %890 = vxpose.xlu0.b32.cont [5/16] %v650, 128
  %891 = vxpose.xlu0.b32.cont [6/16] %v651, 128
  %892 = vxpose.xlu0.b32.cont [7/16] %v652, 128
  %893 = vxpose.xlu0.b32.cont [8/16] %v653, 128
  %894 = vxpose.xlu0.b32.cont [9/16] %v654, 128
  %895 = vxpose.xlu0.b32.cont [10/16] %v655, 128
  %896 = vxpose.xlu0.b32.cont [11/16] %v656, 128
  %897 = vxpose.xlu0.b32.cont [12/16] %v657, 128
  %898 = vxpose.xlu0.b32.cont [13/16] %v658, 128
  %899 = vxpose.xlu0.b32.cont [14/16] %v659, 128
  %900 = vxpose.xlu0.b32.cont [15/16] %v660, 128
  %901 = vxpose.xlu0.b32.end [16/16] %v661, 128
  %v902 = vpop.trf.xlu0
  %v903 = vpop.trf.xlu0
  %v904 = vpop.trf.xlu0
  %v905 = vpop.trf.xlu0
  %v906 = vpop.trf.xlu0
  %v907 = vpop.trf.xlu0
  %v908 = vpop.trf.xlu0
  %v909 = vpop.trf.xlu0
  %v910 = vpop.trf.xlu0
  %v911 = vpop.trf.xlu0
  %v912 = vpop.trf.xlu0
  %v913 = vpop.trf.xlu0
  %v914 = vpop.trf.xlu0
  %v915 = vpop.trf.xlu0
  %v916 = vpop.trf.xlu0
  %v917 = vpop.trf.xlu0
  %918 = vst [vmem:[%s3] sm:$0xff] %v678
  %919 = vst [vmem:[%s3 + $0x8] sm:$0xff] %v710
  %920 = vst [vmem:[%s3 + $0x10] sm:$0xff] %v742
  %921 = vst [vmem:[%s3 + $0x18] sm:$0xff] %v774
  %922 = vst [vmem:[%s3 + $0x20] sm:$0xff] %v806
  %923 = vst [vmem:[%s3 + $0x28] sm:$0xff] %v838
  %924 = vst [vmem:[%s3 + $0x30] sm:$0xff] %v870
  %925 = vst [vmem:[%s3 + $0x38] sm:$0xff] %v902
  %926 = vst [vmem:[%s3 + $0x40] sm:$0xff] %v679
  %927 = vst [vmem:[%s3 + $0x48] sm:$0xff] %v711
  %928 = vst [vmem:[%s3 + $0x50] sm:$0xff] %v743
  %929 = vst [vmem:[%s3 + $0x58] sm:$0xff] %v775
  %930 = vst [vmem:[%s3 + $0x60] sm:$0xff] %v807
  %931 = vst [vmem:[%s3 + $0x68] sm:$0xff] %v839
  %932 = vst [vmem:[%s3 + $0x70] sm:$0xff] %v871
  %933 = vst [vmem:[%s3 + $0x78] sm:$0xff] %v903
  %934 = vst [vmem:[%s3 + $0x80] sm:$0xff] %v680
  %935 = vst [vmem:[%s3 + $0x88] sm:$0xff] %v712
  %936 = vst [vmem:[%s3 + $0x90] sm:$0xff] %v744
  %937 = vst [vmem:[%s3 + $0x98] sm:$0xff] %v776
  %938 = vst [vmem:[%s3 + $0xa0] sm:$0xff] %v808
  %939 = vst [vmem:[%s3 + $0xa8] sm:$0xff] %v840
  %940 = vst [vmem:[%s3 + $0xb0] sm:$0xff] %v872
  %941 = vst [vmem:[%s3 + $0xb8] sm:$0xff] %v904
  %942 = vst [vmem:[%s3 + $0xc0] sm:$0xff] %v681
  %943 = vst [vmem:[%s3 + $0xc8] sm:$0xff] %v713
  %944 = vst [vmem:[%s3 + $0xd0] sm:$0xff] %v745
  %945 = vst [vmem:[%s3 + $0xd8] sm:$0xff] %v777
  %946 = vst [vmem:[%s3 + $0xe0] sm:$0xff] %v809
  %947 = vst [vmem:[%s3 + $0xe8] sm:$0xff] %v841
  %948 = vst [vmem:[%s3 + $0xf0] sm:$0xff] %v873
  %949 = vst [vmem:[%s3 + $0xf8] sm:$0xff] %v905
  %950 = vst [vmem:[%s3 + $0x100] sm:$0xff] %v682
  %951 = vst [vmem:[%s3 + $0x108] sm:$0xff] %v714
  %952 = vst [vmem:[%s3 + $0x110] sm:$0xff] %v746
  %953 = vst [vmem:[%s3 + $0x118] sm:$0xff] %v778
  %954 = vst [vmem:[%s3 + $0x120] sm:$0xff] %v810
  %955 = vst [vmem:[%s3 + $0x128] sm:$0xff] %v842
  %956 = vst [vmem:[%s3 + $0x130] sm:$0xff] %v874
  %957 = vst [vmem:[%s3 + $0x138] sm:$0xff] %v906
  %958 = vst [vmem:[%s3 + $0x140] sm:$0xff] %v683
  %959 = vst [vmem:[%s3 + $0x148] sm:$0xff] %v715
  %960 = vst [vmem:[%s3 + $0x150] sm:$0xff] %v747
  %961 = vst [vmem:[%s3 + $0x158] sm:$0xff] %v779
  %962 = vst [vmem:[%s3 + $0x160] sm:$0xff] %v811
  %963 = vst [vmem:[%s3 + $0x168] sm:$0xff] %v843
  %964 = vst [vmem:[%s3 + $0x170] sm:$0xff] %v875
  %965 = vst [vmem:[%s3 + $0x178] sm:$0xff] %v907
  %966 = vst [vmem:[%s3 + $0x180] sm:$0xff] %v684
  %967 = vst [vmem:[%s3 + $0x188] sm:$0xff] %v716
  %968 = vst [vmem:[%s3 + $0x190] sm:$0xff] %v748
  %969 = vst [vmem:[%s3 + $0x198] sm:$0xff] %v780
  %970 = vst [vmem:[%s3 + $0x1a0] sm:$0xff] %v812
  %971 = vst [vmem:[%s3 + $0x1a8] sm:$0xff] %v844
  %972 = vst [vmem:[%s3 + $0x1b0] sm:$0xff] %v876
  %973 = vst [vmem:[%s3 + $0x1b8] sm:$0xff] %v908
  %974 = vst [vmem:[%s3 + $0x1c0] sm:$0xff] %v685
  %975 = vst [vmem:[%s3 + $0x1c8] sm:$0xff] %v717
  %976 = vst [vmem:[%s3 + $0x1d0] sm:$0xff] %v749
  %977 = vst [vmem:[%s3 + $0x1d8] sm:$0xff] %v781
  %978 = vst [vmem:[%s3 + $0x1e0] sm:$0xff] %v813
  %979 = vst [vmem:[%s3 + $0x1e8] sm:$0xff] %v845
  %980 = vst [vmem:[%s3 + $0x1f0] sm:$0xff] %v877
  %981 = vst [vmem:[%s3 + $0x1f8] sm:$0xff] %v909
  %982 = vst [vmem:[%s3 + $0x200] sm:$0xff] %v686
  %983 = vst [vmem:[%s3 + $0x208] sm:$0xff] %v718
  %984 = vst [vmem:[%s3 + $0x210] sm:$0xff] %v750
  %985 = vst [vmem:[%s3 + $0x218] sm:$0xff] %v782
  %986 = vst [vmem:[%s3 + $0x220] sm:$0xff] %v814
  %987 = vst [vmem:[%s3 + $0x228] sm:$0xff] %v846
  %988 = vst [vmem:[%s3 + $0x230] sm:$0xff] %v878
  %989 = vst [vmem:[%s3 + $0x238] sm:$0xff] %v910
  %990 = vst [vmem:[%s3 + $0x240] sm:$0xff] %v687
  %991 = vst [vmem:[%s3 + $0x248] sm:$0xff] %v719
  %992 = vst [vmem:[%s3 + $0x250] sm:$0xff] %v751
  %993 = vst [vmem:[%s3 + $0x258] sm:$0xff] %v783
  %994 = vst [vmem:[%s3 + $0x260] sm:$0xff] %v815
  %995 = vst [vmem:[%s3 + $0x268] sm:$0xff] %v847
  %996 = vst [vmem:[%s3 + $0x270] sm:$0xff] %v879
  %997 = vst [vmem:[%s3 + $0x278] sm:$0xff] %v911
  %998 = vst [vmem:[%s3 + $0x280] sm:$0xff] %v688
  %999 = vst [vmem:[%s3 + $0x288] sm:$0xff] %v720
  %1000 = vst [vmem:[%s3 + $0x290] sm:$0xff] %v752
  %1001 = vst [vmem:[%s3 + $0x298] sm:$0xff] %v784
  %1002 = vst [vmem:[%s3 + $0x2a0] sm:$0xff] %v816
  %1003 = vst [vmem:[%s3 + $0x2a8] sm:$0xff] %v848
  %1004 = vst [vmem:[%s3 + $0x2b0] sm:$0xff] %v880
  %1005 = vst [vmem:[%s3 + $0x2b8] sm:$0xff] %v912
  %1006 = vst [vmem:[%s3 + $0x2c0] sm:$0xff] %v689
  %1007 = vst [vmem:[%s3 + $0x2c8] sm:$0xff] %v721
  %1008 = vst [vmem:[%s3 + $0x2d0] sm:$0xff] %v753
  %1009 = vst [vmem:[%s3 + $0x2d8] sm:$0xff] %v785
  %1010 = vst [vmem:[%s3 + $0x2e0] sm:$0xff] %v817
  %1011 = vst [vmem:[%s3 + $0x2e8] sm:$0xff] %v849
  %1012 = vst [vmem:[%s3 + $0x2f0] sm:$0xff] %v881
  %1013 = vst [vmem:[%s3 + $0x2f8] sm:$0xff] %v913
  %1014 = vst [vmem:[%s3 + $0x300] sm:$0xff] %v690
  %1015 = vst [vmem:[%s3 + $0x308] sm:$0xff] %v722
  %1016 = vst [vmem:[%s3 + $0x310] sm:$0xff] %v754
  %1017 = vst [vmem:[%s3 + $0x318] sm:$0xff] %v786
  %1018 = vst [vmem:[%s3 + $0x320] sm:$0xff] %v818
  %1019 = vst [vmem:[%s3 + $0x328] sm:$0xff] %v850
  %1020 = vst [vmem:[%s3 + $0x330] sm:$0xff] %v882
  %1021 = vst [vmem:[%s3 + $0x338] sm:$0xff] %v914
  %1022 = vst [vmem:[%s3 + $0x340] sm:$0xff] %v691
  %1023 = vst [vmem:[%s3 + $0x348] sm:$0xff] %v723
  %1024 = vst [vmem:[%s3 + $0x350] sm:$0xff] %v755
  %1025 = vst [vmem:[%s3 + $0x358] sm:$0xff] %v787
  %1026 = vst [vmem:[%s3 + $0x360] sm:$0xff] %v819
  %1027 = vst [vmem:[%s3 + $0x368] sm:$0xff] %v851
  %1028 = vst [vmem:[%s3 + $0x370] sm:$0xff] %v883
  %1029 = vst [vmem:[%s3 + $0x378] sm:$0xff] %v915
  %1030 = vst [vmem:[%s3 + $0x380] sm:$0xff] %v692
  %1031 = vst [vmem:[%s3 + $0x388] sm:$0xff] %v724
  %1032 = vst [vmem:[%s3 + $0x390] sm:$0xff] %v756
  %1033 = vst [vmem:[%s3 + $0x398] sm:$0xff] %v788
  %1034 = vst [vmem:[%s3 + $0x3a0] sm:$0xff] %v820
  %1035 = vst [vmem:[%s3 + $0x3a8] sm:$0xff] %v852
  %1036 = vst [vmem:[%s3 + $0x3b0] sm:$0xff] %v884
  %1037 = vst [vmem:[%s3 + $0x3b8] sm:$0xff] %v916
  %1038 = vst [vmem:[%s3 + $0x3c0] sm:$0xff] %v693
  %1039 = vst [vmem:[%s3 + $0x3c8] sm:$0xff] %v725
  %1040 = vst [vmem:[%s3 + $0x3d0] sm:$0xff] %v757
  %1041 = vst [vmem:[%s3 + $0x3d8] sm:$0xff] %v789
  %1042 = vst [vmem:[%s3 + $0x3e0] sm:$0xff] %v821
  %1043 = vst [vmem:[%s3 + $0x3e8] sm:$0xff] %v853
  %1044 = vst [vmem:[%s3 + $0x3f0] sm:$0xff] %v885
  %1045 = vst [vmem:[%s3 + $0x3f8] sm:$0xff] %v917
  // Predicated region
  $region14: #{conv_bn_relu.3} parent=0 // pred_check
    _
  $region15: #{conv_bn_relu.3} parent=0 // pred_check_branch
    %1047 = sbr.rel (0) target = $region17
  $region16: #{conv_bn_relu.3} parent=0 // pred_region
    _
  $region17: #{conv_bn_relu.3} parent=0 // pred_fallthru
    _
  // Predicated region
  $region18: #{conv_bn_relu.3} parent=0 // pred_check
    _
  $region19: #{conv_bn_relu.3} parent=0 // pred_check_branch
    %1049 = sbr.rel (0) target = $region21
  $region20: #{conv_bn_relu.3} parent=0 // pred_region
    _
  $region21: #{conv_bn_relu.3} parent=0 // pred_fallthru
    _

</llo_original>
